<compile_context>
chip_gen: v5e
topology: v5e:2x2
jax: 0.10.0
libtpu: 0.0.40
codegen_flags: <defaults>
</compile_context>

<pallas_src>
import functools
import math

import jax
import jax.numpy as jnp
from jax.experimental import pallas as pl
from jax.experimental.pallas import tpu as pltpu

BN_EPS = 1e-5
C_MAX = 32          # max channel count in the network; all weights padded to it


# ---------------------------------------------------------------------------
# Pallas kernel: whole CNNModule forward for one batch element
# ---------------------------------------------------------------------------
def _cnn_kernel(block_meta, x_ref, w_ref, b_ref, o_ref):
    sel_cache = {}   # trace-time memo: identical selection matrices built once

    def shift_mat(l_in, l_out, stride, k):
        """(l_in, l_out) bf16 matrix with S[j, l] = (j == stride*l + k - 1).

        h @ S picks tap k of a kernel-3/pad-1/stride-`stride` conv; out-of-range
        indices match no row and hence give 0 == the conv's zero padding.
        """
        key = (l_in, l_out, stride, k)
        if key not in sel_cache:
            j = jax.lax.broadcasted_iota(jnp.int32, (l_in, l_out), 0)
            l = jax.lax.broadcasted_iota(jnp.int32, (l_in, l_out), 1)
            sel = jnp.where(j == stride * l + (k - 1), 1.0, 0.0)
            sel_cache[key] = sel.astype(jnp.bfloat16)
        return sel_cache[key]

    def conv(h, idx, c_in, c_out, stride, relu):
        """Conv1d(k=3,pad=1,stride) + folded BN shift [+ ReLU] on (c_in, L)."""
        l_in = h.shape[1]
        l_out = l_in // stride
        hb = h.astype(jnp.bfloat16)
        acc = None
        for k in range(3):
            if stride == 1 and k == 1:
                tap = hb                       # center tap at stride 1 = identity
            else:
                tap = jnp.dot(hb, shift_mat(l_in, l_out, stride, k),
                              preferred_element_type=jnp.float32
                              ).astype(jnp.bfloat16)
            w_k = w_ref[idx, k, 0:c_out, 0:c_in]           # (c_out, c_in) bf16
            part = jnp.dot(w_k, tap, preferred_element_type=jnp.float32)
            acc = part if acc is None else acc + part      # init from 1st matmul
        y = acc + b_ref[idx, 0:c_out, :]                   # conv bias + BN shift
        return jnp.maximum(y, 0.0) if relu else y

    h = x_ref[0].astype(jnp.float32)                       # (c_in0, L0)
    for c_in, c_out, stride, base, has_skip in block_meta:
        x_in = h
        h = conv(h, base + 0, c_in, c_out, stride, relu=True)
        h = conv(h, base + 1, c_out, c_out, 1, relu=True)
        h = conv(h, base + 2, c_out, c_out, 1, relu=True)
        if has_skip:                                       # bare Conv1d skip
            skip = conv(x_in, base + 3, c_in, c_out, stride, relu=False)
        else:                                              # identity skip
            skip = x_in
        h = h + skip                                       # y + x (post-ReLU add)
    o_ref[...] = h[None].astype(o_ref.dtype)


# ---------------------------------------------------------------------------
# Parameter folding / packing (done once, outside the kernel)
# ---------------------------------------------------------------------------
def _fold_convblock(p):
    # eval-mode BN folded into the conv: w' = s*w, shift = beta + s*(b - mean)
    s = p["gamma"] * jax.lax.rsqrt(p["var"] + BN_EPS)
    w = p["w"] * s[:, None, None]
    shift = p["beta"] + s * (p["b"] - p["mean"])
    return w, shift


def _pack_layer(w, shift):
    c_out, c_in, _ = w.shape
    wt = jnp.transpose(w, (2, 0, 1))                       # (3, c_out, c_in)
    wt = jnp.pad(wt, ((0, 0), (0, C_MAX - c_out), (0, C_MAX - c_in)))
    bt = jnp.pad(shift, (0, C_MAX - c_out))[:, None]
    return wt.astype(jnp.bfloat16), bt.astype(jnp.float32)


def pack_params(params):
    w_list, b_list, meta = [], [], []
    for p in params:
        stride = int(p["stride"])
        c_out, c_in, _ = p["cb1"]["w"].shape
        base = len(w_list)
        for name in ("cb1", "cb2", "cb3"):
            wt, bt = _pack_layer(*_fold_convblock(p[name]))
            w_list.append(wt)
            b_list.append(bt)
        has_skip = stride == 2
        if has_skip:
            wt, bt = _pack_layer(p["skip"]["w"], p["skip"]["b"])
            w_list.append(wt)
            b_list.append(bt)
        meta.append((int(c_in), int(c_out), stride, base, has_skip))
    return jnp.stack(w_list), jnp.stack(b_list), tuple(meta)


# ---------------------------------------------------------------------------
# Forward pass: one pallas_call for the whole network
# ---------------------------------------------------------------------------
@functools.partial(jax.jit, static_argnames=("block_meta",))
def cnn_module_forward(x, w_all, b_all, block_meta):
    n, c0, l0 = x.shape
    c_final = block_meta[-1][1]
    l_final = l0
    for _, _, stride, _, _ in block_meta:
        l_final //= stride

    kernel = functools.partial(_cnn_kernel, block_meta)
    return pl.pallas_call(
        kernel,
        out_shape=jax.ShapeDtypeStruct((n, c_final, l_final), jnp.float32),
        grid=(n,),
        in_specs=[
            pl.BlockSpec((1, c0, l0), lambda i: (i, 0, 0)),
            pl.BlockSpec(w_all.shape, lambda i: (0, 0, 0, 0)),   # weights resident
            pl.BlockSpec(b_all.shape, lambda i: (0, 0, 0)),      # shifts resident
        ],
        out_specs=pl.BlockSpec((1, c_final, l_final), lambda i: (i, 0, 0)),
        compiler_params=pltpu.CompilerParams(
            dimension_semantics=("arbitrary",)),   # N=2: megacore split not worth it
    )(x, w_all, b_all)


# ---------------------------------------------------------------------------
# Deterministic parameter init (matches PyTorch module shapes / defaults)
# ---------------------------------------------------------------------------
def _init_conv(key, c_in, c_out):
    kw, kb = jax.random.split(key)
    bound = 1.0 / math.sqrt(c_in * 3)          # PyTorch Conv1d default init bound
    w = jax.random.uniform(kw, (c_out, c_in, 3), jnp.float32, -bound, bound)
    b = jax.random.uniform(kb, (c_out,), jnp.float32, -bound, bound)
    return {"w": w, "b": b}


def _init_convblock(key, c_in, c_out):
    p = _init_conv(key, c_in, c_out)
    p.update({
        "gamma": jnp.ones((c_out,), jnp.float32),
        "beta": jnp.zeros((c_out,), jnp.float32),
        "mean": jnp.zeros((c_out,), jnp.float32),
        "var": jnp.ones((c_out,), jnp.float32),
    })
    return p


def _init_resblock(key, c_in, c_out, stride):
    keys = jax.random.split(key, 4)
    p = {
        "cb1": _init_convblock(keys[0], c_in, c_out),
        "cb2": _init_convblock(keys[1], c_out, c_out),
        "cb3": _init_convblock(keys[2], c_out, c_out),
        "stride": stride,
    }
    if stride == 2:
        p["skip"] = _init_conv(keys[3], c_in, c_out)
    return p


def init_cnn_module(key, channel_in=1, downsample_depth=5, main_depth=1):
    cfg = [(channel_in, 16, 2), (16, 32, 2)]
    cfg += [(32, 32, 2)] * max(0, downsample_depth - 2)   # extra downsample blocks
    cfg += [(32, 32, 1)] * max(0, main_depth - 1)          # extra main-depth blocks
    cfg += [(32, 32, 1)]                                   # self.main
    keys = jax.random.split(key, len(cfg))
    return [_init_resblock(k, ci, co, s) for k, (ci, co, s) in zip(keys, cfg)]


if __name__ == "__main__":
    key = jax.random.PRNGKey(0)
    k_param, k_x = jax.random.split(key)

    params = init_cnn_module(k_param, channel_in=1, downsample_depth=5, main_depth=1)
    x = jax.random.normal(k_x, (2, 1, 128), jnp.float32)   # (N=2, C_in=1, L=128)

    w_all, b_all, block_meta = pack_params(params)
    out = cnn_module_forward(x, w_all, b_all, block_meta=block_meta)
    out = jax.block_until_ready(out)

    # 5 stride-2 residual blocks: 128 -> 4 ; channels 1 -> 16 -> 32
    assert out.shape == (2, 32, 4), out.shape
    assert jnp.all(jnp.isfinite(out))
    print("KERNEL_OK")
</pallas_src>

<mosaic_0001>
module attributes {stable_mosaic.version = 11 : i64} {
  func.func @_cnn_kernel(%arg0: i32, %arg1: memref<1x1x128xf32, #tpu.memory_space<vmem>>, %arg2: memref<23x3x32x32xbf16, #tpu.memory_space<vmem>>, %arg3: memref<23x32x1xf32, #tpu.memory_space<vmem>>, %arg4: memref<1x32x4xf32, #tpu.memory_space<vmem>>) attributes {dimension_semantics = [#tpu.dimension_semantics<arbitrary>], iteration_bounds = array<i64: 2>, scalar_prefetch = 0 : i64, scratch_operands = 0 : i64, tpu.core_type = #tpu.core_type<tc>, window_params = [{transform_indices = @transform_0, window_bounds = array<i64: 1, 1, 128>}, {pipeline_mode = #tpu.pipeline_mode<synchronous>, transform_indices = @transform_1, window_bounds = array<i64: 23, 3, 32, 32>}, {pipeline_mode = #tpu.pipeline_mode<synchronous>, transform_indices = @transform_2, window_bounds = array<i64: 23, 32, 1>}, {transform_indices = @transform_3, window_bounds = array<i64: 1, 32, 4>}]} {
    %c0 = arith.constant 0 : index
    %c0_0 = arith.constant 0 : index
    %c0_1 = arith.constant 0 : index
    %0 = vector.load %arg1[%c0, %c0_0, %c0_1] : memref<1x1x128xf32, #tpu.memory_space<vmem>>, vector<1x1x128xf32>
    %1 = vector.shape_cast %0 : vector<1x1x128xf32> to vector<1x128xf32>
    %2 = arith.truncf %1 : vector<1x128xf32> to vector<1x128xbf16>
    %3 = tpu.iota {dimensions = array<i32: 0>} : vector<128x64xi32>
    %4 = tpu.iota {dimensions = array<i32: 1>} : vector<128x64xi32>
    %c2_i32 = arith.constant 2 : i32
    %5 = vector.broadcast %c2_i32 : i32 to vector<128x64xi32>
    %6 = arith.muli %5, %4 : vector<128x64xi32>
    %c-1_i32 = arith.constant -1 : i32
    %7 = vector.broadcast %c-1_i32 : i32 to vector<128x64xi32>
    %8 = arith.addi %6, %7 : vector<128x64xi32>
    %9 = arith.cmpi eq, %3, %8 : vector<128x64xi32>
    %cst = arith.constant 1.000000e+00 : f32
    %cst_2 = arith.constant 0.000000e+00 : f32
    %10 = vector.broadcast %cst : f32 to vector<128x64xf32>
    %11 = vector.broadcast %cst_2 : f32 to vector<128x64xf32>
    %12 = arith.select %9, %10, %11 : vector<128x64xi1>, vector<128x64xf32>
    %13 = arith.truncf %12 : vector<128x64xf32> to vector<128x64xbf16>
    %cst_3 = arith.constant dense<0.000000e+00> : vector<1x64xf32>
    %14 = tpu.matmul %2, %13, %cst_3 {dimension_numbers = #tpu.dot_dimension_numbers<[1], [0], [0], [1], [0, 0, 1, 1], [], []>} : vector<1x128xbf16>, vector<128x64xbf16>, vector<1x64xf32> -> vector<1x64xf32>
    %15 = arith.truncf %14 : vector<1x64xf32> to vector<1x64xbf16>
    %c0_4 = arith.constant 0 : index
    %c0_5 = arith.constant 0 : index
    %c0_6 = arith.constant 0 : index
    %c0_7 = arith.constant 0 : index
    %16 = vector.load %arg2[%c0_4, %c0_5, %c0_6, %c0_7] : memref<23x3x32x32xbf16, #tpu.memory_space<vmem>>, vector<1x1x16x1xbf16>
    %17 = vector.shape_cast %16 : vector<1x1x16x1xbf16> to vector<16x1xbf16>
    %cst_8 = arith.constant dense<0.000000e+00> : vector<16x64xf32>
    %18 = tpu.matmul %17, %15, %cst_8 {dimension_numbers = #tpu.dot_dimension_numbers<[1], [0], [0], [1], [0, 0, 1, 1], [], []>} : vector<16x1xbf16>, vector<1x64xbf16>, vector<16x64xf32> -> vector<16x64xf32>
    %19 = tpu.iota {dimensions = array<i32: 0>} : vector<128x64xi32>
    %20 = tpu.iota {dimensions = array<i32: 1>} : vector<128x64xi32>
    %c2_i32_9 = arith.constant 2 : i32
    %21 = vector.broadcast %c2_i32_9 : i32 to vector<128x64xi32>
    %22 = arith.muli %21, %20 : vector<128x64xi32>
    %c0_i32 = arith.constant 0 : i32
    %23 = vector.broadcast %c0_i32 : i32 to vector<128x64xi32>
    %24 = arith.addi %22, %23 : vector<128x64xi32>
    %25 = arith.cmpi eq, %19, %24 : vector<128x64xi32>
    %cst_10 = arith.constant 1.000000e+00 : f32
    %cst_11 = arith.constant 0.000000e+00 : f32
    %26 = vector.broadcast %cst_10 : f32 to vector<128x64xf32>
    %27 = vector.broadcast %cst_11 : f32 to vector<128x64xf32>
    %28 = arith.select %25, %26, %27 : vector<128x64xi1>, vector<128x64xf32>
    %29 = arith.truncf %28 : vector<128x64xf32> to vector<128x64xbf16>
    %cst_12 = arith.constant dense<0.000000e+00> : vector<1x64xf32>
    %30 = tpu.matmul %2, %29, %cst_12 {dimension_numbers = #tpu.dot_dimension_numbers<[1], [0], [0], [1], [0, 0, 1, 1], [], []>} : vector<1x128xbf16>, vector<128x64xbf16>, vector<1x64xf32> -> vector<1x64xf32>
    %31 = arith.truncf %30 : vector<1x64xf32> to vector<1x64xbf16>
    %c0_13 = arith.constant 0 : index
    %c1 = arith.constant 1 : index
    %c0_14 = arith.constant 0 : index
    %c0_15 = arith.constant 0 : index
    %32 = vector.load %arg2[%c0_13, %c1, %c0_14, %c0_15] : memref<23x3x32x32xbf16, #tpu.memory_space<vmem>>, vector<1x1x16x1xbf16>
    %33 = vector.shape_cast %32 : vector<1x1x16x1xbf16> to vector<16x1xbf16>
    %cst_16 = arith.constant dense<0.000000e+00> : vector<16x64xf32>
    %34 = tpu.matmul %33, %31, %cst_16 {dimension_numbers = #tpu.dot_dimension_numbers<[1], [0], [0], [1], [0, 0, 1, 1], [], []>} : vector<16x1xbf16>, vector<1x64xbf16>, vector<16x64xf32> -> vector<16x64xf32>
    %35 = arith.addf %18, %34 : vector<16x64xf32>
    %36 = tpu.iota {dimensions = array<i32: 0>} : vector<128x64xi32>
    %37 = tpu.iota {dimensions = array<i32: 1>} : vector<128x64xi32>
    %c2_i32_17 = arith.constant 2 : i32
    %38 = vector.broadcast %c2_i32_17 : i32 to vector<128x64xi32>
    %39 = arith.muli %38, %37 : vector<128x64xi32>
    %c1_i32 = arith.constant 1 : i32
    %40 = vector.broadcast %c1_i32 : i32 to vector<128x64xi32>
    %41 = arith.addi %39, %40 : vector<128x64xi32>
    %42 = arith.cmpi eq, %36, %41 : vector<128x64xi32>
    %cst_18 = arith.constant 1.000000e+00 : f32
    %cst_19 = arith.constant 0.000000e+00 : f32
    %43 = vector.broadcast %cst_18 : f32 to vector<128x64xf32>
    %44 = vector.broadcast %cst_19 : f32 to vector<128x64xf32>
    %45 = arith.select %42, %43, %44 : vector<128x64xi1>, vector<128x64xf32>
    %46 = arith.truncf %45 : vector<128x64xf32> to vector<128x64xbf16>
    %cst_20 = arith.constant dense<0.000000e+00> : vector<1x64xf32>
    %47 = tpu.matmul %2, %46, %cst_20 {dimension_numbers = #tpu.dot_dimension_numbers<[1], [0], [0], [1], [0, 0, 1, 1], [], []>} : vector<1x128xbf16>, vector<128x64xbf16>, vector<1x64xf32> -> vector<1x64xf32>
    %48 = arith.truncf %47 : vector<1x64xf32> to vector<1x64xbf16>
    %c0_21 = arith.constant 0 : index
    %c2 = arith.constant 2 : index
    %c0_22 = arith.constant 0 : index
    %c0_23 = arith.constant 0 : index
    %49 = vector.load %arg2[%c0_21, %c2, %c0_22, %c0_23] : memref<23x3x32x32xbf16, #tpu.memory_space<vmem>>, vector<1x1x16x1xbf16>
    %50 = vector.shape_cast %49 : vector<1x1x16x1xbf16> to vector<16x1xbf16>
    %cst_24 = arith.constant dense<0.000000e+00> : vector<16x64xf32>
    %51 = tpu.matmul %50, %48, %cst_24 {dimension_numbers = #tpu.dot_dimension_numbers<[1], [0], [0], [1], [0, 0, 1, 1], [], []>} : vector<16x1xbf16>, vector<1x64xbf16>, vector<16x64xf32> -> vector<16x64xf32>
    %52 = arith.addf %35, %51 : vector<16x64xf32>
    %c0_25 = arith.constant 0 : index
    %c0_26 = arith.constant 0 : index
    %c0_27 = arith.constant 0 : index
    %53 = vector.load %arg3[%c0_25, %c0_26, %c0_27] : memref<23x32x1xf32, #tpu.memory_space<vmem>>, vector<1x16x1xf32>
    %54 = vector.shape_cast %53 : vector<1x16x1xf32> to vector<16x1xf32>
    %55 = vector.broadcast %54 : vector<16x1xf32> to vector<16x64xf32>
    %56 = arith.addf %52, %55 : vector<16x64xf32>
    %cst_28 = arith.constant 0.000000e+00 : f32
    %57 = vector.broadcast %cst_28 : f32 to vector<16x64xf32>
    %58 = arith.maximumf %56, %57 : vector<16x64xf32>
    %59 = arith.truncf %58 : vector<16x64xf32> to vector<16x64xbf16>
    %60 = tpu.iota {dimensions = array<i32: 0>} : vector<64x64xi32>
    %61 = tpu.iota {dimensions = array<i32: 1>} : vector<64x64xi32>
    %c1_i32_29 = arith.constant 1 : i32
    %62 = vector.broadcast %c1_i32_29 : i32 to vector<64x64xi32>
    %63 = arith.muli %62, %61 : vector<64x64xi32>
    %c-1_i32_30 = arith.constant -1 : i32
    %64 = vector.broadcast %c-1_i32_30 : i32 to vector<64x64xi32>
    %65 = arith.addi %63, %64 : vector<64x64xi32>
    %66 = arith.cmpi eq, %60, %65 : vector<64x64xi32>
    %cst_31 = arith.constant 1.000000e+00 : f32
    %cst_32 = arith.constant 0.000000e+00 : f32
    %67 = vector.broadcast %cst_31 : f32 to vector<64x64xf32>
    %68 = vector.broadcast %cst_32 : f32 to vector<64x64xf32>
    %69 = arith.select %66, %67, %68 : vector<64x64xi1>, vector<64x64xf32>
    %70 = arith.truncf %69 : vector<64x64xf32> to vector<64x64xbf16>
    %cst_33 = arith.constant dense<0.000000e+00> : vector<16x64xf32>
    %71 = tpu.matmul %59, %70, %cst_33 {dimension_numbers = #tpu.dot_dimension_numbers<[1], [0], [0], [1], [0, 0, 1, 1], [], []>} : vector<16x64xbf16>, vector<64x64xbf16>, vector<16x64xf32> -> vector<16x64xf32>
    %72 = arith.truncf %71 : vector<16x64xf32> to vector<16x64xbf16>
    %c1_34 = arith.constant 1 : index
    %c0_35 = arith.constant 0 : index
    %c0_36 = arith.constant 0 : index
    %c0_37 = arith.constant 0 : index
    %73 = vector.load %arg2[%c1_34, %c0_35, %c0_36, %c0_37] : memref<23x3x32x32xbf16, #tpu.memory_space<vmem>>, vector<1x1x16x16xbf16>
    %74 = vector.shape_cast %73 : vector<1x1x16x16xbf16> to vector<16x16xbf16>
    %cst_38 = arith.constant dense<0.000000e+00> : vector<16x64xf32>
    %75 = tpu.matmul %74, %72, %cst_38 {dimension_numbers = #tpu.dot_dimension_numbers<[1], [0], [0], [1], [0, 0, 1, 1], [], []>} : vector<16x16xbf16>, vector<16x64xbf16>, vector<16x64xf32> -> vector<16x64xf32>
    %c1_39 = arith.constant 1 : index
    %c1_40 = arith.constant 1 : index
    %c0_41 = arith.constant 0 : index
    %c0_42 = arith.constant 0 : index
    %76 = vector.load %arg2[%c1_39, %c1_40, %c0_41, %c0_42] : memref<23x3x32x32xbf16, #tpu.memory_space<vmem>>, vector<1x1x16x16xbf16>
    %77 = vector.shape_cast %76 : vector<1x1x16x16xbf16> to vector<16x16xbf16>
    %cst_43 = arith.constant dense<0.000000e+00> : vector<16x64xf32>
    %78 = tpu.matmul %77, %59, %cst_43 {dimension_numbers = #tpu.dot_dimension_numbers<[1], [0], [0], [1], [0, 0, 1, 1], [], []>} : vector<16x16xbf16>, vector<16x64xbf16>, vector<16x64xf32> -> vector<16x64xf32>
    %79 = arith.addf %75, %78 : vector<16x64xf32>
    %80 = tpu.iota {dimensions = array<i32: 0>} : vector<64x64xi32>
    %81 = tpu.iota {dimensions = array<i32: 1>} : vector<64x64xi32>
    %c1_i32_44 = arith.constant 1 : i32
    %82 = vector.broadcast %c1_i32_44 : i32 to vector<64x64xi32>
    %83 = arith.muli %82, %81 : vector<64x64xi32>
    %c1_i32_45 = arith.constant 1 : i32
    %84 = vector.broadcast %c1_i32_45 : i32 to vector<64x64xi32>
    %85 = arith.addi %83, %84 : vector<64x64xi32>
    %86 = arith.cmpi eq, %80, %85 : vector<64x64xi32>
    %cst_46 = arith.constant 1.000000e+00 : f32
    %cst_47 = arith.constant 0.000000e+00 : f32
    %87 = vector.broadcast %cst_46 : f32 to vector<64x64xf32>
    %88 = vector.broadcast %cst_47 : f32 to vector<64x64xf32>
    %89 = arith.select %86, %87, %88 : vector<64x64xi1>, vector<64x64xf32>
    %90 = arith.truncf %89 : vector<64x64xf32> to vector<64x64xbf16>
    %cst_48 = arith.constant dense<0.000000e+00> : vector<16x64xf32>
    %91 = tpu.matmul %59, %90, %cst_48 {dimension_numbers = #tpu.dot_dimension_numbers<[1], [0], [0], [1], [0, 0, 1, 1], [], []>} : vector<16x64xbf16>, vector<64x64xbf16>, vector<16x64xf32> -> vector<16x64xf32>
    %92 = arith.truncf %91 : vector<16x64xf32> to vector<16x64xbf16>
    %c1_49 = arith.constant 1 : index
    %c2_50 = arith.constant 2 : index
    %c0_51 = arith.constant 0 : index
    %c0_52 = arith.constant 0 : index
    %93 = vector.load %arg2[%c1_49, %c2_50, %c0_51, %c0_52] : memref<23x3x32x32xbf16, #tpu.memory_space<vmem>>, vector<1x1x16x16xbf16>
    %94 = vector.shape_cast %93 : vector<1x1x16x16xbf16> to vector<16x16xbf16>
    %cst_53 = arith.constant dense<0.000000e+00> : vector<16x64xf32>
    %95 = tpu.matmul %94, %92, %cst_53 {dimension_numbers = #tpu.dot_dimension_numbers<[1], [0], [0], [1], [0, 0, 1, 1], [], []>} : vector<16x16xbf16>, vector<16x64xbf16>, vector<16x64xf32> -> vector<16x64xf32>
    %96 = arith.addf %79, %95 : vector<16x64xf32>
    %c1_54 = arith.constant 1 : index
    %c0_55 = arith.constant 0 : index
    %c0_56 = arith.constant 0 : index
    %97 = vector.load %arg3[%c1_54, %c0_55, %c0_56] : memref<23x32x1xf32, #tpu.memory_space<vmem>>, vector<1x16x1xf32>
    %98 = vector.shape_cast %97 : vector<1x16x1xf32> to vector<16x1xf32>
    %99 = vector.broadcast %98 : vector<16x1xf32> to vector<16x64xf32>
    %100 = arith.addf %96, %99 : vector<16x64xf32>
    %cst_57 = arith.constant 0.000000e+00 : f32
    %101 = vector.broadcast %cst_57 : f32 to vector<16x64xf32>
    %102 = arith.maximumf %100, %101 : vector<16x64xf32>
    %103 = arith.truncf %102 : vector<16x64xf32> to vector<16x64xbf16>
    %cst_58 = arith.constant dense<0.000000e+00> : vector<16x64xf32>
    %104 = tpu.matmul %103, %70, %cst_58 {dimension_numbers = #tpu.dot_dimension_numbers<[1], [0], [0], [1], [0, 0, 1, 1], [], []>} : vector<16x64xbf16>, vector<64x64xbf16>, vector<16x64xf32> -> vector<16x64xf32>
    %105 = arith.truncf %104 : vector<16x64xf32> to vector<16x64xbf16>
    %c2_59 = arith.constant 2 : index
    %c0_60 = arith.constant 0 : index
    %c0_61 = arith.constant 0 : index
    %c0_62 = arith.constant 0 : index
    %106 = vector.load %arg2[%c2_59, %c0_60, %c0_61, %c0_62] : memref<23x3x32x32xbf16, #tpu.memory_space<vmem>>, vector<1x1x16x16xbf16>
    %107 = vector.shape_cast %106 : vector<1x1x16x16xbf16> to vector<16x16xbf16>
    %cst_63 = arith.constant dense<0.000000e+00> : vector<16x64xf32>
    %108 = tpu.matmul %107, %105, %cst_63 {dimension_numbers = #tpu.dot_dimension_numbers<[1], [0], [0], [1], [0, 0, 1, 1], [], []>} : vector<16x16xbf16>, vector<16x64xbf16>, vector<16x64xf32> -> vector<16x64xf32>
    %c2_64 = arith.constant 2 : index
    %c1_65 = arith.constant 1 : index
    %c0_66 = arith.constant 0 : index
    %c0_67 = arith.constant 0 : index
    %109 = vector.load %arg2[%c2_64, %c1_65, %c0_66, %c0_67] : memref<23x3x32x32xbf16, #tpu.memory_space<vmem>>, vector<1x1x16x16xbf16>
    %110 = vector.shape_cast %109 : vector<1x1x16x16xbf16> to vector<16x16xbf16>
    %cst_68 = arith.constant dense<0.000000e+00> : vector<16x64xf32>
    %111 = tpu.matmul %110, %103, %cst_68 {dimension_numbers = #tpu.dot_dimension_numbers<[1], [0], [0], [1], [0, 0, 1, 1], [], []>} : vector<16x16xbf16>, vector<16x64xbf16>, vector<16x64xf32> -> vector<16x64xf32>
    %112 = arith.addf %108, %111 : vector<16x64xf32>
    %cst_69 = arith.constant dense<0.000000e+00> : vector<16x64xf32>
    %113 = tpu.matmul %103, %90, %cst_69 {dimension_numbers = #tpu.dot_dimension_numbers<[1], [0], [0], [1], [0, 0, 1, 1], [], []>} : vector<16x64xbf16>, vector<64x64xbf16>, vector<16x64xf32> -> vector<16x64xf32>
    %114 = arith.truncf %113 : vector<16x64xf32> to vector<16x64xbf16>
    %c2_70 = arith.constant 2 : index
    %c2_71 = arith.constant 2 : index
    %c0_72 = arith.constant 0 : index
    %c0_73 = arith.constant 0 : index
    %115 = vector.load %arg2[%c2_70, %c2_71, %c0_72, %c0_73] : memref<23x3x32x32xbf16, #tpu.memory_space<vmem>>, vector<1x1x16x16xbf16>
    %116 = vector.shape_cast %115 : vector<1x1x16x16xbf16> to vector<16x16xbf16>
    %cst_74 = arith.constant dense<0.000000e+00> : vector<16x64xf32>
    %117 = tpu.matmul %116, %114, %cst_74 {dimension_numbers = #tpu.dot_dimension_numbers<[1], [0], [0], [1], [0, 0, 1, 1], [], []>} : vector<16x16xbf16>, vector<16x64xbf16>, vector<16x64xf32> -> vector<16x64xf32>
    %118 = arith.addf %112, %117 : vector<16x64xf32>
    %c2_75 = arith.constant 2 : index
    %c0_76 = arith.constant 0 : index
    %c0_77 = arith.constant 0 : index
    %119 = vector.load %arg3[%c2_75, %c0_76, %c0_77] : memref<23x32x1xf32, #tpu.memory_space<vmem>>, vector<1x16x1xf32>
    %120 = vector.shape_cast %119 : vector<1x16x1xf32> to vector<16x1xf32>
    %121 = vector.broadcast %120 : vector<16x1xf32> to vector<16x64xf32>
    %122 = arith.addf %118, %121 : vector<16x64xf32>
    %cst_78 = arith.constant 0.000000e+00 : f32
    %123 = vector.broadcast %cst_78 : f32 to vector<16x64xf32>
    %124 = arith.maximumf %122, %123 : vector<16x64xf32>
    %125 = arith.truncf %1 : vector<1x128xf32> to vector<1x128xbf16>
    %cst_79 = arith.constant dense<0.000000e+00> : vector<1x64xf32>
    %126 = tpu.matmul %125, %13, %cst_79 {dimension_numbers = #tpu.dot_dimension_numbers<[1], [0], [0], [1], [0, 0, 1, 1], [], []>} : vector<1x128xbf16>, vector<128x64xbf16>, vector<1x64xf32> -> vector<1x64xf32>
    %127 = arith.truncf %126 : vector<1x64xf32> to vector<1x64xbf16>
    %c3 = arith.constant 3 : index
    %c0_80 = arith.constant 0 : index
    %c0_81 = arith.constant 0 : index
    %c0_82 = arith.constant 0 : index
    %128 = vector.load %arg2[%c3, %c0_80, %c0_81, %c0_82] : memref<23x3x32x32xbf16, #tpu.memory_space<vmem>>, vector<1x1x16x1xbf16>
    %129 = vector.shape_cast %128 : vector<1x1x16x1xbf16> to vector<16x1xbf16>
    %cst_83 = arith.constant dense<0.000000e+00> : vector<16x64xf32>
    %130 = tpu.matmul %129, %127, %cst_83 {dimension_numbers = #tpu.dot_dimension_numbers<[1], [0], [0], [1], [0, 0, 1, 1], [], []>} : vector<16x1xbf16>, vector<1x64xbf16>, vector<16x64xf32> -> vector<16x64xf32>
    %cst_84 = arith.constant dense<0.000000e+00> : vector<1x64xf32>
    %131 = tpu.matmul %125, %29, %cst_84 {dimension_numbers = #tpu.dot_dimension_numbers<[1], [0], [0], [1], [0, 0, 1, 1], [], []>} : vector<1x128xbf16>, vector<128x64xbf16>, vector<1x64xf32> -> vector<1x64xf32>
    %132 = arith.truncf %131 : vector<1x64xf32> to vector<1x64xbf16>
    %c3_85 = arith.constant 3 : index
    %c1_86 = arith.constant 1 : index
    %c0_87 = arith.constant 0 : index
    %c0_88 = arith.constant 0 : index
    %133 = vector.load %arg2[%c3_85, %c1_86, %c0_87, %c0_88] : memref<23x3x32x32xbf16, #tpu.memory_space<vmem>>, vector<1x1x16x1xbf16>
    %134 = vector.shape_cast %133 : vector<1x1x16x1xbf16> to vector<16x1xbf16>
    %cst_89 = arith.constant dense<0.000000e+00> : vector<16x64xf32>
    %135 = tpu.matmul %134, %132, %cst_89 {dimension_numbers = #tpu.dot_dimension_numbers<[1], [0], [0], [1], [0, 0, 1, 1], [], []>} : vector<16x1xbf16>, vector<1x64xbf16>, vector<16x64xf32> -> vector<16x64xf32>
    %136 = arith.addf %130, %135 : vector<16x64xf32>
    %cst_90 = arith.constant dense<0.000000e+00> : vector<1x64xf32>
    %137 = tpu.matmul %125, %46, %cst_90 {dimension_numbers = #tpu.dot_dimension_numbers<[1], [0], [0], [1], [0, 0, 1, 1], [], []>} : vector<1x128xbf16>, vector<128x64xbf16>, vector<1x64xf32> -> vector<1x64xf32>
    %138 = arith.truncf %137 : vector<1x64xf32> to vector<1x64xbf16>
    %c3_91 = arith.constant 3 : index
    %c2_92 = arith.constant 2 : index
    %c0_93 = arith.constant 0 : index
    %c0_94 = arith.constant 0 : index
    %139 = vector.load %arg2[%c3_91, %c2_92, %c0_93, %c0_94] : memref<23x3x32x32xbf16, #tpu.memory_space<vmem>>, vector<1x1x16x1xbf16>
    %140 = vector.shape_cast %139 : vector<1x1x16x1xbf16> to vector<16x1xbf16>
    %cst_95 = arith.constant dense<0.000000e+00> : vector<16x64xf32>
    %141 = tpu.matmul %140, %138, %cst_95 {dimension_numbers = #tpu.dot_dimension_numbers<[1], [0], [0], [1], [0, 0, 1, 1], [], []>} : vector<16x1xbf16>, vector<1x64xbf16>, vector<16x64xf32> -> vector<16x64xf32>
    %142 = arith.addf %136, %141 : vector<16x64xf32>
    %c3_96 = arith.constant 3 : index
    %c0_97 = arith.constant 0 : index
    %c0_98 = arith.constant 0 : index
    %143 = vector.load %arg3[%c3_96, %c0_97, %c0_98] : memref<23x32x1xf32, #tpu.memory_space<vmem>>, vector<1x16x1xf32>
    %144 = vector.shape_cast %143 : vector<1x16x1xf32> to vector<16x1xf32>
    %145 = vector.broadcast %144 : vector<16x1xf32> to vector<16x64xf32>
    %146 = arith.addf %142, %145 : vector<16x64xf32>
    %147 = arith.addf %124, %146 : vector<16x64xf32>
    %148 = arith.truncf %147 : vector<16x64xf32> to vector<16x64xbf16>
    %149 = tpu.iota {dimensions = array<i32: 0>} : vector<64x32xi32>
    %150 = tpu.iota {dimensions = array<i32: 1>} : vector<64x32xi32>
    %c2_i32_99 = arith.constant 2 : i32
    %151 = vector.broadcast %c2_i32_99 : i32 to vector<64x32xi32>
    %152 = arith.muli %151, %150 : vector<64x32xi32>
    %c-1_i32_100 = arith.constant -1 : i32
    %153 = vector.broadcast %c-1_i32_100 : i32 to vector<64x32xi32>
    %154 = arith.addi %152, %153 : vector<64x32xi32>
    %155 = arith.cmpi eq, %149, %154 : vector<64x32xi32>
    %cst_101 = arith.constant 1.000000e+00 : f32
    %cst_102 = arith.constant 0.000000e+00 : f32
    %156 = vector.broadcast %cst_101 : f32 to vector<64x32xf32>
    %157 = vector.broadcast %cst_102 : f32 to vector<64x32xf32>
    %158 = arith.select %155, %156, %157 : vector<64x32xi1>, vector<64x32xf32>
    %159 = arith.truncf %158 : vector<64x32xf32> to vector<64x32xbf16>
    %cst_103 = arith.constant dense<0.000000e+00> : vector<16x32xf32>
    %160 = tpu.matmul %148, %159, %cst_103 {dimension_numbers = #tpu.dot_dimension_numbers<[1], [0], [0], [1], [0, 0, 1, 1], [], []>} : vector<16x64xbf16>, vector<64x32xbf16>, vector<16x32xf32> -> vector<16x32xf32>
    %161 = arith.truncf %160 : vector<16x32xf32> to vector<16x32xbf16>
    %c4 = arith.constant 4 : index
    %c0_104 = arith.constant 0 : index
    %c0_105 = arith.constant 0 : index
    %c0_106 = arith.constant 0 : index
    %162 = vector.load %arg2[%c4, %c0_104, %c0_105, %c0_106] : memref<23x3x32x32xbf16, #tpu.memory_space<vmem>>, vector<1x1x32x16xbf16>
    %163 = vector.shape_cast %162 : vector<1x1x32x16xbf16> to vector<32x16xbf16>
    %cst_107 = arith.constant dense<0.000000e+00> : vector<32x32xf32>
    %164 = tpu.matmul %163, %161, %cst_107 {dimension_numbers = #tpu.dot_dimension_numbers<[1], [0], [0], [1], [0, 0, 1, 1], [], []>} : vector<32x16xbf16>, vector<16x32xbf16>, vector<32x32xf32> -> vector<32x32xf32>
    %165 = tpu.iota {dimensions = array<i32: 0>} : vector<64x32xi32>
    %166 = tpu.iota {dimensions = array<i32: 1>} : vector<64x32xi32>
    %c2_i32_108 = arith.constant 2 : i32
    %167 = vector.broadcast %c2_i32_108 : i32 to vector<64x32xi32>
    %168 = arith.muli %167, %166 : vector<64x32xi32>
    %c0_i32_109 = arith.constant 0 : i32
    %169 = vector.broadcast %c0_i32_109 : i32 to vector<64x32xi32>
    %170 = arith.addi %168, %169 : vector<64x32xi32>
    %171 = arith.cmpi eq, %165, %170 : vector<64x32xi32>
    %cst_110 = arith.constant 1.000000e+00 : f32
    %cst_111 = arith.constant 0.000000e+00 : f32
    %172 = vector.broadcast %cst_110 : f32 to vector<64x32xf32>
    %173 = vector.broadcast %cst_111 : f32 to vector<64x32xf32>
    %174 = arith.select %171, %172, %173 : vector<64x32xi1>, vector<64x32xf32>
    %175 = arith.truncf %174 : vector<64x32xf32> to vector<64x32xbf16>
    %cst_112 = arith.constant dense<0.000000e+00> : vector<16x32xf32>
    %176 = tpu.matmul %148, %175, %cst_112 {dimension_numbers = #tpu.dot_dimension_numbers<[1], [0], [0], [1], [0, 0, 1, 1], [], []>} : vector<16x64xbf16>, vector<64x32xbf16>, vector<16x32xf32> -> vector<16x32xf32>
    %177 = arith.truncf %176 : vector<16x32xf32> to vector<16x32xbf16>
    %c4_113 = arith.constant 4 : index
    %c1_114 = arith.constant 1 : index
    %c0_115 = arith.constant 0 : index
    %c0_116 = arith.constant 0 : index
    %178 = vector.load %arg2[%c4_113, %c1_114, %c0_115, %c0_116] : memref<23x3x32x32xbf16, #tpu.memory_space<vmem>>, vector<1x1x32x16xbf16>
    %179 = vector.shape_cast %178 : vector<1x1x32x16xbf16> to vector<32x16xbf16>
    %cst_117 = arith.constant dense<0.000000e+00> : vector<32x32xf32>
    %180 = tpu.matmul %179, %177, %cst_117 {dimension_numbers = #tpu.dot_dimension_numbers<[1], [0], [0], [1], [0, 0, 1, 1], [], []>} : vector<32x16xbf16>, vector<16x32xbf16>, vector<32x32xf32> -> vector<32x32xf32>
    %181 = arith.addf %164, %180 : vector<32x32xf32>
    %182 = tpu.iota {dimensions = array<i32: 0>} : vector<64x32xi32>
    %183 = tpu.iota {dimensions = array<i32: 1>} : vector<64x32xi32>
    %c2_i32_118 = arith.constant 2 : i32
    %184 = vector.broadcast %c2_i32_118 : i32 to vector<64x32xi32>
    %185 = arith.muli %184, %183 : vector<64x32xi32>
    %c1_i32_119 = arith.constant 1 : i32
    %186 = vector.broadcast %c1_i32_119 : i32 to vector<64x32xi32>
    %187 = arith.addi %185, %186 : vector<64x32xi32>
    %188 = arith.cmpi eq, %182, %187 : vector<64x32xi32>
    %cst_120 = arith.constant 1.000000e+00 : f32
    %cst_121 = arith.constant 0.000000e+00 : f32
    %189 = vector.broadcast %cst_120 : f32 to vector<64x32xf32>
    %190 = vector.broadcast %cst_121 : f32 to vector<64x32xf32>
    %191 = arith.select %188, %189, %190 : vector<64x32xi1>, vector<64x32xf32>
    %192 = arith.truncf %191 : vector<64x32xf32> to vector<64x32xbf16>
    %cst_122 = arith.constant dense<0.000000e+00> : vector<16x32xf32>
    %193 = tpu.matmul %148, %192, %cst_122 {dimension_numbers = #tpu.dot_dimension_numbers<[1], [0], [0], [1], [0, 0, 1, 1], [], []>} : vector<16x64xbf16>, vector<64x32xbf16>, vector<16x32xf32> -> vector<16x32xf32>
    %194 = arith.truncf %193 : vector<16x32xf32> to vector<16x32xbf16>
    %c4_123 = arith.constant 4 : index
    %c2_124 = arith.constant 2 : index
    %c0_125 = arith.constant 0 : index
    %c0_126 = arith.constant 0 : index
    %195 = vector.load %arg2[%c4_123, %c2_124, %c0_125, %c0_126] : memref<23x3x32x32xbf16, #tpu.memory_space<vmem>>, vector<1x1x32x16xbf16>
    %196 = vector.shape_cast %195 : vector<1x1x32x16xbf16> to vector<32x16xbf16>
    %cst_127 = arith.constant dense<0.000000e+00> : vector<32x32xf32>
    %197 = tpu.matmul %196, %194, %cst_127 {dimension_numbers = #tpu.dot_dimension_numbers<[1], [0], [0], [1], [0, 0, 1, 1], [], []>} : vector<32x16xbf16>, vector<16x32xbf16>, vector<32x32xf32> -> vector<32x32xf32>
    %198 = arith.addf %181, %197 : vector<32x32xf32>
    %c4_128 = arith.constant 4 : index
    %c0_129 = arith.constant 0 : index
    %c0_130 = arith.constant 0 : index
    %199 = vector.load %arg3[%c4_128, %c0_129, %c0_130] : memref<23x32x1xf32, #tpu.memory_space<vmem>>, vector<1x32x1xf32>
    %200 = vector.shape_cast %199 : vector<1x32x1xf32> to vector<32x1xf32>
    %201 = vector.broadcast %200 : vector<32x1xf32> to vector<32x32xf32>
    %202 = arith.addf %198, %201 : vector<32x32xf32>
    %cst_131 = arith.constant 0.000000e+00 : f32
    %203 = vector.broadcast %cst_131 : f32 to vector<32x32xf32>
    %204 = arith.maximumf %202, %203 : vector<32x32xf32>
    %205 = arith.truncf %204 : vector<32x32xf32> to vector<32x32xbf16>
    %206 = tpu.iota {dimensions = array<i32: 0>} : vector<32x32xi32>
    %207 = tpu.iota {dimensions = array<i32: 1>} : vector<32x32xi32>
    %c1_i32_132 = arith.constant 1 : i32
    %208 = vector.broadcast %c1_i32_132 : i32 to vector<32x32xi32>
    %209 = arith.muli %208, %207 : vector<32x32xi32>
    %c-1_i32_133 = arith.constant -1 : i32
    %210 = vector.broadcast %c-1_i32_133 : i32 to vector<32x32xi32>
    %211 = arith.addi %209, %210 : vector<32x32xi32>
    %212 = arith.cmpi eq, %206, %211 : vector<32x32xi32>
    %cst_134 = arith.constant 1.000000e+00 : f32
    %cst_135 = arith.constant 0.000000e+00 : f32
    %213 = vector.broadcast %cst_134 : f32 to vector<32x32xf32>
    %214 = vector.broadcast %cst_135 : f32 to vector<32x32xf32>
    %215 = arith.select %212, %213, %214 : vector<32x32xi1>, vector<32x32xf32>
    %216 = arith.truncf %215 : vector<32x32xf32> to vector<32x32xbf16>
    %cst_136 = arith.constant dense<0.000000e+00> : vector<32x32xf32>
    %217 = tpu.matmul %205, %216, %cst_136 {dimension_numbers = #tpu.dot_dimension_numbers<[1], [0], [0], [1], [0, 0, 1, 1], [], []>} : vector<32x32xbf16>, vector<32x32xbf16>, vector<32x32xf32> -> vector<32x32xf32>
    %218 = arith.truncf %217 : vector<32x32xf32> to vector<32x32xbf16>
    %c5 = arith.constant 5 : index
    %c0_137 = arith.constant 0 : index
    %c0_138 = arith.constant 0 : index
    %c0_139 = arith.constant 0 : index
    %219 = vector.load %arg2[%c5, %c0_137, %c0_138, %c0_139] : memref<23x3x32x32xbf16, #tpu.memory_space<vmem>>, vector<1x1x32x32xbf16>
    %220 = vector.shape_cast %219 : vector<1x1x32x32xbf16> to vector<32x32xbf16>
    %cst_140 = arith.constant dense<0.000000e+00> : vector<32x32xf32>
    %221 = tpu.matmul %220, %218, %cst_140 {dimension_numbers = #tpu.dot_dimension_numbers<[1], [0], [0], [1], [0, 0, 1, 1], [], []>} : vector<32x32xbf16>, vector<32x32xbf16>, vector<32x32xf32> -> vector<32x32xf32>
    %c5_141 = arith.constant 5 : index
    %c1_142 = arith.constant 1 : index
    %c0_143 = arith.constant 0 : index
    %c0_144 = arith.constant 0 : index
    %222 = vector.load %arg2[%c5_141, %c1_142, %c0_143, %c0_144] : memref<23x3x32x32xbf16, #tpu.memory_space<vmem>>, vector<1x1x32x32xbf16>
    %223 = vector.shape_cast %222 : vector<1x1x32x32xbf16> to vector<32x32xbf16>
    %cst_145 = arith.constant dense<0.000000e+00> : vector<32x32xf32>
    %224 = tpu.matmul %223, %205, %cst_145 {dimension_numbers = #tpu.dot_dimension_numbers<[1], [0], [0], [1], [0, 0, 1, 1], [], []>} : vector<32x32xbf16>, vector<32x32xbf16>, vector<32x32xf32> -> vector<32x32xf32>
    %225 = arith.addf %221, %224 : vector<32x32xf32>
    %226 = tpu.iota {dimensions = array<i32: 0>} : vector<32x32xi32>
    %227 = tpu.iota {dimensions = array<i32: 1>} : vector<32x32xi32>
    %c1_i32_146 = arith.constant 1 : i32
    %228 = vector.broadcast %c1_i32_146 : i32 to vector<32x32xi32>
    %229 = arith.muli %228, %227 : vector<32x32xi32>
    %c1_i32_147 = arith.constant 1 : i32
    %230 = vector.broadcast %c1_i32_147 : i32 to vector<32x32xi32>
    %231 = arith.addi %229, %230 : vector<32x32xi32>
    %232 = arith.cmpi eq, %226, %231 : vector<32x32xi32>
    %cst_148 = arith.constant 1.000000e+00 : f32
    %cst_149 = arith.constant 0.000000e+00 : f32
    %233 = vector.broadcast %cst_148 : f32 to vector<32x32xf32>
    %234 = vector.broadcast %cst_149 : f32 to vector<32x32xf32>
    %235 = arith.select %232, %233, %234 : vector<32x32xi1>, vector<32x32xf32>
    %236 = arith.truncf %235 : vector<32x32xf32> to vector<32x32xbf16>
    %cst_150 = arith.constant dense<0.000000e+00> : vector<32x32xf32>
    %237 = tpu.matmul %205, %236, %cst_150 {dimension_numbers = #tpu.dot_dimension_numbers<[1], [0], [0], [1], [0, 0, 1, 1], [], []>} : vector<32x32xbf16>, vector<32x32xbf16>, vector<32x32xf32> -> vector<32x32xf32>
    %238 = arith.truncf %237 : vector<32x32xf32> to vector<32x32xbf16>
    %c5_151 = arith.constant 5 : index
    %c2_152 = arith.constant 2 : index
    %c0_153 = arith.constant 0 : index
    %c0_154 = arith.constant 0 : index
    %239 = vector.load %arg2[%c5_151, %c2_152, %c0_153, %c0_154] : memref<23x3x32x32xbf16, #tpu.memory_space<vmem>>, vector<1x1x32x32xbf16>
    %240 = vector.shape_cast %239 : vector<1x1x32x32xbf16> to vector<32x32xbf16>
    %cst_155 = arith.constant dense<0.000000e+00> : vector<32x32xf32>
    %241 = tpu.matmul %240, %238, %cst_155 {dimension_numbers = #tpu.dot_dimension_numbers<[1], [0], [0], [1], [0, 0, 1, 1], [], []>} : vector<32x32xbf16>, vector<32x32xbf16>, vector<32x32xf32> -> vector<32x32xf32>
    %242 = arith.addf %225, %241 : vector<32x32xf32>
    %c5_156 = arith.constant 5 : index
    %c0_157 = arith.constant 0 : index
    %c0_158 = arith.constant 0 : index
    %243 = vector.load %arg3[%c5_156, %c0_157, %c0_158] : memref<23x32x1xf32, #tpu.memory_space<vmem>>, vector<1x32x1xf32>
    %244 = vector.shape_cast %243 : vector<1x32x1xf32> to vector<32x1xf32>
    %245 = vector.broadcast %244 : vector<32x1xf32> to vector<32x32xf32>
    %246 = arith.addf %242, %245 : vector<32x32xf32>
    %cst_159 = arith.constant 0.000000e+00 : f32
    %247 = vector.broadcast %cst_159 : f32 to vector<32x32xf32>
    %248 = arith.maximumf %246, %247 : vector<32x32xf32>
    %249 = arith.truncf %248 : vector<32x32xf32> to vector<32x32xbf16>
    %cst_160 = arith.constant dense<0.000000e+00> : vector<32x32xf32>
    %250 = tpu.matmul %249, %216, %cst_160 {dimension_numbers = #tpu.dot_dimension_numbers<[1], [0], [0], [1], [0, 0, 1, 1], [], []>} : vector<32x32xbf16>, vector<32x32xbf16>, vector<32x32xf32> -> vector<32x32xf32>
    %251 = arith.truncf %250 : vector<32x32xf32> to vector<32x32xbf16>
    %c6 = arith.constant 6 : index
    %c0_161 = arith.constant 0 : index
    %c0_162 = arith.constant 0 : index
    %c0_163 = arith.constant 0 : index
    %252 = vector.load %arg2[%c6, %c0_161, %c0_162, %c0_163] : memref<23x3x32x32xbf16, #tpu.memory_space<vmem>>, vector<1x1x32x32xbf16>
    %253 = vector.shape_cast %252 : vector<1x1x32x32xbf16> to vector<32x32xbf16>
    %cst_164 = arith.constant dense<0.000000e+00> : vector<32x32xf32>
    %254 = tpu.matmul %253, %251, %cst_164 {dimension_numbers = #tpu.dot_dimension_numbers<[1], [0], [0], [1], [0, 0, 1, 1], [], []>} : vector<32x32xbf16>, vector<32x32xbf16>, vector<32x32xf32> -> vector<32x32xf32>
    %c6_165 = arith.constant 6 : index
    %c1_166 = arith.constant 1 : index
    %c0_167 = arith.constant 0 : index
    %c0_168 = arith.constant 0 : index
    %255 = vector.load %arg2[%c6_165, %c1_166, %c0_167, %c0_168] : memref<23x3x32x32xbf16, #tpu.memory_space<vmem>>, vector<1x1x32x32xbf16>
    %256 = vector.shape_cast %255 : vector<1x1x32x32xbf16> to vector<32x32xbf16>
    %cst_169 = arith.constant dense<0.000000e+00> : vector<32x32xf32>
    %257 = tpu.matmul %256, %249, %cst_169 {dimension_numbers = #tpu.dot_dimension_numbers<[1], [0], [0], [1], [0, 0, 1, 1], [], []>} : vector<32x32xbf16>, vector<32x32xbf16>, vector<32x32xf32> -> vector<32x32xf32>
    %258 = arith.addf %254, %257 : vector<32x32xf32>
    %cst_170 = arith.constant dense<0.000000e+00> : vector<32x32xf32>
    %259 = tpu.matmul %249, %236, %cst_170 {dimension_numbers = #tpu.dot_dimension_numbers<[1], [0], [0], [1], [0, 0, 1, 1], [], []>} : vector<32x32xbf16>, vector<32x32xbf16>, vector<32x32xf32> -> vector<32x32xf32>
    %260 = arith.truncf %259 : vector<32x32xf32> to vector<32x32xbf16>
    %c6_171 = arith.constant 6 : index
    %c2_172 = arith.constant 2 : index
    %c0_173 = arith.constant 0 : index
    %c0_174 = arith.constant 0 : index
    %261 = vector.load %arg2[%c6_171, %c2_172, %c0_173, %c0_174] : memref<23x3x32x32xbf16, #tpu.memory_space<vmem>>, vector<1x1x32x32xbf16>
    %262 = vector.shape_cast %261 : vector<1x1x32x32xbf16> to vector<32x32xbf16>
    %cst_175 = arith.constant dense<0.000000e+00> : vector<32x32xf32>
    %263 = tpu.matmul %262, %260, %cst_175 {dimension_numbers = #tpu.dot_dimension_numbers<[1], [0], [0], [1], [0, 0, 1, 1], [], []>} : vector<32x32xbf16>, vector<32x32xbf16>, vector<32x32xf32> -> vector<32x32xf32>
    %264 = arith.addf %258, %263 : vector<32x32xf32>
    %c6_176 = arith.constant 6 : index
    %c0_177 = arith.constant 0 : index
    %c0_178 = arith.constant 0 : index
    %265 = vector.load %arg3[%c6_176, %c0_177, %c0_178] : memref<23x32x1xf32, #tpu.memory_space<vmem>>, vector<1x32x1xf32>
    %266 = vector.shape_cast %265 : vector<1x32x1xf32> to vector<32x1xf32>
    %267 = vector.broadcast %266 : vector<32x1xf32> to vector<32x32xf32>
    %268 = arith.addf %264, %267 : vector<32x32xf32>
    %cst_179 = arith.constant 0.000000e+00 : f32
    %269 = vector.broadcast %cst_179 : f32 to vector<32x32xf32>
    %270 = arith.maximumf %268, %269 : vector<32x32xf32>
    %271 = arith.truncf %147 : vector<16x64xf32> to vector<16x64xbf16>
    %cst_180 = arith.constant dense<0.000000e+00> : vector<16x32xf32>
    %272 = tpu.matmul %271, %159, %cst_180 {dimension_numbers = #tpu.dot_dimension_numbers<[1], [0], [0], [1], [0, 0, 1, 1], [], []>} : vector<16x64xbf16>, vector<64x32xbf16>, vector<16x32xf32> -> vector<16x32xf32>
    %273 = arith.truncf %272 : vector<16x32xf32> to vector<16x32xbf16>
    %c7 = arith.constant 7 : index
    %c0_181 = arith.constant 0 : index
    %c0_182 = arith.constant 0 : index
    %c0_183 = arith.constant 0 : index
    %274 = vector.load %arg2[%c7, %c0_181, %c0_182, %c0_183] : memref<23x3x32x32xbf16, #tpu.memory_space<vmem>>, vector<1x1x32x16xbf16>
    %275 = vector.shape_cast %274 : vector<1x1x32x16xbf16> to vector<32x16xbf16>
    %cst_184 = arith.constant dense<0.000000e+00> : vector<32x32xf32>
    %276 = tpu.matmul %275, %273, %cst_184 {dimension_numbers = #tpu.dot_dimension_numbers<[1], [0], [0], [1], [0, 0, 1, 1], [], []>} : vector<32x16xbf16>, vector<16x32xbf16>, vector<32x32xf32> -> vector<32x32xf32>
    %cst_185 = arith.constant dense<0.000000e+00> : vector<16x32xf32>
    %277 = tpu.matmul %271, %175, %cst_185 {dimension_numbers = #tpu.dot_dimension_numbers<[1], [0], [0], [1], [0, 0, 1, 1], [], []>} : vector<16x64xbf16>, vector<64x32xbf16>, vector<16x32xf32> -> vector<16x32xf32>
    %278 = arith.truncf %277 : vector<16x32xf32> to vector<16x32xbf16>
    %c7_186 = arith.constant 7 : index
    %c1_187 = arith.constant 1 : index
    %c0_188 = arith.constant 0 : index
    %c0_189 = arith.constant 0 : index
    %279 = vector.load %arg2[%c7_186, %c1_187, %c0_188, %c0_189] : memref<23x3x32x32xbf16, #tpu.memory_space<vmem>>, vector<1x1x32x16xbf16>
    %280 = vector.shape_cast %279 : vector<1x1x32x16xbf16> to vector<32x16xbf16>
    %cst_190 = arith.constant dense<0.000000e+00> : vector<32x32xf32>
    %281 = tpu.matmul %280, %278, %cst_190 {dimension_numbers = #tpu.dot_dimension_numbers<[1], [0], [0], [1], [0, 0, 1, 1], [], []>} : vector<32x16xbf16>, vector<16x32xbf16>, vector<32x32xf32> -> vector<32x32xf32>
    %282 = arith.addf %276, %281 : vector<32x32xf32>
    %cst_191 = arith.constant dense<0.000000e+00> : vector<16x32xf32>
    %283 = tpu.matmul %271, %192, %cst_191 {dimension_numbers = #tpu.dot_dimension_numbers<[1], [0], [0], [1], [0, 0, 1, 1], [], []>} : vector<16x64xbf16>, vector<64x32xbf16>, vector<16x32xf32> -> vector<16x32xf32>
    %284 = arith.truncf %283 : vector<16x32xf32> to vector<16x32xbf16>
    %c7_192 = arith.constant 7 : index
    %c2_193 = arith.constant 2 : index
    %c0_194 = arith.constant 0 : index
    %c0_195 = arith.constant 0 : index
    %285 = vector.load %arg2[%c7_192, %c2_193, %c0_194, %c0_195] : memref<23x3x32x32xbf16, #tpu.memory_space<vmem>>, vector<1x1x32x16xbf16>
    %286 = vector.shape_cast %285 : vector<1x1x32x16xbf16> to vector<32x16xbf16>
    %cst_196 = arith.constant dense<0.000000e+00> : vector<32x32xf32>
    %287 = tpu.matmul %286, %284, %cst_196 {dimension_numbers = #tpu.dot_dimension_numbers<[1], [0], [0], [1], [0, 0, 1, 1], [], []>} : vector<32x16xbf16>, vector<16x32xbf16>, vector<32x32xf32> -> vector<32x32xf32>
    %288 = arith.addf %282, %287 : vector<32x32xf32>
    %c7_197 = arith.constant 7 : index
    %c0_198 = arith.constant 0 : index
    %c0_199 = arith.constant 0 : index
    %289 = vector.load %arg3[%c7_197, %c0_198, %c0_199] : memref<23x32x1xf32, #tpu.memory_space<vmem>>, vector<1x32x1xf32>
    %290 = vector.shape_cast %289 : vector<1x32x1xf32> to vector<32x1xf32>
    %291 = vector.broadcast %290 : vector<32x1xf32> to vector<32x32xf32>
    %292 = arith.addf %288, %291 : vector<32x32xf32>
    %293 = arith.addf %270, %292 : vector<32x32xf32>
    %294 = arith.truncf %293 : vector<32x32xf32> to vector<32x32xbf16>
    %295 = tpu.iota {dimensions = array<i32: 0>} : vector<32x16xi32>
    %296 = tpu.iota {dimensions = array<i32: 1>} : vector<32x16xi32>
    %c2_i32_200 = arith.constant 2 : i32
    %297 = vector.broadcast %c2_i32_200 : i32 to vector<32x16xi32>
    %298 = arith.muli %297, %296 : vector<32x16xi32>
    %c-1_i32_201 = arith.constant -1 : i32
    %299 = vector.broadcast %c-1_i32_201 : i32 to vector<32x16xi32>
    %300 = arith.addi %298, %299 : vector<32x16xi32>
    %301 = arith.cmpi eq, %295, %300 : vector<32x16xi32>
    %cst_202 = arith.constant 1.000000e+00 : f32
    %cst_203 = arith.constant 0.000000e+00 : f32
    %302 = vector.broadcast %cst_202 : f32 to vector<32x16xf32>
    %303 = vector.broadcast %cst_203 : f32 to vector<32x16xf32>
    %304 = arith.select %301, %302, %303 : vector<32x16xi1>, vector<32x16xf32>
    %305 = arith.truncf %304 : vector<32x16xf32> to vector<32x16xbf16>
    %cst_204 = arith.constant dense<0.000000e+00> : vector<32x16xf32>
    %306 = tpu.matmul %294, %305, %cst_204 {dimension_numbers = #tpu.dot_dimension_numbers<[1], [0], [0], [1], [0, 0, 1, 1], [], []>} : vector<32x32xbf16>, vector<32x16xbf16>, vector<32x16xf32> -> vector<32x16xf32>
    %307 = arith.truncf %306 : vector<32x16xf32> to vector<32x16xbf16>
    %c8 = arith.constant 8 : index
    %c0_205 = arith.constant 0 : index
    %c0_206 = arith.constant 0 : index
    %c0_207 = arith.constant 0 : index
    %308 = vector.load %arg2[%c8, %c0_205, %c0_206, %c0_207] : memref<23x3x32x32xbf16, #tpu.memory_space<vmem>>, vector<1x1x32x32xbf16>
    %309 = vector.shape_cast %308 : vector<1x1x32x32xbf16> to vector<32x32xbf16>
    %cst_208 = arith.constant dense<0.000000e+00> : vector<32x16xf32>
    %310 = tpu.matmul %309, %307, %cst_208 {dimension_numbers = #tpu.dot_dimension_numbers<[1], [0], [0], [1], [0, 0, 1, 1], [], []>} : vector<32x32xbf16>, vector<32x16xbf16>, vector<32x16xf32> -> vector<32x16xf32>
    %311 = tpu.iota {dimensions = array<i32: 0>} : vector<32x16xi32>
    %312 = tpu.iota {dimensions = array<i32: 1>} : vector<32x16xi32>
    %c2_i32_209 = arith.constant 2 : i32
    %313 = vector.broadcast %c2_i32_209 : i32 to vector<32x16xi32>
    %314 = arith.muli %313, %312 : vector<32x16xi32>
    %c0_i32_210 = arith.constant 0 : i32
    %315 = vector.broadcast %c0_i32_210 : i32 to vector<32x16xi32>
    %316 = arith.addi %314, %315 : vector<32x16xi32>
    %317 = arith.cmpi eq, %311, %316 : vector<32x16xi32>
    %cst_211 = arith.constant 1.000000e+00 : f32
    %cst_212 = arith.constant 0.000000e+00 : f32
    %318 = vector.broadcast %cst_211 : f32 to vector<32x16xf32>
    %319 = vector.broadcast %cst_212 : f32 to vector<32x16xf32>
    %320 = arith.select %317, %318, %319 : vector<32x16xi1>, vector<32x16xf32>
    %321 = arith.truncf %320 : vector<32x16xf32> to vector<32x16xbf16>
    %cst_213 = arith.constant dense<0.000000e+00> : vector<32x16xf32>
    %322 = tpu.matmul %294, %321, %cst_213 {dimension_numbers = #tpu.dot_dimension_numbers<[1], [0], [0], [1], [0, 0, 1, 1], [], []>} : vector<32x32xbf16>, vector<32x16xbf16>, vector<32x16xf32> -> vector<32x16xf32>
    %323 = arith.truncf %322 : vector<32x16xf32> to vector<32x16xbf16>
    %c8_214 = arith.constant 8 : index
    %c1_215 = arith.constant 1 : index
    %c0_216 = arith.constant 0 : index
    %c0_217 = arith.constant 0 : index
    %324 = vector.load %arg2[%c8_214, %c1_215, %c0_216, %c0_217] : memref<23x3x32x32xbf16, #tpu.memory_space<vmem>>, vector<1x1x32x32xbf16>
    %325 = vector.shape_cast %324 : vector<1x1x32x32xbf16> to vector<32x32xbf16>
    %cst_218 = arith.constant dense<0.000000e+00> : vector<32x16xf32>
    %326 = tpu.matmul %325, %323, %cst_218 {dimension_numbers = #tpu.dot_dimension_numbers<[1], [0], [0], [1], [0, 0, 1, 1], [], []>} : vector<32x32xbf16>, vector<32x16xbf16>, vector<32x16xf32> -> vector<32x16xf32>
    %327 = arith.addf %310, %326 : vector<32x16xf32>
    %328 = tpu.iota {dimensions = array<i32: 0>} : vector<32x16xi32>
    %329 = tpu.iota {dimensions = array<i32: 1>} : vector<32x16xi32>
    %c2_i32_219 = arith.constant 2 : i32
    %330 = vector.broadcast %c2_i32_219 : i32 to vector<32x16xi32>
    %331 = arith.muli %330, %329 : vector<32x16xi32>
    %c1_i32_220 = arith.constant 1 : i32
    %332 = vector.broadcast %c1_i32_220 : i32 to vector<32x16xi32>
    %333 = arith.addi %331, %332 : vector<32x16xi32>
    %334 = arith.cmpi eq, %328, %333 : vector<32x16xi32>
    %cst_221 = arith.constant 1.000000e+00 : f32
    %cst_222 = arith.constant 0.000000e+00 : f32
    %335 = vector.broadcast %cst_221 : f32 to vector<32x16xf32>
    %336 = vector.broadcast %cst_222 : f32 to vector<32x16xf32>
    %337 = arith.select %334, %335, %336 : vector<32x16xi1>, vector<32x16xf32>
    %338 = arith.truncf %337 : vector<32x16xf32> to vector<32x16xbf16>
    %cst_223 = arith.constant dense<0.000000e+00> : vector<32x16xf32>
    %339 = tpu.matmul %294, %338, %cst_223 {dimension_numbers = #tpu.dot_dimension_numbers<[1], [0], [0], [1], [0, 0, 1, 1], [], []>} : vector<32x32xbf16>, vector<32x16xbf16>, vector<32x16xf32> -> vector<32x16xf32>
    %340 = arith.truncf %339 : vector<32x16xf32> to vector<32x16xbf16>
    %c8_224 = arith.constant 8 : index
    %c2_225 = arith.constant 2 : index
    %c0_226 = arith.constant 0 : index
    %c0_227 = arith.constant 0 : index
    %341 = vector.load %arg2[%c8_224, %c2_225, %c0_226, %c0_227] : memref<23x3x32x32xbf16, #tpu.memory_space<vmem>>, vector<1x1x32x32xbf16>
    %342 = vector.shape_cast %341 : vector<1x1x32x32xbf16> to vector<32x32xbf16>
    %cst_228 = arith.constant dense<0.000000e+00> : vector<32x16xf32>
    %343 = tpu.matmul %342, %340, %cst_228 {dimension_numbers = #tpu.dot_dimension_numbers<[1], [0], [0], [1], [0, 0, 1, 1], [], []>} : vector<32x32xbf16>, vector<32x16xbf16>, vector<32x16xf32> -> vector<32x16xf32>
    %344 = arith.addf %327, %343 : vector<32x16xf32>
    %c8_229 = arith.constant 8 : index
    %c0_230 = arith.constant 0 : index
    %c0_231 = arith.constant 0 : index
    %345 = vector.load %arg3[%c8_229, %c0_230, %c0_231] : memref<23x32x1xf32, #tpu.memory_space<vmem>>, vector<1x32x1xf32>
    %346 = vector.shape_cast %345 : vector<1x32x1xf32> to vector<32x1xf32>
    %347 = vector.broadcast %346 : vector<32x1xf32> to vector<32x16xf32>
    %348 = arith.addf %344, %347 : vector<32x16xf32>
    %cst_232 = arith.constant 0.000000e+00 : f32
    %349 = vector.broadcast %cst_232 : f32 to vector<32x16xf32>
    %350 = arith.maximumf %348, %349 : vector<32x16xf32>
    %351 = arith.truncf %350 : vector<32x16xf32> to vector<32x16xbf16>
    %352 = tpu.iota {dimensions = array<i32: 0>} : vector<16x16xi32>
    %353 = tpu.iota {dimensions = array<i32: 1>} : vector<16x16xi32>
    %c1_i32_233 = arith.constant 1 : i32
    %354 = vector.broadcast %c1_i32_233 : i32 to vector<16x16xi32>
    %355 = arith.muli %354, %353 : vector<16x16xi32>
    %c-1_i32_234 = arith.constant -1 : i32
    %356 = vector.broadcast %c-1_i32_234 : i32 to vector<16x16xi32>
    %357 = arith.addi %355, %356 : vector<16x16xi32>
    %358 = arith.cmpi eq, %352, %357 : vector<16x16xi32>
    %cst_235 = arith.constant 1.000000e+00 : f32
    %cst_236 = arith.constant 0.000000e+00 : f32
    %359 = vector.broadcast %cst_235 : f32 to vector<16x16xf32>
    %360 = vector.broadcast %cst_236 : f32 to vector<16x16xf32>
    %361 = arith.select %358, %359, %360 : vector<16x16xi1>, vector<16x16xf32>
    %362 = arith.truncf %361 : vector<16x16xf32> to vector<16x16xbf16>
    %cst_237 = arith.constant dense<0.000000e+00> : vector<32x16xf32>
    %363 = tpu.matmul %351, %362, %cst_237 {dimension_numbers = #tpu.dot_dimension_numbers<[1], [0], [0], [1], [0, 0, 1, 1], [], []>} : vector<32x16xbf16>, vector<16x16xbf16>, vector<32x16xf32> -> vector<32x16xf32>
    %364 = arith.truncf %363 : vector<32x16xf32> to vector<32x16xbf16>
    %c9 = arith.constant 9 : index
    %c0_238 = arith.constant 0 : index
    %c0_239 = arith.constant 0 : index
    %c0_240 = arith.constant 0 : index
    %365 = vector.load %arg2[%c9, %c0_238, %c0_239, %c0_240] : memref<23x3x32x32xbf16, #tpu.memory_space<vmem>>, vector<1x1x32x32xbf16>
    %366 = vector.shape_cast %365 : vector<1x1x32x32xbf16> to vector<32x32xbf16>
    %cst_241 = arith.constant dense<0.000000e+00> : vector<32x16xf32>
    %367 = tpu.matmul %366, %364, %cst_241 {dimension_numbers = #tpu.dot_dimension_numbers<[1], [0], [0], [1], [0, 0, 1, 1], [], []>} : vector<32x32xbf16>, vector<32x16xbf16>, vector<32x16xf32> -> vector<32x16xf32>
    %c9_242 = arith.constant 9 : index
    %c1_243 = arith.constant 1 : index
    %c0_244 = arith.constant 0 : index
    %c0_245 = arith.constant 0 : index
    %368 = vector.load %arg2[%c9_242, %c1_243, %c0_244, %c0_245] : memref<23x3x32x32xbf16, #tpu.memory_space<vmem>>, vector<1x1x32x32xbf16>
    %369 = vector.shape_cast %368 : vector<1x1x32x32xbf16> to vector<32x32xbf16>
    %cst_246 = arith.constant dense<0.000000e+00> : vector<32x16xf32>
    %370 = tpu.matmul %369, %351, %cst_246 {dimension_numbers = #tpu.dot_dimension_numbers<[1], [0], [0], [1], [0, 0, 1, 1], [], []>} : vector<32x32xbf16>, vector<32x16xbf16>, vector<32x16xf32> -> vector<32x16xf32>
    %371 = arith.addf %367, %370 : vector<32x16xf32>
    %372 = tpu.iota {dimensions = array<i32: 0>} : vector<16x16xi32>
    %373 = tpu.iota {dimensions = array<i32: 1>} : vector<16x16xi32>
    %c1_i32_247 = arith.constant 1 : i32
    %374 = vector.broadcast %c1_i32_247 : i32 to vector<16x16xi32>
    %375 = arith.muli %374, %373 : vector<16x16xi32>
    %c1_i32_248 = arith.constant 1 : i32
    %376 = vector.broadcast %c1_i32_248 : i32 to vector<16x16xi32>
    %377 = arith.addi %375, %376 : vector<16x16xi32>
    %378 = arith.cmpi eq, %372, %377 : vector<16x16xi32>
    %cst_249 = arith.constant 1.000000e+00 : f32
    %cst_250 = arith.constant 0.000000e+00 : f32
    %379 = vector.broadcast %cst_249 : f32 to vector<16x16xf32>
    %380 = vector.broadcast %cst_250 : f32 to vector<16x16xf32>
    %381 = arith.select %378, %379, %380 : vector<16x16xi1>, vector<16x16xf32>
    %382 = arith.truncf %381 : vector<16x16xf32> to vector<16x16xbf16>
    %cst_251 = arith.constant dense<0.000000e+00> : vector<32x16xf32>
    %383 = tpu.matmul %351, %382, %cst_251 {dimension_numbers = #tpu.dot_dimension_numbers<[1], [0], [0], [1], [0, 0, 1, 1], [], []>} : vector<32x16xbf16>, vector<16x16xbf16>, vector<32x16xf32> -> vector<32x16xf32>
    %384 = arith.truncf %383 : vector<32x16xf32> to vector<32x16xbf16>
    %c9_252 = arith.constant 9 : index
    %c2_253 = arith.constant 2 : index
    %c0_254 = arith.constant 0 : index
    %c0_255 = arith.constant 0 : index
    %385 = vector.load %arg2[%c9_252, %c2_253, %c0_254, %c0_255] : memref<23x3x32x32xbf16, #tpu.memory_space<vmem>>, vector<1x1x32x32xbf16>
    %386 = vector.shape_cast %385 : vector<1x1x32x32xbf16> to vector<32x32xbf16>
    %cst_256 = arith.constant dense<0.000000e+00> : vector<32x16xf32>
    %387 = tpu.matmul %386, %384, %cst_256 {dimension_numbers = #tpu.dot_dimension_numbers<[1], [0], [0], [1], [0, 0, 1, 1], [], []>} : vector<32x32xbf16>, vector<32x16xbf16>, vector<32x16xf32> -> vector<32x16xf32>
    %388 = arith.addf %371, %387 : vector<32x16xf32>
    %c9_257 = arith.constant 9 : index
    %c0_258 = arith.constant 0 : index
    %c0_259 = arith.constant 0 : index
    %389 = vector.load %arg3[%c9_257, %c0_258, %c0_259] : memref<23x32x1xf32, #tpu.memory_space<vmem>>, vector<1x32x1xf32>
    %390 = vector.shape_cast %389 : vector<1x32x1xf32> to vector<32x1xf32>
    %391 = vector.broadcast %390 : vector<32x1xf32> to vector<32x16xf32>
    %392 = arith.addf %388, %391 : vector<32x16xf32>
    %cst_260 = arith.constant 0.000000e+00 : f32
    %393 = vector.broadcast %cst_260 : f32 to vector<32x16xf32>
    %394 = arith.maximumf %392, %393 : vector<32x16xf32>
    %395 = arith.truncf %394 : vector<32x16xf32> to vector<32x16xbf16>
    %cst_261 = arith.constant dense<0.000000e+00> : vector<32x16xf32>
    %396 = tpu.matmul %395, %362, %cst_261 {dimension_numbers = #tpu.dot_dimension_numbers<[1], [0], [0], [1], [0, 0, 1, 1], [], []>} : vector<32x16xbf16>, vector<16x16xbf16>, vector<32x16xf32> -> vector<32x16xf32>
    %397 = arith.truncf %396 : vector<32x16xf32> to vector<32x16xbf16>
    %c10 = arith.constant 10 : index
    %c0_262 = arith.constant 0 : index
    %c0_263 = arith.constant 0 : index
    %c0_264 = arith.constant 0 : index
    %398 = vector.load %arg2[%c10, %c0_262, %c0_263, %c0_264] : memref<23x3x32x32xbf16, #tpu.memory_space<vmem>>, vector<1x1x32x32xbf16>
    %399 = vector.shape_cast %398 : vector<1x1x32x32xbf16> to vector<32x32xbf16>
    %cst_265 = arith.constant dense<0.000000e+00> : vector<32x16xf32>
    %400 = tpu.matmul %399, %397, %cst_265 {dimension_numbers = #tpu.dot_dimension_numbers<[1], [0], [0], [1], [0, 0, 1, 1], [], []>} : vector<32x32xbf16>, vector<32x16xbf16>, vector<32x16xf32> -> vector<32x16xf32>
    %c10_266 = arith.constant 10 : index
    %c1_267 = arith.constant 1 : index
    %c0_268 = arith.constant 0 : index
    %c0_269 = arith.constant 0 : index
    %401 = vector.load %arg2[%c10_266, %c1_267, %c0_268, %c0_269] : memref<23x3x32x32xbf16, #tpu.memory_space<vmem>>, vector<1x1x32x32xbf16>
    %402 = vector.shape_cast %401 : vector<1x1x32x32xbf16> to vector<32x32xbf16>
    %cst_270 = arith.constant dense<0.000000e+00> : vector<32x16xf32>
    %403 = tpu.matmul %402, %395, %cst_270 {dimension_numbers = #tpu.dot_dimension_numbers<[1], [0], [0], [1], [0, 0, 1, 1], [], []>} : vector<32x32xbf16>, vector<32x16xbf16>, vector<32x16xf32> -> vector<32x16xf32>
    %404 = arith.addf %400, %403 : vector<32x16xf32>
    %cst_271 = arith.constant dense<0.000000e+00> : vector<32x16xf32>
    %405 = tpu.matmul %395, %382, %cst_271 {dimension_numbers = #tpu.dot_dimension_numbers<[1], [0], [0], [1], [0, 0, 1, 1], [], []>} : vector<32x16xbf16>, vector<16x16xbf16>, vector<32x16xf32> -> vector<32x16xf32>
    %406 = arith.truncf %405 : vector<32x16xf32> to vector<32x16xbf16>
    %c10_272 = arith.constant 10 : index
    %c2_273 = arith.constant 2 : index
    %c0_274 = arith.constant 0 : index
    %c0_275 = arith.constant 0 : index
    %407 = vector.load %arg2[%c10_272, %c2_273, %c0_274, %c0_275] : memref<23x3x32x32xbf16, #tpu.memory_space<vmem>>, vector<1x1x32x32xbf16>
    %408 = vector.shape_cast %407 : vector<1x1x32x32xbf16> to vector<32x32xbf16>
    %cst_276 = arith.constant dense<0.000000e+00> : vector<32x16xf32>
    %409 = tpu.matmul %408, %406, %cst_276 {dimension_numbers = #tpu.dot_dimension_numbers<[1], [0], [0], [1], [0, 0, 1, 1], [], []>} : vector<32x32xbf16>, vector<32x16xbf16>, vector<32x16xf32> -> vector<32x16xf32>
    %410 = arith.addf %404, %409 : vector<32x16xf32>
    %c10_277 = arith.constant 10 : index
    %c0_278 = arith.constant 0 : index
    %c0_279 = arith.constant 0 : index
    %411 = vector.load %arg3[%c10_277, %c0_278, %c0_279] : memref<23x32x1xf32, #tpu.memory_space<vmem>>, vector<1x32x1xf32>
    %412 = vector.shape_cast %411 : vector<1x32x1xf32> to vector<32x1xf32>
    %413 = vector.broadcast %412 : vector<32x1xf32> to vector<32x16xf32>
    %414 = arith.addf %410, %413 : vector<32x16xf32>
    %cst_280 = arith.constant 0.000000e+00 : f32
    %415 = vector.broadcast %cst_280 : f32 to vector<32x16xf32>
    %416 = arith.maximumf %414, %415 : vector<32x16xf32>
    %417 = arith.truncf %293 : vector<32x32xf32> to vector<32x32xbf16>
    %cst_281 = arith.constant dense<0.000000e+00> : vector<32x16xf32>
    %418 = tpu.matmul %417, %305, %cst_281 {dimension_numbers = #tpu.dot_dimension_numbers<[1], [0], [0], [1], [0, 0, 1, 1], [], []>} : vector<32x32xbf16>, vector<32x16xbf16>, vector<32x16xf32> -> vector<32x16xf32>
    %419 = arith.truncf %418 : vector<32x16xf32> to vector<32x16xbf16>
    %c11 = arith.constant 11 : index
    %c0_282 = arith.constant 0 : index
    %c0_283 = arith.constant 0 : index
    %c0_284 = arith.constant 0 : index
    %420 = vector.load %arg2[%c11, %c0_282, %c0_283, %c0_284] : memref<23x3x32x32xbf16, #tpu.memory_space<vmem>>, vector<1x1x32x32xbf16>
    %421 = vector.shape_cast %420 : vector<1x1x32x32xbf16> to vector<32x32xbf16>
    %cst_285 = arith.constant dense<0.000000e+00> : vector<32x16xf32>
    %422 = tpu.matmul %421, %419, %cst_285 {dimension_numbers = #tpu.dot_dimension_numbers<[1], [0], [0], [1], [0, 0, 1, 1], [], []>} : vector<32x32xbf16>, vector<32x16xbf16>, vector<32x16xf32> -> vector<32x16xf32>
    %cst_286 = arith.constant dense<0.000000e+00> : vector<32x16xf32>
    %423 = tpu.matmul %417, %321, %cst_286 {dimension_numbers = #tpu.dot_dimension_numbers<[1], [0], [0], [1], [0, 0, 1, 1], [], []>} : vector<32x32xbf16>, vector<32x16xbf16>, vector<32x16xf32> -> vector<32x16xf32>
    %424 = arith.truncf %423 : vector<32x16xf32> to vector<32x16xbf16>
    %c11_287 = arith.constant 11 : index
    %c1_288 = arith.constant 1 : index
    %c0_289 = arith.constant 0 : index
    %c0_290 = arith.constant 0 : index
    %425 = vector.load %arg2[%c11_287, %c1_288, %c0_289, %c0_290] : memref<23x3x32x32xbf16, #tpu.memory_space<vmem>>, vector<1x1x32x32xbf16>
    %426 = vector.shape_cast %425 : vector<1x1x32x32xbf16> to vector<32x32xbf16>
    %cst_291 = arith.constant dense<0.000000e+00> : vector<32x16xf32>
    %427 = tpu.matmul %426, %424, %cst_291 {dimension_numbers = #tpu.dot_dimension_numbers<[1], [0], [0], [1], [0, 0, 1, 1], [], []>} : vector<32x32xbf16>, vector<32x16xbf16>, vector<32x16xf32> -> vector<32x16xf32>
    %428 = arith.addf %422, %427 : vector<32x16xf32>
    %cst_292 = arith.constant dense<0.000000e+00> : vector<32x16xf32>
    %429 = tpu.matmul %417, %338, %cst_292 {dimension_numbers = #tpu.dot_dimension_numbers<[1], [0], [0], [1], [0, 0, 1, 1], [], []>} : vector<32x32xbf16>, vector<32x16xbf16>, vector<32x16xf32> -> vector<32x16xf32>
    %430 = arith.truncf %429 : vector<32x16xf32> to vector<32x16xbf16>
    %c11_293 = arith.constant 11 : index
    %c2_294 = arith.constant 2 : index
    %c0_295 = arith.constant 0 : index
    %c0_296 = arith.constant 0 : index
    %431 = vector.load %arg2[%c11_293, %c2_294, %c0_295, %c0_296] : memref<23x3x32x32xbf16, #tpu.memory_space<vmem>>, vector<1x1x32x32xbf16>
    %432 = vector.shape_cast %431 : vector<1x1x32x32xbf16> to vector<32x32xbf16>
    %cst_297 = arith.constant dense<0.000000e+00> : vector<32x16xf32>
    %433 = tpu.matmul %432, %430, %cst_297 {dimension_numbers = #tpu.dot_dimension_numbers<[1], [0], [0], [1], [0, 0, 1, 1], [], []>} : vector<32x32xbf16>, vector<32x16xbf16>, vector<32x16xf32> -> vector<32x16xf32>
    %434 = arith.addf %428, %433 : vector<32x16xf32>
    %c11_298 = arith.constant 11 : index
    %c0_299 = arith.constant 0 : index
    %c0_300 = arith.constant 0 : index
    %435 = vector.load %arg3[%c11_298, %c0_299, %c0_300] : memref<23x32x1xf32, #tpu.memory_space<vmem>>, vector<1x32x1xf32>
    %436 = vector.shape_cast %435 : vector<1x32x1xf32> to vector<32x1xf32>
    %437 = vector.broadcast %436 : vector<32x1xf32> to vector<32x16xf32>
    %438 = arith.addf %434, %437 : vector<32x16xf32>
    %439 = arith.addf %416, %438 : vector<32x16xf32>
    %440 = arith.truncf %439 : vector<32x16xf32> to vector<32x16xbf16>
    %441 = tpu.iota {dimensions = array<i32: 0>} : vector<16x8xi32>
    %442 = tpu.iota {dimensions = array<i32: 1>} : vector<16x8xi32>
    %c2_i32_301 = arith.constant 2 : i32
    %443 = vector.broadcast %c2_i32_301 : i32 to vector<16x8xi32>
    %444 = arith.muli %443, %442 : vector<16x8xi32>
    %c-1_i32_302 = arith.constant -1 : i32
    %445 = vector.broadcast %c-1_i32_302 : i32 to vector<16x8xi32>
    %446 = arith.addi %444, %445 : vector<16x8xi32>
    %447 = arith.cmpi eq, %441, %446 : vector<16x8xi32>
    %cst_303 = arith.constant 1.000000e+00 : f32
    %cst_304 = arith.constant 0.000000e+00 : f32
    %448 = vector.broadcast %cst_303 : f32 to vector<16x8xf32>
    %449 = vector.broadcast %cst_304 : f32 to vector<16x8xf32>
    %450 = arith.select %447, %448, %449 : vector<16x8xi1>, vector<16x8xf32>
    %451 = arith.truncf %450 : vector<16x8xf32> to vector<16x8xbf16>
    %cst_305 = arith.constant dense<0.000000e+00> : vector<32x8xf32>
    %452 = tpu.matmul %440, %451, %cst_305 {dimension_numbers = #tpu.dot_dimension_numbers<[1], [0], [0], [1], [0, 0, 1, 1], [], []>} : vector<32x16xbf16>, vector<16x8xbf16>, vector<32x8xf32> -> vector<32x8xf32>
    %453 = arith.truncf %452 : vector<32x8xf32> to vector<32x8xbf16>
    %c12 = arith.constant 12 : index
    %c0_306 = arith.constant 0 : index
    %c0_307 = arith.constant 0 : index
    %c0_308 = arith.constant 0 : index
    %454 = vector.load %arg2[%c12, %c0_306, %c0_307, %c0_308] : memref<23x3x32x32xbf16, #tpu.memory_space<vmem>>, vector<1x1x32x32xbf16>
    %455 = vector.shape_cast %454 : vector<1x1x32x32xbf16> to vector<32x32xbf16>
    %cst_309 = arith.constant dense<0.000000e+00> : vector<32x8xf32>
    %456 = tpu.matmul %455, %453, %cst_309 {dimension_numbers = #tpu.dot_dimension_numbers<[1], [0], [0], [1], [0, 0, 1, 1], [], []>} : vector<32x32xbf16>, vector<32x8xbf16>, vector<32x8xf32> -> vector<32x8xf32>
    %457 = tpu.iota {dimensions = array<i32: 0>} : vector<16x8xi32>
    %458 = tpu.iota {dimensions = array<i32: 1>} : vector<16x8xi32>
    %c2_i32_310 = arith.constant 2 : i32
    %459 = vector.broadcast %c2_i32_310 : i32 to vector<16x8xi32>
    %460 = arith.muli %459, %458 : vector<16x8xi32>
    %c0_i32_311 = arith.constant 0 : i32
    %461 = vector.broadcast %c0_i32_311 : i32 to vector<16x8xi32>
    %462 = arith.addi %460, %461 : vector<16x8xi32>
    %463 = arith.cmpi eq, %457, %462 : vector<16x8xi32>
    %cst_312 = arith.constant 1.000000e+00 : f32
    %cst_313 = arith.constant 0.000000e+00 : f32
    %464 = vector.broadcast %cst_312 : f32 to vector<16x8xf32>
    %465 = vector.broadcast %cst_313 : f32 to vector<16x8xf32>
    %466 = arith.select %463, %464, %465 : vector<16x8xi1>, vector<16x8xf32>
    %467 = arith.truncf %466 : vector<16x8xf32> to vector<16x8xbf16>
    %cst_314 = arith.constant dense<0.000000e+00> : vector<32x8xf32>
    %468 = tpu.matmul %440, %467, %cst_314 {dimension_numbers = #tpu.dot_dimension_numbers<[1], [0], [0], [1], [0, 0, 1, 1], [], []>} : vector<32x16xbf16>, vector<16x8xbf16>, vector<32x8xf32> -> vector<32x8xf32>
    %469 = arith.truncf %468 : vector<32x8xf32> to vector<32x8xbf16>
    %c12_315 = arith.constant 12 : index
    %c1_316 = arith.constant 1 : index
    %c0_317 = arith.constant 0 : index
    %c0_318 = arith.constant 0 : index
    %470 = vector.load %arg2[%c12_315, %c1_316, %c0_317, %c0_318] : memref<23x3x32x32xbf16, #tpu.memory_space<vmem>>, vector<1x1x32x32xbf16>
    %471 = vector.shape_cast %470 : vector<1x1x32x32xbf16> to vector<32x32xbf16>
    %cst_319 = arith.constant dense<0.000000e+00> : vector<32x8xf32>
    %472 = tpu.matmul %471, %469, %cst_319 {dimension_numbers = #tpu.dot_dimension_numbers<[1], [0], [0], [1], [0, 0, 1, 1], [], []>} : vector<32x32xbf16>, vector<32x8xbf16>, vector<32x8xf32> -> vector<32x8xf32>
    %473 = arith.addf %456, %472 : vector<32x8xf32>
    %474 = tpu.iota {dimensions = array<i32: 0>} : vector<16x8xi32>
    %475 = tpu.iota {dimensions = array<i32: 1>} : vector<16x8xi32>
    %c2_i32_320 = arith.constant 2 : i32
    %476 = vector.broadcast %c2_i32_320 : i32 to vector<16x8xi32>
    %477 = arith.muli %476, %475 : vector<16x8xi32>
    %c1_i32_321 = arith.constant 1 : i32
    %478 = vector.broadcast %c1_i32_321 : i32 to vector<16x8xi32>
    %479 = arith.addi %477, %478 : vector<16x8xi32>
    %480 = arith.cmpi eq, %474, %479 : vector<16x8xi32>
    %cst_322 = arith.constant 1.000000e+00 : f32
    %cst_323 = arith.constant 0.000000e+00 : f32
    %481 = vector.broadcast %cst_322 : f32 to vector<16x8xf32>
    %482 = vector.broadcast %cst_323 : f32 to vector<16x8xf32>
    %483 = arith.select %480, %481, %482 : vector<16x8xi1>, vector<16x8xf32>
    %484 = arith.truncf %483 : vector<16x8xf32> to vector<16x8xbf16>
    %cst_324 = arith.constant dense<0.000000e+00> : vector<32x8xf32>
    %485 = tpu.matmul %440, %484, %cst_324 {dimension_numbers = #tpu.dot_dimension_numbers<[1], [0], [0], [1], [0, 0, 1, 1], [], []>} : vector<32x16xbf16>, vector<16x8xbf16>, vector<32x8xf32> -> vector<32x8xf32>
    %486 = arith.truncf %485 : vector<32x8xf32> to vector<32x8xbf16>
    %c12_325 = arith.constant 12 : index
    %c2_326 = arith.constant 2 : index
    %c0_327 = arith.constant 0 : index
    %c0_328 = arith.constant 0 : index
    %487 = vector.load %arg2[%c12_325, %c2_326, %c0_327, %c0_328] : memref<23x3x32x32xbf16, #tpu.memory_space<vmem>>, vector<1x1x32x32xbf16>
    %488 = vector.shape_cast %487 : vector<1x1x32x32xbf16> to vector<32x32xbf16>
    %cst_329 = arith.constant dense<0.000000e+00> : vector<32x8xf32>
    %489 = tpu.matmul %488, %486, %cst_329 {dimension_numbers = #tpu.dot_dimension_numbers<[1], [0], [0], [1], [0, 0, 1, 1], [], []>} : vector<32x32xbf16>, vector<32x8xbf16>, vector<32x8xf32> -> vector<32x8xf32>
    %490 = arith.addf %473, %489 : vector<32x8xf32>
    %c12_330 = arith.constant 12 : index
    %c0_331 = arith.constant 0 : index
    %c0_332 = arith.constant 0 : index
    %491 = vector.load %arg3[%c12_330, %c0_331, %c0_332] : memref<23x32x1xf32, #tpu.memory_space<vmem>>, vector<1x32x1xf32>
    %492 = vector.shape_cast %491 : vector<1x32x1xf32> to vector<32x1xf32>
    %493 = vector.broadcast %492 : vector<32x1xf32> to vector<32x8xf32>
    %494 = arith.addf %490, %493 : vector<32x8xf32>
    %cst_333 = arith.constant 0.000000e+00 : f32
    %495 = vector.broadcast %cst_333 : f32 to vector<32x8xf32>
    %496 = arith.maximumf %494, %495 : vector<32x8xf32>
    %497 = arith.truncf %496 : vector<32x8xf32> to vector<32x8xbf16>
    %498 = tpu.iota {dimensions = array<i32: 0>} : vector<8x8xi32>
    %499 = tpu.iota {dimensions = array<i32: 1>} : vector<8x8xi32>
    %c1_i32_334 = arith.constant 1 : i32
    %500 = vector.broadcast %c1_i32_334 : i32 to vector<8x8xi32>
    %501 = arith.muli %500, %499 : vector<8x8xi32>
    %c-1_i32_335 = arith.constant -1 : i32
    %502 = vector.broadcast %c-1_i32_335 : i32 to vector<8x8xi32>
    %503 = arith.addi %501, %502 : vector<8x8xi32>
    %504 = arith.cmpi eq, %498, %503 : vector<8x8xi32>
    %cst_336 = arith.constant 1.000000e+00 : f32
    %cst_337 = arith.constant 0.000000e+00 : f32
    %505 = vector.broadcast %cst_336 : f32 to vector<8x8xf32>
    %506 = vector.broadcast %cst_337 : f32 to vector<8x8xf32>
    %507 = arith.select %504, %505, %506 : vector<8x8xi1>, vector<8x8xf32>
    %508 = arith.truncf %507 : vector<8x8xf32> to vector<8x8xbf16>
    %cst_338 = arith.constant dense<0.000000e+00> : vector<32x8xf32>
    %509 = tpu.matmul %497, %508, %cst_338 {dimension_numbers = #tpu.dot_dimension_numbers<[1], [0], [0], [1], [0, 0, 1, 1], [], []>} : vector<32x8xbf16>, vector<8x8xbf16>, vector<32x8xf32> -> vector<32x8xf32>
    %510 = arith.truncf %509 : vector<32x8xf32> to vector<32x8xbf16>
    %c13 = arith.constant 13 : index
    %c0_339 = arith.constant 0 : index
    %c0_340 = arith.constant 0 : index
    %c0_341 = arith.constant 0 : index
    %511 = vector.load %arg2[%c13, %c0_339, %c0_340, %c0_341] : memref<23x3x32x32xbf16, #tpu.memory_space<vmem>>, vector<1x1x32x32xbf16>
    %512 = vector.shape_cast %511 : vector<1x1x32x32xbf16> to vector<32x32xbf16>
    %cst_342 = arith.constant dense<0.000000e+00> : vector<32x8xf32>
    %513 = tpu.matmul %512, %510, %cst_342 {dimension_numbers = #tpu.dot_dimension_numbers<[1], [0], [0], [1], [0, 0, 1, 1], [], []>} : vector<32x32xbf16>, vector<32x8xbf16>, vector<32x8xf32> -> vector<32x8xf32>
    %c13_343 = arith.constant 13 : index
    %c1_344 = arith.constant 1 : index
    %c0_345 = arith.constant 0 : index
    %c0_346 = arith.constant 0 : index
    %514 = vector.load %arg2[%c13_343, %c1_344, %c0_345, %c0_346] : memref<23x3x32x32xbf16, #tpu.memory_space<vmem>>, vector<1x1x32x32xbf16>
    %515 = vector.shape_cast %514 : vector<1x1x32x32xbf16> to vector<32x32xbf16>
    %cst_347 = arith.constant dense<0.000000e+00> : vector<32x8xf32>
    %516 = tpu.matmul %515, %497, %cst_347 {dimension_numbers = #tpu.dot_dimension_numbers<[1], [0], [0], [1], [0, 0, 1, 1], [], []>} : vector<32x32xbf16>, vector<32x8xbf16>, vector<32x8xf32> -> vector<32x8xf32>
    %517 = arith.addf %513, %516 : vector<32x8xf32>
    %518 = tpu.iota {dimensions = array<i32: 0>} : vector<8x8xi32>
    %519 = tpu.iota {dimensions = array<i32: 1>} : vector<8x8xi32>
    %c1_i32_348 = arith.constant 1 : i32
    %520 = vector.broadcast %c1_i32_348 : i32 to vector<8x8xi32>
    %521 = arith.muli %520, %519 : vector<8x8xi32>
    %c1_i32_349 = arith.constant 1 : i32
    %522 = vector.broadcast %c1_i32_349 : i32 to vector<8x8xi32>
    %523 = arith.addi %521, %522 : vector<8x8xi32>
    %524 = arith.cmpi eq, %518, %523 : vector<8x8xi32>
    %cst_350 = arith.constant 1.000000e+00 : f32
    %cst_351 = arith.constant 0.000000e+00 : f32
    %525 = vector.broadcast %cst_350 : f32 to vector<8x8xf32>
    %526 = vector.broadcast %cst_351 : f32 to vector<8x8xf32>
    %527 = arith.select %524, %525, %526 : vector<8x8xi1>, vector<8x8xf32>
    %528 = arith.truncf %527 : vector<8x8xf32> to vector<8x8xbf16>
    %cst_352 = arith.constant dense<0.000000e+00> : vector<32x8xf32>
    %529 = tpu.matmul %497, %528, %cst_352 {dimension_numbers = #tpu.dot_dimension_numbers<[1], [0], [0], [1], [0, 0, 1, 1], [], []>} : vector<32x8xbf16>, vector<8x8xbf16>, vector<32x8xf32> -> vector<32x8xf32>
    %530 = arith.truncf %529 : vector<32x8xf32> to vector<32x8xbf16>
    %c13_353 = arith.constant 13 : index
    %c2_354 = arith.constant 2 : index
    %c0_355 = arith.constant 0 : index
    %c0_356 = arith.constant 0 : index
    %531 = vector.load %arg2[%c13_353, %c2_354, %c0_355, %c0_356] : memref<23x3x32x32xbf16, #tpu.memory_space<vmem>>, vector<1x1x32x32xbf16>
    %532 = vector.shape_cast %531 : vector<1x1x32x32xbf16> to vector<32x32xbf16>
    %cst_357 = arith.constant dense<0.000000e+00> : vector<32x8xf32>
    %533 = tpu.matmul %532, %530, %cst_357 {dimension_numbers = #tpu.dot_dimension_numbers<[1], [0], [0], [1], [0, 0, 1, 1], [], []>} : vector<32x32xbf16>, vector<32x8xbf16>, vector<32x8xf32> -> vector<32x8xf32>
    %534 = arith.addf %517, %533 : vector<32x8xf32>
    %c13_358 = arith.constant 13 : index
    %c0_359 = arith.constant 0 : index
    %c0_360 = arith.constant 0 : index
    %535 = vector.load %arg3[%c13_358, %c0_359, %c0_360] : memref<23x32x1xf32, #tpu.memory_space<vmem>>, vector<1x32x1xf32>
    %536 = vector.shape_cast %535 : vector<1x32x1xf32> to vector<32x1xf32>
    %537 = vector.broadcast %536 : vector<32x1xf32> to vector<32x8xf32>
    %538 = arith.addf %534, %537 : vector<32x8xf32>
    %cst_361 = arith.constant 0.000000e+00 : f32
    %539 = vector.broadcast %cst_361 : f32 to vector<32x8xf32>
    %540 = arith.maximumf %538, %539 : vector<32x8xf32>
    %541 = arith.truncf %540 : vector<32x8xf32> to vector<32x8xbf16>
    %cst_362 = arith.constant dense<0.000000e+00> : vector<32x8xf32>
    %542 = tpu.matmul %541, %508, %cst_362 {dimension_numbers = #tpu.dot_dimension_numbers<[1], [0], [0], [1], [0, 0, 1, 1], [], []>} : vector<32x8xbf16>, vector<8x8xbf16>, vector<32x8xf32> -> vector<32x8xf32>
    %543 = arith.truncf %542 : vector<32x8xf32> to vector<32x8xbf16>
    %c14 = arith.constant 14 : index
    %c0_363 = arith.constant 0 : index
    %c0_364 = arith.constant 0 : index
    %c0_365 = arith.constant 0 : index
    %544 = vector.load %arg2[%c14, %c0_363, %c0_364, %c0_365] : memref<23x3x32x32xbf16, #tpu.memory_space<vmem>>, vector<1x1x32x32xbf16>
    %545 = vector.shape_cast %544 : vector<1x1x32x32xbf16> to vector<32x32xbf16>
    %cst_366 = arith.constant dense<0.000000e+00> : vector<32x8xf32>
    %546 = tpu.matmul %545, %543, %cst_366 {dimension_numbers = #tpu.dot_dimension_numbers<[1], [0], [0], [1], [0, 0, 1, 1], [], []>} : vector<32x32xbf16>, vector<32x8xbf16>, vector<32x8xf32> -> vector<32x8xf32>
    %c14_367 = arith.constant 14 : index
    %c1_368 = arith.constant 1 : index
    %c0_369 = arith.constant 0 : index
    %c0_370 = arith.constant 0 : index
    %547 = vector.load %arg2[%c14_367, %c1_368, %c0_369, %c0_370] : memref<23x3x32x32xbf16, #tpu.memory_space<vmem>>, vector<1x1x32x32xbf16>
    %548 = vector.shape_cast %547 : vector<1x1x32x32xbf16> to vector<32x32xbf16>
    %cst_371 = arith.constant dense<0.000000e+00> : vector<32x8xf32>
    %549 = tpu.matmul %548, %541, %cst_371 {dimension_numbers = #tpu.dot_dimension_numbers<[1], [0], [0], [1], [0, 0, 1, 1], [], []>} : vector<32x32xbf16>, vector<32x8xbf16>, vector<32x8xf32> -> vector<32x8xf32>
    %550 = arith.addf %546, %549 : vector<32x8xf32>
    %cst_372 = arith.constant dense<0.000000e+00> : vector<32x8xf32>
    %551 = tpu.matmul %541, %528, %cst_372 {dimension_numbers = #tpu.dot_dimension_numbers<[1], [0], [0], [1], [0, 0, 1, 1], [], []>} : vector<32x8xbf16>, vector<8x8xbf16>, vector<32x8xf32> -> vector<32x8xf32>
    %552 = arith.truncf %551 : vector<32x8xf32> to vector<32x8xbf16>
    %c14_373 = arith.constant 14 : index
    %c2_374 = arith.constant 2 : index
    %c0_375 = arith.constant 0 : index
    %c0_376 = arith.constant 0 : index
    %553 = vector.load %arg2[%c14_373, %c2_374, %c0_375, %c0_376] : memref<23x3x32x32xbf16, #tpu.memory_space<vmem>>, vector<1x1x32x32xbf16>
    %554 = vector.shape_cast %553 : vector<1x1x32x32xbf16> to vector<32x32xbf16>
    %cst_377 = arith.constant dense<0.000000e+00> : vector<32x8xf32>
    %555 = tpu.matmul %554, %552, %cst_377 {dimension_numbers = #tpu.dot_dimension_numbers<[1], [0], [0], [1], [0, 0, 1, 1], [], []>} : vector<32x32xbf16>, vector<32x8xbf16>, vector<32x8xf32> -> vector<32x8xf32>
    %556 = arith.addf %550, %555 : vector<32x8xf32>
    %c14_378 = arith.constant 14 : index
    %c0_379 = arith.constant 0 : index
    %c0_380 = arith.constant 0 : index
    %557 = vector.load %arg3[%c14_378, %c0_379, %c0_380] : memref<23x32x1xf32, #tpu.memory_space<vmem>>, vector<1x32x1xf32>
    %558 = vector.shape_cast %557 : vector<1x32x1xf32> to vector<32x1xf32>
    %559 = vector.broadcast %558 : vector<32x1xf32> to vector<32x8xf32>
    %560 = arith.addf %556, %559 : vector<32x8xf32>
    %cst_381 = arith.constant 0.000000e+00 : f32
    %561 = vector.broadcast %cst_381 : f32 to vector<32x8xf32>
    %562 = arith.maximumf %560, %561 : vector<32x8xf32>
    %563 = arith.truncf %439 : vector<32x16xf32> to vector<32x16xbf16>
    %cst_382 = arith.constant dense<0.000000e+00> : vector<32x8xf32>
    %564 = tpu.matmul %563, %451, %cst_382 {dimension_numbers = #tpu.dot_dimension_numbers<[1], [0], [0], [1], [0, 0, 1, 1], [], []>} : vector<32x16xbf16>, vector<16x8xbf16>, vector<32x8xf32> -> vector<32x8xf32>
    %565 = arith.truncf %564 : vector<32x8xf32> to vector<32x8xbf16>
    %c15 = arith.constant 15 : index
    %c0_383 = arith.constant 0 : index
    %c0_384 = arith.constant 0 : index
    %c0_385 = arith.constant 0 : index
    %566 = vector.load %arg2[%c15, %c0_383, %c0_384, %c0_385] : memref<23x3x32x32xbf16, #tpu.memory_space<vmem>>, vector<1x1x32x32xbf16>
    %567 = vector.shape_cast %566 : vector<1x1x32x32xbf16> to vector<32x32xbf16>
    %cst_386 = arith.constant dense<0.000000e+00> : vector<32x8xf32>
    %568 = tpu.matmul %567, %565, %cst_386 {dimension_numbers = #tpu.dot_dimension_numbers<[1], [0], [0], [1], [0, 0, 1, 1], [], []>} : vector<32x32xbf16>, vector<32x8xbf16>, vector<32x8xf32> -> vector<32x8xf32>
    %cst_387 = arith.constant dense<0.000000e+00> : vector<32x8xf32>
    %569 = tpu.matmul %563, %467, %cst_387 {dimension_numbers = #tpu.dot_dimension_numbers<[1], [0], [0], [1], [0, 0, 1, 1], [], []>} : vector<32x16xbf16>, vector<16x8xbf16>, vector<32x8xf32> -> vector<32x8xf32>
    %570 = arith.truncf %569 : vector<32x8xf32> to vector<32x8xbf16>
    %c15_388 = arith.constant 15 : index
    %c1_389 = arith.constant 1 : index
    %c0_390 = arith.constant 0 : index
    %c0_391 = arith.constant 0 : index
    %571 = vector.load %arg2[%c15_388, %c1_389, %c0_390, %c0_391] : memref<23x3x32x32xbf16, #tpu.memory_space<vmem>>, vector<1x1x32x32xbf16>
    %572 = vector.shape_cast %571 : vector<1x1x32x32xbf16> to vector<32x32xbf16>
    %cst_392 = arith.constant dense<0.000000e+00> : vector<32x8xf32>
    %573 = tpu.matmul %572, %570, %cst_392 {dimension_numbers = #tpu.dot_dimension_numbers<[1], [0], [0], [1], [0, 0, 1, 1], [], []>} : vector<32x32xbf16>, vector<32x8xbf16>, vector<32x8xf32> -> vector<32x8xf32>
    %574 = arith.addf %568, %573 : vector<32x8xf32>
    %cst_393 = arith.constant dense<0.000000e+00> : vector<32x8xf32>
    %575 = tpu.matmul %563, %484, %cst_393 {dimension_numbers = #tpu.dot_dimension_numbers<[1], [0], [0], [1], [0, 0, 1, 1], [], []>} : vector<32x16xbf16>, vector<16x8xbf16>, vector<32x8xf32> -> vector<32x8xf32>
    %576 = arith.truncf %575 : vector<32x8xf32> to vector<32x8xbf16>
    %c15_394 = arith.constant 15 : index
    %c2_395 = arith.constant 2 : index
    %c0_396 = arith.constant 0 : index
    %c0_397 = arith.constant 0 : index
    %577 = vector.load %arg2[%c15_394, %c2_395, %c0_396, %c0_397] : memref<23x3x32x32xbf16, #tpu.memory_space<vmem>>, vector<1x1x32x32xbf16>
    %578 = vector.shape_cast %577 : vector<1x1x32x32xbf16> to vector<32x32xbf16>
    %cst_398 = arith.constant dense<0.000000e+00> : vector<32x8xf32>
    %579 = tpu.matmul %578, %576, %cst_398 {dimension_numbers = #tpu.dot_dimension_numbers<[1], [0], [0], [1], [0, 0, 1, 1], [], []>} : vector<32x32xbf16>, vector<32x8xbf16>, vector<32x8xf32> -> vector<32x8xf32>
    %580 = arith.addf %574, %579 : vector<32x8xf32>
    %c15_399 = arith.constant 15 : index
    %c0_400 = arith.constant 0 : index
    %c0_401 = arith.constant 0 : index
    %581 = vector.load %arg3[%c15_399, %c0_400, %c0_401] : memref<23x32x1xf32, #tpu.memory_space<vmem>>, vector<1x32x1xf32>
    %582 = vector.shape_cast %581 : vector<1x32x1xf32> to vector<32x1xf32>
    %583 = vector.broadcast %582 : vector<32x1xf32> to vector<32x8xf32>
    %584 = arith.addf %580, %583 : vector<32x8xf32>
    %585 = arith.addf %562, %584 : vector<32x8xf32>
    %586 = arith.truncf %585 : vector<32x8xf32> to vector<32x8xbf16>
    %587 = tpu.iota {dimensions = array<i32: 0>} : vector<8x4xi32>
    %588 = tpu.iota {dimensions = array<i32: 1>} : vector<8x4xi32>
    %c2_i32_402 = arith.constant 2 : i32
    %589 = vector.broadcast %c2_i32_402 : i32 to vector<8x4xi32>
    %590 = arith.muli %589, %588 : vector<8x4xi32>
    %c-1_i32_403 = arith.constant -1 : i32
    %591 = vector.broadcast %c-1_i32_403 : i32 to vector<8x4xi32>
    %592 = arith.addi %590, %591 : vector<8x4xi32>
    %593 = arith.cmpi eq, %587, %592 : vector<8x4xi32>
    %cst_404 = arith.constant 1.000000e+00 : f32
    %cst_405 = arith.constant 0.000000e+00 : f32
    %594 = vector.broadcast %cst_404 : f32 to vector<8x4xf32>
    %595 = vector.broadcast %cst_405 : f32 to vector<8x4xf32>
    %596 = arith.select %593, %594, %595 : vector<8x4xi1>, vector<8x4xf32>
    %597 = arith.truncf %596 : vector<8x4xf32> to vector<8x4xbf16>
    %cst_406 = arith.constant dense<0.000000e+00> : vector<32x4xf32>
    %598 = tpu.matmul %586, %597, %cst_406 {dimension_numbers = #tpu.dot_dimension_numbers<[1], [0], [0], [1], [0, 0, 1, 1], [], []>} : vector<32x8xbf16>, vector<8x4xbf16>, vector<32x4xf32> -> vector<32x4xf32>
    %599 = arith.truncf %598 : vector<32x4xf32> to vector<32x4xbf16>
    %c16 = arith.constant 16 : index
    %c0_407 = arith.constant 0 : index
    %c0_408 = arith.constant 0 : index
    %c0_409 = arith.constant 0 : index
    %600 = vector.load %arg2[%c16, %c0_407, %c0_408, %c0_409] : memref<23x3x32x32xbf16, #tpu.memory_space<vmem>>, vector<1x1x32x32xbf16>
    %601 = vector.shape_cast %600 : vector<1x1x32x32xbf16> to vector<32x32xbf16>
    %cst_410 = arith.constant dense<0.000000e+00> : vector<32x4xf32>
    %602 = tpu.matmul %601, %599, %cst_410 {dimension_numbers = #tpu.dot_dimension_numbers<[1], [0], [0], [1], [0, 0, 1, 1], [], []>} : vector<32x32xbf16>, vector<32x4xbf16>, vector<32x4xf32> -> vector<32x4xf32>
    %603 = tpu.iota {dimensions = array<i32: 0>} : vector<8x4xi32>
    %604 = tpu.iota {dimensions = array<i32: 1>} : vector<8x4xi32>
    %c2_i32_411 = arith.constant 2 : i32
    %605 = vector.broadcast %c2_i32_411 : i32 to vector<8x4xi32>
    %606 = arith.muli %605, %604 : vector<8x4xi32>
    %c0_i32_412 = arith.constant 0 : i32
    %607 = vector.broadcast %c0_i32_412 : i32 to vector<8x4xi32>
    %608 = arith.addi %606, %607 : vector<8x4xi32>
    %609 = arith.cmpi eq, %603, %608 : vector<8x4xi32>
    %cst_413 = arith.constant 1.000000e+00 : f32
    %cst_414 = arith.constant 0.000000e+00 : f32
    %610 = vector.broadcast %cst_413 : f32 to vector<8x4xf32>
    %611 = vector.broadcast %cst_414 : f32 to vector<8x4xf32>
    %612 = arith.select %609, %610, %611 : vector<8x4xi1>, vector<8x4xf32>
    %613 = arith.truncf %612 : vector<8x4xf32> to vector<8x4xbf16>
    %cst_415 = arith.constant dense<0.000000e+00> : vector<32x4xf32>
    %614 = tpu.matmul %586, %613, %cst_415 {dimension_numbers = #tpu.dot_dimension_numbers<[1], [0], [0], [1], [0, 0, 1, 1], [], []>} : vector<32x8xbf16>, vector<8x4xbf16>, vector<32x4xf32> -> vector<32x4xf32>
    %615 = arith.truncf %614 : vector<32x4xf32> to vector<32x4xbf16>
    %c16_416 = arith.constant 16 : index
    %c1_417 = arith.constant 1 : index
    %c0_418 = arith.constant 0 : index
    %c0_419 = arith.constant 0 : index
    %616 = vector.load %arg2[%c16_416, %c1_417, %c0_418, %c0_419] : memref<23x3x32x32xbf16, #tpu.memory_space<vmem>>, vector<1x1x32x32xbf16>
    %617 = vector.shape_cast %616 : vector<1x1x32x32xbf16> to vector<32x32xbf16>
    %cst_420 = arith.constant dense<0.000000e+00> : vector<32x4xf32>
    %618 = tpu.matmul %617, %615, %cst_420 {dimension_numbers = #tpu.dot_dimension_numbers<[1], [0], [0], [1], [0, 0, 1, 1], [], []>} : vector<32x32xbf16>, vector<32x4xbf16>, vector<32x4xf32> -> vector<32x4xf32>
    %619 = arith.addf %602, %618 : vector<32x4xf32>
    %620 = tpu.iota {dimensions = array<i32: 0>} : vector<8x4xi32>
    %621 = tpu.iota {dimensions = array<i32: 1>} : vector<8x4xi32>
    %c2_i32_421 = arith.constant 2 : i32
    %622 = vector.broadcast %c2_i32_421 : i32 to vector<8x4xi32>
    %623 = arith.muli %622, %621 : vector<8x4xi32>
    %c1_i32_422 = arith.constant 1 : i32
    %624 = vector.broadcast %c1_i32_422 : i32 to vector<8x4xi32>
    %625 = arith.addi %623, %624 : vector<8x4xi32>
    %626 = arith.cmpi eq, %620, %625 : vector<8x4xi32>
    %cst_423 = arith.constant 1.000000e+00 : f32
    %cst_424 = arith.constant 0.000000e+00 : f32
    %627 = vector.broadcast %cst_423 : f32 to vector<8x4xf32>
    %628 = vector.broadcast %cst_424 : f32 to vector<8x4xf32>
    %629 = arith.select %626, %627, %628 : vector<8x4xi1>, vector<8x4xf32>
    %630 = arith.truncf %629 : vector<8x4xf32> to vector<8x4xbf16>
    %cst_425 = arith.constant dense<0.000000e+00> : vector<32x4xf32>
    %631 = tpu.matmul %586, %630, %cst_425 {dimension_numbers = #tpu.dot_dimension_numbers<[1], [0], [0], [1], [0, 0, 1, 1], [], []>} : vector<32x8xbf16>, vector<8x4xbf16>, vector<32x4xf32> -> vector<32x4xf32>
    %632 = arith.truncf %631 : vector<32x4xf32> to vector<32x4xbf16>
    %c16_426 = arith.constant 16 : index
    %c2_427 = arith.constant 2 : index
    %c0_428 = arith.constant 0 : index
    %c0_429 = arith.constant 0 : index
    %633 = vector.load %arg2[%c16_426, %c2_427, %c0_428, %c0_429] : memref<23x3x32x32xbf16, #tpu.memory_space<vmem>>, vector<1x1x32x32xbf16>
    %634 = vector.shape_cast %633 : vector<1x1x32x32xbf16> to vector<32x32xbf16>
    %cst_430 = arith.constant dense<0.000000e+00> : vector<32x4xf32>
    %635 = tpu.matmul %634, %632, %cst_430 {dimension_numbers = #tpu.dot_dimension_numbers<[1], [0], [0], [1], [0, 0, 1, 1], [], []>} : vector<32x32xbf16>, vector<32x4xbf16>, vector<32x4xf32> -> vector<32x4xf32>
    %636 = arith.addf %619, %635 : vector<32x4xf32>
    %c16_431 = arith.constant 16 : index
    %c0_432 = arith.constant 0 : index
    %c0_433 = arith.constant 0 : index
    %637 = vector.load %arg3[%c16_431, %c0_432, %c0_433] : memref<23x32x1xf32, #tpu.memory_space<vmem>>, vector<1x32x1xf32>
    %638 = vector.shape_cast %637 : vector<1x32x1xf32> to vector<32x1xf32>
    %639 = vector.broadcast %638 : vector<32x1xf32> to vector<32x4xf32>
    %640 = arith.addf %636, %639 : vector<32x4xf32>
    %cst_434 = arith.constant 0.000000e+00 : f32
    %641 = vector.broadcast %cst_434 : f32 to vector<32x4xf32>
    %642 = arith.maximumf %640, %641 : vector<32x4xf32>
    %643 = arith.truncf %642 : vector<32x4xf32> to vector<32x4xbf16>
    %644 = tpu.iota {dimensions = array<i32: 0>} : vector<4x4xi32>
    %645 = tpu.iota {dimensions = array<i32: 1>} : vector<4x4xi32>
    %c1_i32_435 = arith.constant 1 : i32
    %646 = vector.broadcast %c1_i32_435 : i32 to vector<4x4xi32>
    %647 = arith.muli %646, %645 : vector<4x4xi32>
    %c-1_i32_436 = arith.constant -1 : i32
    %648 = vector.broadcast %c-1_i32_436 : i32 to vector<4x4xi32>
    %649 = arith.addi %647, %648 : vector<4x4xi32>
    %650 = arith.cmpi eq, %644, %649 : vector<4x4xi32>
    %cst_437 = arith.constant 1.000000e+00 : f32
    %cst_438 = arith.constant 0.000000e+00 : f32
    %651 = vector.broadcast %cst_437 : f32 to vector<4x4xf32>
    %652 = vector.broadcast %cst_438 : f32 to vector<4x4xf32>
    %653 = arith.select %650, %651, %652 : vector<4x4xi1>, vector<4x4xf32>
    %654 = arith.truncf %653 : vector<4x4xf32> to vector<4x4xbf16>
    %cst_439 = arith.constant dense<0.000000e+00> : vector<32x4xf32>
    %655 = tpu.matmul %643, %654, %cst_439 {dimension_numbers = #tpu.dot_dimension_numbers<[1], [0], [0], [1], [0, 0, 1, 1], [], []>} : vector<32x4xbf16>, vector<4x4xbf16>, vector<32x4xf32> -> vector<32x4xf32>
    %656 = arith.truncf %655 : vector<32x4xf32> to vector<32x4xbf16>
    %c17 = arith.constant 17 : index
    %c0_440 = arith.constant 0 : index
    %c0_441 = arith.constant 0 : index
    %c0_442 = arith.constant 0 : index
    %657 = vector.load %arg2[%c17, %c0_440, %c0_441, %c0_442] : memref<23x3x32x32xbf16, #tpu.memory_space<vmem>>, vector<1x1x32x32xbf16>
    %658 = vector.shape_cast %657 : vector<1x1x32x32xbf16> to vector<32x32xbf16>
    %cst_443 = arith.constant dense<0.000000e+00> : vector<32x4xf32>
    %659 = tpu.matmul %658, %656, %cst_443 {dimension_numbers = #tpu.dot_dimension_numbers<[1], [0], [0], [1], [0, 0, 1, 1], [], []>} : vector<32x32xbf16>, vector<32x4xbf16>, vector<32x4xf32> -> vector<32x4xf32>
    %c17_444 = arith.constant 17 : index
    %c1_445 = arith.constant 1 : index
    %c0_446 = arith.constant 0 : index
    %c0_447 = arith.constant 0 : index
    %660 = vector.load %arg2[%c17_444, %c1_445, %c0_446, %c0_447] : memref<23x3x32x32xbf16, #tpu.memory_space<vmem>>, vector<1x1x32x32xbf16>
    %661 = vector.shape_cast %660 : vector<1x1x32x32xbf16> to vector<32x32xbf16>
    %cst_448 = arith.constant dense<0.000000e+00> : vector<32x4xf32>
    %662 = tpu.matmul %661, %643, %cst_448 {dimension_numbers = #tpu.dot_dimension_numbers<[1], [0], [0], [1], [0, 0, 1, 1], [], []>} : vector<32x32xbf16>, vector<32x4xbf16>, vector<32x4xf32> -> vector<32x4xf32>
    %663 = arith.addf %659, %662 : vector<32x4xf32>
    %664 = tpu.iota {dimensions = array<i32: 0>} : vector<4x4xi32>
    %665 = tpu.iota {dimensions = array<i32: 1>} : vector<4x4xi32>
    %c1_i32_449 = arith.constant 1 : i32
    %666 = vector.broadcast %c1_i32_449 : i32 to vector<4x4xi32>
    %667 = arith.muli %666, %665 : vector<4x4xi32>
    %c1_i32_450 = arith.constant 1 : i32
    %668 = vector.broadcast %c1_i32_450 : i32 to vector<4x4xi32>
    %669 = arith.addi %667, %668 : vector<4x4xi32>
    %670 = arith.cmpi eq, %664, %669 : vector<4x4xi32>
    %cst_451 = arith.constant 1.000000e+00 : f32
    %cst_452 = arith.constant 0.000000e+00 : f32
    %671 = vector.broadcast %cst_451 : f32 to vector<4x4xf32>
    %672 = vector.broadcast %cst_452 : f32 to vector<4x4xf32>
    %673 = arith.select %670, %671, %672 : vector<4x4xi1>, vector<4x4xf32>
    %674 = arith.truncf %673 : vector<4x4xf32> to vector<4x4xbf16>
    %cst_453 = arith.constant dense<0.000000e+00> : vector<32x4xf32>
    %675 = tpu.matmul %643, %674, %cst_453 {dimension_numbers = #tpu.dot_dimension_numbers<[1], [0], [0], [1], [0, 0, 1, 1], [], []>} : vector<32x4xbf16>, vector<4x4xbf16>, vector<32x4xf32> -> vector<32x4xf32>
    %676 = arith.truncf %675 : vector<32x4xf32> to vector<32x4xbf16>
    %c17_454 = arith.constant 17 : index
    %c2_455 = arith.constant 2 : index
    %c0_456 = arith.constant 0 : index
    %c0_457 = arith.constant 0 : index
    %677 = vector.load %arg2[%c17_454, %c2_455, %c0_456, %c0_457] : memref<23x3x32x32xbf16, #tpu.memory_space<vmem>>, vector<1x1x32x32xbf16>
    %678 = vector.shape_cast %677 : vector<1x1x32x32xbf16> to vector<32x32xbf16>
    %cst_458 = arith.constant dense<0.000000e+00> : vector<32x4xf32>
    %679 = tpu.matmul %678, %676, %cst_458 {dimension_numbers = #tpu.dot_dimension_numbers<[1], [0], [0], [1], [0, 0, 1, 1], [], []>} : vector<32x32xbf16>, vector<32x4xbf16>, vector<32x4xf32> -> vector<32x4xf32>
    %680 = arith.addf %663, %679 : vector<32x4xf32>
    %c17_459 = arith.constant 17 : index
    %c0_460 = arith.constant 0 : index
    %c0_461 = arith.constant 0 : index
    %681 = vector.load %arg3[%c17_459, %c0_460, %c0_461] : memref<23x32x1xf32, #tpu.memory_space<vmem>>, vector<1x32x1xf32>
    %682 = vector.shape_cast %681 : vector<1x32x1xf32> to vector<32x1xf32>
    %683 = vector.broadcast %682 : vector<32x1xf32> to vector<32x4xf32>
    %684 = arith.addf %680, %683 : vector<32x4xf32>
    %cst_462 = arith.constant 0.000000e+00 : f32
    %685 = vector.broadcast %cst_462 : f32 to vector<32x4xf32>
    %686 = arith.maximumf %684, %685 : vector<32x4xf32>
    %687 = arith.truncf %686 : vector<32x4xf32> to vector<32x4xbf16>
    %cst_463 = arith.constant dense<0.000000e+00> : vector<32x4xf32>
    %688 = tpu.matmul %687, %654, %cst_463 {dimension_numbers = #tpu.dot_dimension_numbers<[1], [0], [0], [1], [0, 0, 1, 1], [], []>} : vector<32x4xbf16>, vector<4x4xbf16>, vector<32x4xf32> -> vector<32x4xf32>
    %689 = arith.truncf %688 : vector<32x4xf32> to vector<32x4xbf16>
    %c18 = arith.constant 18 : index
    %c0_464 = arith.constant 0 : index
    %c0_465 = arith.constant 0 : index
    %c0_466 = arith.constant 0 : index
    %690 = vector.load %arg2[%c18, %c0_464, %c0_465, %c0_466] : memref<23x3x32x32xbf16, #tpu.memory_space<vmem>>, vector<1x1x32x32xbf16>
    %691 = vector.shape_cast %690 : vector<1x1x32x32xbf16> to vector<32x32xbf16>
    %cst_467 = arith.constant dense<0.000000e+00> : vector<32x4xf32>
    %692 = tpu.matmul %691, %689, %cst_467 {dimension_numbers = #tpu.dot_dimension_numbers<[1], [0], [0], [1], [0, 0, 1, 1], [], []>} : vector<32x32xbf16>, vector<32x4xbf16>, vector<32x4xf32> -> vector<32x4xf32>
    %c18_468 = arith.constant 18 : index
    %c1_469 = arith.constant 1 : index
    %c0_470 = arith.constant 0 : index
    %c0_471 = arith.constant 0 : index
    %693 = vector.load %arg2[%c18_468, %c1_469, %c0_470, %c0_471] : memref<23x3x32x32xbf16, #tpu.memory_space<vmem>>, vector<1x1x32x32xbf16>
    %694 = vector.shape_cast %693 : vector<1x1x32x32xbf16> to vector<32x32xbf16>
    %cst_472 = arith.constant dense<0.000000e+00> : vector<32x4xf32>
    %695 = tpu.matmul %694, %687, %cst_472 {dimension_numbers = #tpu.dot_dimension_numbers<[1], [0], [0], [1], [0, 0, 1, 1], [], []>} : vector<32x32xbf16>, vector<32x4xbf16>, vector<32x4xf32> -> vector<32x4xf32>
    %696 = arith.addf %692, %695 : vector<32x4xf32>
    %cst_473 = arith.constant dense<0.000000e+00> : vector<32x4xf32>
    %697 = tpu.matmul %687, %674, %cst_473 {dimension_numbers = #tpu.dot_dimension_numbers<[1], [0], [0], [1], [0, 0, 1, 1], [], []>} : vector<32x4xbf16>, vector<4x4xbf16>, vector<32x4xf32> -> vector<32x4xf32>
    %698 = arith.truncf %697 : vector<32x4xf32> to vector<32x4xbf16>
    %c18_474 = arith.constant 18 : index
    %c2_475 = arith.constant 2 : index
    %c0_476 = arith.constant 0 : index
    %c0_477 = arith.constant 0 : index
    %699 = vector.load %arg2[%c18_474, %c2_475, %c0_476, %c0_477] : memref<23x3x32x32xbf16, #tpu.memory_space<vmem>>, vector<1x1x32x32xbf16>
    %700 = vector.shape_cast %699 : vector<1x1x32x32xbf16> to vector<32x32xbf16>
    %cst_478 = arith.constant dense<0.000000e+00> : vector<32x4xf32>
    %701 = tpu.matmul %700, %698, %cst_478 {dimension_numbers = #tpu.dot_dimension_numbers<[1], [0], [0], [1], [0, 0, 1, 1], [], []>} : vector<32x32xbf16>, vector<32x4xbf16>, vector<32x4xf32> -> vector<32x4xf32>
    %702 = arith.addf %696, %701 : vector<32x4xf32>
    %c18_479 = arith.constant 18 : index
    %c0_480 = arith.constant 0 : index
    %c0_481 = arith.constant 0 : index
    %703 = vector.load %arg3[%c18_479, %c0_480, %c0_481] : memref<23x32x1xf32, #tpu.memory_space<vmem>>, vector<1x32x1xf32>
    %704 = vector.shape_cast %703 : vector<1x32x1xf32> to vector<32x1xf32>
    %705 = vector.broadcast %704 : vector<32x1xf32> to vector<32x4xf32>
    %706 = arith.addf %702, %705 : vector<32x4xf32>
    %cst_482 = arith.constant 0.000000e+00 : f32
    %707 = vector.broadcast %cst_482 : f32 to vector<32x4xf32>
    %708 = arith.maximumf %706, %707 : vector<32x4xf32>
    %709 = arith.truncf %585 : vector<32x8xf32> to vector<32x8xbf16>
    %cst_483 = arith.constant dense<0.000000e+00> : vector<32x4xf32>
    %710 = tpu.matmul %709, %597, %cst_483 {dimension_numbers = #tpu.dot_dimension_numbers<[1], [0], [0], [1], [0, 0, 1, 1], [], []>} : vector<32x8xbf16>, vector<8x4xbf16>, vector<32x4xf32> -> vector<32x4xf32>
    %711 = arith.truncf %710 : vector<32x4xf32> to vector<32x4xbf16>
    %c19 = arith.constant 19 : index
    %c0_484 = arith.constant 0 : index
    %c0_485 = arith.constant 0 : index
    %c0_486 = arith.constant 0 : index
    %712 = vector.load %arg2[%c19, %c0_484, %c0_485, %c0_486] : memref<23x3x32x32xbf16, #tpu.memory_space<vmem>>, vector<1x1x32x32xbf16>
    %713 = vector.shape_cast %712 : vector<1x1x32x32xbf16> to vector<32x32xbf16>
    %cst_487 = arith.constant dense<0.000000e+00> : vector<32x4xf32>
    %714 = tpu.matmul %713, %711, %cst_487 {dimension_numbers = #tpu.dot_dimension_numbers<[1], [0], [0], [1], [0, 0, 1, 1], [], []>} : vector<32x32xbf16>, vector<32x4xbf16>, vector<32x4xf32> -> vector<32x4xf32>
    %cst_488 = arith.constant dense<0.000000e+00> : vector<32x4xf32>
    %715 = tpu.matmul %709, %613, %cst_488 {dimension_numbers = #tpu.dot_dimension_numbers<[1], [0], [0], [1], [0, 0, 1, 1], [], []>} : vector<32x8xbf16>, vector<8x4xbf16>, vector<32x4xf32> -> vector<32x4xf32>
    %716 = arith.truncf %715 : vector<32x4xf32> to vector<32x4xbf16>
    %c19_489 = arith.constant 19 : index
    %c1_490 = arith.constant 1 : index
    %c0_491 = arith.constant 0 : index
    %c0_492 = arith.constant 0 : index
    %717 = vector.load %arg2[%c19_489, %c1_490, %c0_491, %c0_492] : memref<23x3x32x32xbf16, #tpu.memory_space<vmem>>, vector<1x1x32x32xbf16>
    %718 = vector.shape_cast %717 : vector<1x1x32x32xbf16> to vector<32x32xbf16>
    %cst_493 = arith.constant dense<0.000000e+00> : vector<32x4xf32>
    %719 = tpu.matmul %718, %716, %cst_493 {dimension_numbers = #tpu.dot_dimension_numbers<[1], [0], [0], [1], [0, 0, 1, 1], [], []>} : vector<32x32xbf16>, vector<32x4xbf16>, vector<32x4xf32> -> vector<32x4xf32>
    %720 = arith.addf %714, %719 : vector<32x4xf32>
    %cst_494 = arith.constant dense<0.000000e+00> : vector<32x4xf32>
    %721 = tpu.matmul %709, %630, %cst_494 {dimension_numbers = #tpu.dot_dimension_numbers<[1], [0], [0], [1], [0, 0, 1, 1], [], []>} : vector<32x8xbf16>, vector<8x4xbf16>, vector<32x4xf32> -> vector<32x4xf32>
    %722 = arith.truncf %721 : vector<32x4xf32> to vector<32x4xbf16>
    %c19_495 = arith.constant 19 : index
    %c2_496 = arith.constant 2 : index
    %c0_497 = arith.constant 0 : index
    %c0_498 = arith.constant 0 : index
    %723 = vector.load %arg2[%c19_495, %c2_496, %c0_497, %c0_498] : memref<23x3x32x32xbf16, #tpu.memory_space<vmem>>, vector<1x1x32x32xbf16>
    %724 = vector.shape_cast %723 : vector<1x1x32x32xbf16> to vector<32x32xbf16>
    %cst_499 = arith.constant dense<0.000000e+00> : vector<32x4xf32>
    %725 = tpu.matmul %724, %722, %cst_499 {dimension_numbers = #tpu.dot_dimension_numbers<[1], [0], [0], [1], [0, 0, 1, 1], [], []>} : vector<32x32xbf16>, vector<32x4xbf16>, vector<32x4xf32> -> vector<32x4xf32>
    %726 = arith.addf %720, %725 : vector<32x4xf32>
    %c19_500 = arith.constant 19 : index
    %c0_501 = arith.constant 0 : index
    %c0_502 = arith.constant 0 : index
    %727 = vector.load %arg3[%c19_500, %c0_501, %c0_502] : memref<23x32x1xf32, #tpu.memory_space<vmem>>, vector<1x32x1xf32>
    %728 = vector.shape_cast %727 : vector<1x32x1xf32> to vector<32x1xf32>
    %729 = vector.broadcast %728 : vector<32x1xf32> to vector<32x4xf32>
    %730 = arith.addf %726, %729 : vector<32x4xf32>
    %731 = arith.addf %708, %730 : vector<32x4xf32>
    %732 = arith.truncf %731 : vector<32x4xf32> to vector<32x4xbf16>
    %cst_503 = arith.constant dense<0.000000e+00> : vector<32x4xf32>
    %733 = tpu.matmul %732, %654, %cst_503 {dimension_numbers = #tpu.dot_dimension_numbers<[1], [0], [0], [1], [0, 0, 1, 1], [], []>} : vector<32x4xbf16>, vector<4x4xbf16>, vector<32x4xf32> -> vector<32x4xf32>
    %734 = arith.truncf %733 : vector<32x4xf32> to vector<32x4xbf16>
    %c20 = arith.constant 20 : index
    %c0_504 = arith.constant 0 : index
    %c0_505 = arith.constant 0 : index
    %c0_506 = arith.constant 0 : index
    %735 = vector.load %arg2[%c20, %c0_504, %c0_505, %c0_506] : memref<23x3x32x32xbf16, #tpu.memory_space<vmem>>, vector<1x1x32x32xbf16>
    %736 = vector.shape_cast %735 : vector<1x1x32x32xbf16> to vector<32x32xbf16>
    %cst_507 = arith.constant dense<0.000000e+00> : vector<32x4xf32>
    %737 = tpu.matmul %736, %734, %cst_507 {dimension_numbers = #tpu.dot_dimension_numbers<[1], [0], [0], [1], [0, 0, 1, 1], [], []>} : vector<32x32xbf16>, vector<32x4xbf16>, vector<32x4xf32> -> vector<32x4xf32>
    %c20_508 = arith.constant 20 : index
    %c1_509 = arith.constant 1 : index
    %c0_510 = arith.constant 0 : index
    %c0_511 = arith.constant 0 : index
    %738 = vector.load %arg2[%c20_508, %c1_509, %c0_510, %c0_511] : memref<23x3x32x32xbf16, #tpu.memory_space<vmem>>, vector<1x1x32x32xbf16>
    %739 = vector.shape_cast %738 : vector<1x1x32x32xbf16> to vector<32x32xbf16>
    %cst_512 = arith.constant dense<0.000000e+00> : vector<32x4xf32>
    %740 = tpu.matmul %739, %732, %cst_512 {dimension_numbers = #tpu.dot_dimension_numbers<[1], [0], [0], [1], [0, 0, 1, 1], [], []>} : vector<32x32xbf16>, vector<32x4xbf16>, vector<32x4xf32> -> vector<32x4xf32>
    %741 = arith.addf %737, %740 : vector<32x4xf32>
    %cst_513 = arith.constant dense<0.000000e+00> : vector<32x4xf32>
    %742 = tpu.matmul %732, %674, %cst_513 {dimension_numbers = #tpu.dot_dimension_numbers<[1], [0], [0], [1], [0, 0, 1, 1], [], []>} : vector<32x4xbf16>, vector<4x4xbf16>, vector<32x4xf32> -> vector<32x4xf32>
    %743 = arith.truncf %742 : vector<32x4xf32> to vector<32x4xbf16>
    %c20_514 = arith.constant 20 : index
    %c2_515 = arith.constant 2 : index
    %c0_516 = arith.constant 0 : index
    %c0_517 = arith.constant 0 : index
    %744 = vector.load %arg2[%c20_514, %c2_515, %c0_516, %c0_517] : memref<23x3x32x32xbf16, #tpu.memory_space<vmem>>, vector<1x1x32x32xbf16>
    %745 = vector.shape_cast %744 : vector<1x1x32x32xbf16> to vector<32x32xbf16>
    %cst_518 = arith.constant dense<0.000000e+00> : vector<32x4xf32>
    %746 = tpu.matmul %745, %743, %cst_518 {dimension_numbers = #tpu.dot_dimension_numbers<[1], [0], [0], [1], [0, 0, 1, 1], [], []>} : vector<32x32xbf16>, vector<32x4xbf16>, vector<32x4xf32> -> vector<32x4xf32>
    %747 = arith.addf %741, %746 : vector<32x4xf32>
    %c20_519 = arith.constant 20 : index
    %c0_520 = arith.constant 0 : index
    %c0_521 = arith.constant 0 : index
    %748 = vector.load %arg3[%c20_519, %c0_520, %c0_521] : memref<23x32x1xf32, #tpu.memory_space<vmem>>, vector<1x32x1xf32>
    %749 = vector.shape_cast %748 : vector<1x32x1xf32> to vector<32x1xf32>
    %750 = vector.broadcast %749 : vector<32x1xf32> to vector<32x4xf32>
    %751 = arith.addf %747, %750 : vector<32x4xf32>
    %cst_522 = arith.constant 0.000000e+00 : f32
    %752 = vector.broadcast %cst_522 : f32 to vector<32x4xf32>
    %753 = arith.maximumf %751, %752 : vector<32x4xf32>
    %754 = arith.truncf %753 : vector<32x4xf32> to vector<32x4xbf16>
    %cst_523 = arith.constant dense<0.000000e+00> : vector<32x4xf32>
    %755 = tpu.matmul %754, %654, %cst_523 {dimension_numbers = #tpu.dot_dimension_numbers<[1], [0], [0], [1], [0, 0, 1, 1], [], []>} : vector<32x4xbf16>, vector<4x4xbf16>, vector<32x4xf32> -> vector<32x4xf32>
    %756 = arith.truncf %755 : vector<32x4xf32> to vector<32x4xbf16>
    %c21 = arith.constant 21 : index
    %c0_524 = arith.constant 0 : index
    %c0_525 = arith.constant 0 : index
    %c0_526 = arith.constant 0 : index
    %757 = vector.load %arg2[%c21, %c0_524, %c0_525, %c0_526] : memref<23x3x32x32xbf16, #tpu.memory_space<vmem>>, vector<1x1x32x32xbf16>
    %758 = vector.shape_cast %757 : vector<1x1x32x32xbf16> to vector<32x32xbf16>
    %cst_527 = arith.constant dense<0.000000e+00> : vector<32x4xf32>
    %759 = tpu.matmul %758, %756, %cst_527 {dimension_numbers = #tpu.dot_dimension_numbers<[1], [0], [0], [1], [0, 0, 1, 1], [], []>} : vector<32x32xbf16>, vector<32x4xbf16>, vector<32x4xf32> -> vector<32x4xf32>
    %c21_528 = arith.constant 21 : index
    %c1_529 = arith.constant 1 : index
    %c0_530 = arith.constant 0 : index
    %c0_531 = arith.constant 0 : index
    %760 = vector.load %arg2[%c21_528, %c1_529, %c0_530, %c0_531] : memref<23x3x32x32xbf16, #tpu.memory_space<vmem>>, vector<1x1x32x32xbf16>
    %761 = vector.shape_cast %760 : vector<1x1x32x32xbf16> to vector<32x32xbf16>
    %cst_532 = arith.constant dense<0.000000e+00> : vector<32x4xf32>
    %762 = tpu.matmul %761, %754, %cst_532 {dimension_numbers = #tpu.dot_dimension_numbers<[1], [0], [0], [1], [0, 0, 1, 1], [], []>} : vector<32x32xbf16>, vector<32x4xbf16>, vector<32x4xf32> -> vector<32x4xf32>
    %763 = arith.addf %759, %762 : vector<32x4xf32>
    %cst_533 = arith.constant dense<0.000000e+00> : vector<32x4xf32>
    %764 = tpu.matmul %754, %674, %cst_533 {dimension_numbers = #tpu.dot_dimension_numbers<[1], [0], [0], [1], [0, 0, 1, 1], [], []>} : vector<32x4xbf16>, vector<4x4xbf16>, vector<32x4xf32> -> vector<32x4xf32>
    %765 = arith.truncf %764 : vector<32x4xf32> to vector<32x4xbf16>
    %c21_534 = arith.constant 21 : index
    %c2_535 = arith.constant 2 : index
    %c0_536 = arith.constant 0 : index
    %c0_537 = arith.constant 0 : index
    %766 = vector.load %arg2[%c21_534, %c2_535, %c0_536, %c0_537] : memref<23x3x32x32xbf16, #tpu.memory_space<vmem>>, vector<1x1x32x32xbf16>
    %767 = vector.shape_cast %766 : vector<1x1x32x32xbf16> to vector<32x32xbf16>
    %cst_538 = arith.constant dense<0.000000e+00> : vector<32x4xf32>
    %768 = tpu.matmul %767, %765, %cst_538 {dimension_numbers = #tpu.dot_dimension_numbers<[1], [0], [0], [1], [0, 0, 1, 1], [], []>} : vector<32x32xbf16>, vector<32x4xbf16>, vector<32x4xf32> -> vector<32x4xf32>
    %769 = arith.addf %763, %768 : vector<32x4xf32>
    %c21_539 = arith.constant 21 : index
    %c0_540 = arith.constant 0 : index
    %c0_541 = arith.constant 0 : index
    %770 = vector.load %arg3[%c21_539, %c0_540, %c0_541] : memref<23x32x1xf32, #tpu.memory_space<vmem>>, vector<1x32x1xf32>
    %771 = vector.shape_cast %770 : vector<1x32x1xf32> to vector<32x1xf32>
    %772 = vector.broadcast %771 : vector<32x1xf32> to vector<32x4xf32>
    %773 = arith.addf %769, %772 : vector<32x4xf32>
    %cst_542 = arith.constant 0.000000e+00 : f32
    %774 = vector.broadcast %cst_542 : f32 to vector<32x4xf32>
    %775 = arith.maximumf %773, %774 : vector<32x4xf32>
    %776 = arith.truncf %775 : vector<32x4xf32> to vector<32x4xbf16>
    %cst_543 = arith.constant dense<0.000000e+00> : vector<32x4xf32>
    %777 = tpu.matmul %776, %654, %cst_543 {dimension_numbers = #tpu.dot_dimension_numbers<[1], [0], [0], [1], [0, 0, 1, 1], [], []>} : vector<32x4xbf16>, vector<4x4xbf16>, vector<32x4xf32> -> vector<32x4xf32>
    %778 = arith.truncf %777 : vector<32x4xf32> to vector<32x4xbf16>
    %c22 = arith.constant 22 : index
    %c0_544 = arith.constant 0 : index
    %c0_545 = arith.constant 0 : index
    %c0_546 = arith.constant 0 : index
    %779 = vector.load %arg2[%c22, %c0_544, %c0_545, %c0_546] : memref<23x3x32x32xbf16, #tpu.memory_space<vmem>>, vector<1x1x32x32xbf16>
    %780 = vector.shape_cast %779 : vector<1x1x32x32xbf16> to vector<32x32xbf16>
    %cst_547 = arith.constant dense<0.000000e+00> : vector<32x4xf32>
    %781 = tpu.matmul %780, %778, %cst_547 {dimension_numbers = #tpu.dot_dimension_numbers<[1], [0], [0], [1], [0, 0, 1, 1], [], []>} : vector<32x32xbf16>, vector<32x4xbf16>, vector<32x4xf32> -> vector<32x4xf32>
    %c22_548 = arith.constant 22 : index
    %c1_549 = arith.constant 1 : index
    %c0_550 = arith.constant 0 : index
    %c0_551 = arith.constant 0 : index
    %782 = vector.load %arg2[%c22_548, %c1_549, %c0_550, %c0_551] : memref<23x3x32x32xbf16, #tpu.memory_space<vmem>>, vector<1x1x32x32xbf16>
    %783 = vector.shape_cast %782 : vector<1x1x32x32xbf16> to vector<32x32xbf16>
    %cst_552 = arith.constant dense<0.000000e+00> : vector<32x4xf32>
    %784 = tpu.matmul %783, %776, %cst_552 {dimension_numbers = #tpu.dot_dimension_numbers<[1], [0], [0], [1], [0, 0, 1, 1], [], []>} : vector<32x32xbf16>, vector<32x4xbf16>, vector<32x4xf32> -> vector<32x4xf32>
    %785 = arith.addf %781, %784 : vector<32x4xf32>
    %cst_553 = arith.constant dense<0.000000e+00> : vector<32x4xf32>
    %786 = tpu.matmul %776, %674, %cst_553 {dimension_numbers = #tpu.dot_dimension_numbers<[1], [0], [0], [1], [0, 0, 1, 1], [], []>} : vector<32x4xbf16>, vector<4x4xbf16>, vector<32x4xf32> -> vector<32x4xf32>
    %787 = arith.truncf %786 : vector<32x4xf32> to vector<32x4xbf16>
    %c22_554 = arith.constant 22 : index
    %c2_555 = arith.constant 2 : index
    %c0_556 = arith.constant 0 : index
    %c0_557 = arith.constant 0 : index
    %788 = vector.load %arg2[%c22_554, %c2_555, %c0_556, %c0_557] : memref<23x3x32x32xbf16, #tpu.memory_space<vmem>>, vector<1x1x32x32xbf16>
    %789 = vector.shape_cast %788 : vector<1x1x32x32xbf16> to vector<32x32xbf16>
    %cst_558 = arith.constant dense<0.000000e+00> : vector<32x4xf32>
    %790 = tpu.matmul %789, %787, %cst_558 {dimension_numbers = #tpu.dot_dimension_numbers<[1], [0], [0], [1], [0, 0, 1, 1], [], []>} : vector<32x32xbf16>, vector<32x4xbf16>, vector<32x4xf32> -> vector<32x4xf32>
    %791 = arith.addf %785, %790 : vector<32x4xf32>
    %c22_559 = arith.constant 22 : index
    %c0_560 = arith.constant 0 : index
    %c0_561 = arith.constant 0 : index
    %792 = vector.load %arg3[%c22_559, %c0_560, %c0_561] : memref<23x32x1xf32, #tpu.memory_space<vmem>>, vector<1x32x1xf32>
    %793 = vector.shape_cast %792 : vector<1x32x1xf32> to vector<32x1xf32>
    %794 = vector.broadcast %793 : vector<32x1xf32> to vector<32x4xf32>
    %795 = arith.addf %791, %794 : vector<32x4xf32>
    %cst_562 = arith.constant 0.000000e+00 : f32
    %796 = vector.broadcast %cst_562 : f32 to vector<32x4xf32>
    %797 = arith.maximumf %795, %796 : vector<32x4xf32>
    %798 = arith.addf %797, %731 : vector<32x4xf32>
    %799 = vector.shape_cast %798 : vector<32x4xf32> to vector<1x32x4xf32>
    %c0_563 = arith.constant 0 : index
    %c0_564 = arith.constant 0 : index
    %c0_565 = arith.constant 0 : index
    %800 = vector.load %arg4[%c0_563, %c0_564, %c0_565] : memref<1x32x4xf32, #tpu.memory_space<vmem>>, vector<1x32x4xf32>
    tpu.vector_store %arg4[%c0_563, %c0_564, %c0_565], %799 {strides = array<i32>} : memref<1x32x4xf32, #tpu.memory_space<vmem>>, vector<1x32x4xf32>,
    return
  }
  func.func @transform_0(%arg0: i32) -> (i32, i32, i32) {
    %c0_i32 = arith.constant 0 : i32
    %c0_i32_0 = arith.constant 0 : i32
    %c0_i32_1 = arith.constant 0 : i32
    return %arg0, %c0_i32, %c0_i32_0 : i32, i32, i32
  }
  func.func @transform_1(%arg0: i32) -> (i32, i32, i32, i32) {
    %c0_i32 = arith.constant 0 : i32
    %c0_i32_0 = arith.constant 0 : i32
    %c0_i32_1 = arith.constant 0 : i32
    %c0_i32_2 = arith.constant 0 : i32
    %c0_i32_3 = arith.constant 0 : i32
    return %c0_i32, %c0_i32_0, %c0_i32_1, %c0_i32_2 : i32, i32, i32, i32
  }
  func.func @transform_2(%arg0: i32) -> (i32, i32, i32) {
    %c0_i32 = arith.constant 0 : i32
    %c0_i32_0 = arith.constant 0 : i32
    %c0_i32_1 = arith.constant 0 : i32
    %c0_i32_2 = arith.constant 0 : i32
    return %c0_i32, %c0_i32_0, %c0_i32_1 : i32, i32, i32
  }
  func.func @transform_3(%arg0: i32) -> (i32, i32, i32) {
    %c0_i32 = arith.constant 0 : i32
    %c0_i32_0 = arith.constant 0 : i32
    %c0_i32_1 = arith.constant 0 : i32
    return %arg0, %c0_i32, %c0_i32_0 : i32, i32, i32
  }
}

</mosaic_0001>

<llo_original>
// kernel: cnn_module_forward.1
$region0: #{cnn_module_forward.1}
  #allocation0 [shape = 'u32[]', space=smem, size = 0x4, offset = 0x4, fixed_abs, tag = 'smem constant byte address 0x4 - core index']
  #allocation1 [shape = 'u32[72,128]{1,0:T(1,128)}', space=vmem, size = 0x9000, scoped, tag = 'internal scratch']
  %s0 = inlined_call_operand.vmem [shape: f32[2,1,128], index: 0, kind: input, shape index: {}]
  %s1 = inlined_call_operand.hbm [shape: bf16[23,3,32,32], index: 1, kind: input, shape index: {}]
  %s2 = inlined_call_operand.vmem [shape: f32[23,32,1], index: 2, kind: input, shape index: {}]
  %s3 = inlined_call_operand.vmem [shape: f32[2,32,4], index: 3, kind: output, shape index: {}]
  %s4 = sld [smem:[#allocation0]]
  $region49: #{cnn_module_forward.1} parent=0
    _
  %s6 = ssub.s32 1, %s4
  %s7 = scalar_select 0, %s6, %s4
  $region1: #{cnn_module_forward.1} parent=0
    #allocation2 [shape = 'u8[565248]{0}', space=vmem, size = 0x8a000, scoped, tag = 'input window, operand 1, single buffered']
    #allocation3 [shape = 's32[2]{0}', space=sflag, size = 0x8, scoped, tag = 'scoped memory for cnn_module_forward.1']
    %8 = vsyncpa [#allocation3], 0
    loop: start=0, step=1, limit=4
    $region2: #{cnn_module_forward.1} parent=1 // loop_pre_header
      _
    $region3: #{cnn_module_forward.1} parent=1 // loop_header
      %s10 = sphi 0, %s14
      %p11 = scmp.ge.s32.totalorder %s10, 4
      %s20 = sphi 0, %s22
      %s23 = sphi 0, %s20
      %s24 = sphi 0, %s23
      %s40 = sphi 0, %s24
      %s44 = sphi 0, %s44
      %s46 = sphi 0, %s44
      %s47 = sphi 0, %s46
      %s61 = sphi 0, %s47
      %s65 = sphi 0, %s65
      %s67 = sphi 0, %s65
      %s68 = sphi 0, %s67
      %s82 = sphi 0, %s68
      %s88 = sphi 0, %s90
      %s91 = sphi 0, %s88
      %s92 = sphi 0, %s91
      %s108 = sphi 0, %s92
    $region4: #{cnn_module_forward.1} parent=1 // loop_header_branch
      %13 = sbr.rel (%p11) target = $region8
    $region5: #{cnn_module_forward.1} parent=1 // loop_body
      %s15 = ssub.s32 %s10, 1
      %s16 = ssub.s32 %s10, 2
      %s17 = sadd.s32 %s10, 1
      %s18 = ssub.s32 %s10, %s17
      %p19 = scmp.eq.s32.totalorder %s18, 0
      %s21 = sadd.s32 %s20, 1
      %s22 = scalar_select %p19, %s20, %s21
      %p25 = pneg %p19
      %p26 = scmp.eq.s32.totalorder %s10, 1
      %p27 = por %p25, %p26
      %p28 = scmp.ne.s32.totalorder %s20, %s23
      %p29 = scmp.eq.s32.totalorder %s10, 0
      %p30 = por %p28, %p29
      %p31 = scmp.ne.s32.totalorder %s20, %s23
      %p32 = scmp.eq.s32.totalorder %s15, 1
      %p33 = por %p31, %p32
      %p34 = scmp.ne.s32.totalorder %s23, %s24
      %p35 = scmp.eq.s32.totalorder %s15, 0
      %p36 = por %p34, %p35
      %p37 = scmp.ne.s32.totalorder %s23, %s24
      %p38 = scmp.eq.s32.totalorder %s16, 1
      %p39 = por %p37, %p38
      %p41 = scmp.ne.s32.totalorder %s24, %s40
      %p42 = scmp.eq.s32.totalorder %s16, 0
      %p43 = por %p41, %p42
      %s45 = sadd.s32 %s44, 1
      %p48 = scmp.eq.s32.totalorder %s10, 1
      %p49 = scmp.ne.s32.totalorder %s44, %s46
      %p50 = scmp.eq.s32.totalorder %s10, 0
      %p51 = por %p49, %p50
      %p52 = scmp.ne.s32.totalorder %s44, %s46
      %p53 = scmp.eq.s32.totalorder %s15, 1
      %p54 = por %p52, %p53
      %p55 = scmp.ne.s32.totalorder %s46, %s47
      %p56 = scmp.eq.s32.totalorder %s15, 0
      %p57 = por %p55, %p56
      %p58 = scmp.ne.s32.totalorder %s46, %s47
      %p59 = scmp.eq.s32.totalorder %s16, 1
      %p60 = por %p58, %p59
      %p62 = scmp.ne.s32.totalorder %s47, %s61
      %p63 = scmp.eq.s32.totalorder %s16, 0
      %p64 = por %p62, %p63
      %s66 = sadd.s32 %s65, 1
      %p69 = scmp.eq.s32.totalorder %s10, 1
      %p70 = scmp.ne.s32.totalorder %s65, %s67
      %p71 = scmp.eq.s32.totalorder %s10, 0
      %p72 = por %p70, %p71
      %p73 = scmp.ne.s32.totalorder %s65, %s67
      %p74 = scmp.eq.s32.totalorder %s15, 1
      %p75 = por %p73, %p74
      %p76 = scmp.ne.s32.totalorder %s67, %s68
      %p77 = scmp.eq.s32.totalorder %s15, 0
      %p78 = por %p76, %p77
      %p79 = scmp.ne.s32.totalorder %s67, %s68
      %p80 = scmp.eq.s32.totalorder %s16, 1
      %p81 = por %p79, %p80
      %p83 = scmp.ne.s32.totalorder %s68, %s82
      %p84 = scmp.eq.s32.totalorder %s16, 0
      %p85 = por %p83, %p84
      %s86 = ssub.s32 %s10, %s17
      %p87 = scmp.eq.s32.totalorder %s86, 0
      %s89 = sadd.s32 %s88, 1
      %s90 = scalar_select %p87, %s88, %s89
      %p93 = pneg %p87
      %p94 = scmp.eq.s32.totalorder %s10, 1
      %p95 = por %p93, %p94
      %p96 = scmp.ne.s32.totalorder %s88, %s91
      %p97 = scmp.eq.s32.totalorder %s10, 0
      %p98 = por %p96, %p97
      %p99 = scmp.ne.s32.totalorder %s88, %s91
      %p100 = scmp.eq.s32.totalorder %s15, 1
      %p101 = por %p99, %p100
      %p102 = scmp.ne.s32.totalorder %s91, %s92
      %p103 = scmp.eq.s32.totalorder %s15, 0
      %p104 = por %p102, %p103
      %p105 = scmp.ne.s32.totalorder %s91, %s92
      %p106 = scmp.eq.s32.totalorder %s16, 1
      %p107 = por %p105, %p106
      %p109 = scmp.ne.s32.totalorder %s92, %s108
      %p110 = scmp.eq.s32.totalorder %s16, 0
      %p111 = por %p109, %p110
      %p112 = scmp.le.s32.totalorder 1, %s10
      %p113 = scmp.lt.s32.totalorder %s10, 3
      %p114 = pnand %p112, %p113
      %p115 = pneg %p114
      // Predicated region
      $region9: #{cnn_module_forward.1} parent=5 // pred_check
        _
      $region10: #{cnn_module_forward.1} parent=5 // pred_check_branch
        %117 = sbr.rel (%p114) target = $region12
      $region11: #{cnn_module_forward.1} parent=5 // pred_region
        %s118 = ssub.s32 %s10, 1
        // Predicated region
        $region13: #{cnn_module_forward.1} parent=11 // pred_check
          %p119 = pneg %p57
        $region14: #{cnn_module_forward.1} parent=11 // pred_check_branch
          %121 = sbr.rel (%p119) target = $region16
        $region15: #{cnn_module_forward.1} parent=11 // pred_region
          %123 = vsyncadd [#allocation3], 0
          %s124 = sshll.u32 %s1, 4
          %s125 = int_to_ptr.hbm [resolvable:$true] %s124
          %s126 = sshll.u32 [#allocation2], 4
          %s127 = int_to_ptr.vmem [resolvable:$true] %s126
          %132 = dma.hbm_to_vmem [thread:$0]  %s125, 17664, %s127, [#allocation3], 64, 64, 4
        $region16: #{cnn_module_forward.1} parent=11 // pred_fallthru
          _
        // Predicated region
        $region17: #{cnn_module_forward.1} parent=11 // pred_check
          %p133 = pneg %p78
        $region18: #{cnn_module_forward.1} parent=11 // pred_check_branch
          %135 = sbr.rel (%p133) target = $region20
        $region19: #{cnn_module_forward.1} parent=11 // pred_region
          _
        $region20: #{cnn_module_forward.1} parent=11 // pred_fallthru
          _
      $region12: #{cnn_module_forward.1} parent=5 // pred_fallthru
        _
      %p136 = scmp.lt.s32.totalorder %s10, 2
      // Predicated region
      $region21: #{cnn_module_forward.1} parent=5 // pred_check
        %p137 = pneg %p136
      $region22: #{cnn_module_forward.1} parent=5 // pred_check_branch
        %139 = sbr.rel (%p137) target = $region24
      $region23: #{cnn_module_forward.1} parent=5 // pred_region
        // Predicated region
        $region25: #{cnn_module_forward.1} parent=23 // pred_check
          %p140 = pneg %p30
        $region26: #{cnn_module_forward.1} parent=23 // pred_check_branch
          %142 = sbr.rel (%p140) target = $region28
        $region27: #{cnn_module_forward.1} parent=23 // pred_region
          %p143 = scmp.lt.s32.totalorder %s10, 1
          %s144 = scalar_select %p143, %s10, 1
          %s145 = scalar_lea.vmem %s0, %s144
        $region28: #{cnn_module_forward.1} parent=23 // pred_fallthru
          _
      $region24: #{cnn_module_forward.1} parent=5 // pred_fallthru
        _
      %p146 = scmp.le.s32.totalorder 1, %s10
      %p147 = scmp.lt.s32.totalorder %s10, 3
      %p148 = pnand %p146, %p147
      %p149 = pneg %p148
      // Predicated region
      $region29: #{cnn_module_forward.1} parent=5 // pred_check
        _
      $region30: #{cnn_module_forward.1} parent=5 // pred_check_branch
        %151 = sbr.rel (%p148) target = $region32
      $region31: #{cnn_module_forward.1} parent=5 // pred_region
        %s152 = ssub.s32 %s10, 1
        // Predicated region
        $region33: #{cnn_module_forward.1} parent=31 // pred_check
          %p153 = pneg %p57
        $region34: #{cnn_module_forward.1} parent=31 // pred_check_branch
          %155 = sbr.rel (%p153) target = $region36
        $region35: #{cnn_module_forward.1} parent=31 // pred_region
          %157 = dma.done [#allocation3], 17664
        $region36: #{cnn_module_forward.1} parent=31 // pred_fallthru
          _
        %p158 = scmp.lt.s32.totalorder %s15, 1
        %s159 = scalar_select %p158, %s15, 1
        %s160 = scalar_lea.vmem %s0, %s159
        %p161 = pneg %p36
        %p162 = pneg %p33
        %p163 = pneg %p57
        %p164 = pneg %p54
        %p165 = pneg %p78
        %p166 = pneg %p75
        %p167 = pneg %p104
        %p168 = pneg %p101
        %p169 = scmp.lt.s32.totalorder %s15, 1
        %s170 = scalar_select %p169, %s15, 1
        %s171 = smul.addr %s170, 4
        %s172 = smul.addr %s171, 8
        %s173 = scalar_lea.vmem %s3, %s172
        %p174 = scmp.lt.s32.totalorder %s15, 1
        %s175 = scalar_select %p174, %s15, 1
        %s176 = scalar_lea.vmem %s0, %s175
        %p177 = scmp.lt.s32.totalorder %s15, 1
        %s178 = scalar_select %p177, %s15, 1
        %s179 = smul.addr %s178, 4
        %s180 = smul.addr %s179, 8
        %s181 = scalar_lea.vmem %s3, %s180
        %v183 = vld [vmem:[%s176] sm:$0x1]
        %v184 = vpack.c.bf16 %v183, %v183
        %v185 = vlaneseq
        %v186 = vshrl.u32 %v185, 7
        %v187 = vadd.s32 %v186, 8
        %v188 = vadd.s32 %v186, 16
        %v189 = vadd.s32 %v186, 24
        %v190 = vadd.s32 %v186, 32
        %v191 = vadd.s32 %v186, 40
        %v192 = vadd.s32 %v186, 48
        %v193 = vadd.s32 %v186, 56
        %v194 = vadd.s32 %v186, 64
        %v195 = vadd.s32 %v186, 72
        %v196 = vadd.s32 %v186, 80
        %v197 = vadd.s32 %v186, 88
        %v198 = vadd.s32 %v186, 96
        %v199 = vadd.s32 %v186, 104
        %v200 = vadd.s32 %v186, 112
        %v201 = vadd.s32 %v186, 120
        %v202 = vlaneseq
        %v203 = vand.u32 %v202, 127
        %v204 = vmul.u32 %v203, 2
        %v205 = vadd.s32 %v204, 4294967295
        %vm206 = vcmp.eq.s32.totalorder %v186, %v205
        %vm207 = vcmp.eq.s32.totalorder %v187, %v205
        %vm208 = vcmp.eq.s32.totalorder %v188, %v205
        %vm209 = vcmp.eq.s32.totalorder %v189, %v205
        %vm210 = vcmp.eq.s32.totalorder %v190, %v205
        %vm211 = vcmp.eq.s32.totalorder %v191, %v205
        %vm212 = vcmp.eq.s32.totalorder %v192, %v205
        %vm213 = vcmp.eq.s32.totalorder %v193, %v205
        %vm214 = vcmp.eq.s32.totalorder %v194, %v205
        %vm215 = vcmp.eq.s32.totalorder %v195, %v205
        %vm216 = vcmp.eq.s32.totalorder %v196, %v205
        %vm217 = vcmp.eq.s32.totalorder %v197, %v205
        %vm218 = vcmp.eq.s32.totalorder %v198, %v205
        %vm219 = vcmp.eq.s32.totalorder %v199, %v205
        %vm220 = vcmp.eq.s32.totalorder %v200, %v205
        %vm221 = vcmp.eq.s32.totalorder %v201, %v205
        %v222 = vsel %vm206, 1.0, 0.0
        %v223 = vsel %vm207, 1.0, 0.0
        %v224 = vsel %vm208, 1.0, 0.0
        %v225 = vsel %vm209, 1.0, 0.0
        %v226 = vsel %vm210, 1.0, 0.0
        %v227 = vsel %vm211, 1.0, 0.0
        %v228 = vsel %vm212, 1.0, 0.0
        %v229 = vsel %vm213, 1.0, 0.0
        %v230 = vsel %vm214, 1.0, 0.0
        %v231 = vsel %vm215, 1.0, 0.0
        %v232 = vsel %vm216, 1.0, 0.0
        %v233 = vsel %vm217, 1.0, 0.0
        %v234 = vsel %vm218, 1.0, 0.0
        %v235 = vsel %vm219, 1.0, 0.0
        %v236 = vsel %vm220, 1.0, 0.0
        %v237 = vsel %vm221, 1.0, 0.0
        %v238 = vpack.c.bf16 %v223, %v222
        %v239 = vpack.c.bf16 %v225, %v224
        %v240 = vpack.c.bf16 %v227, %v226
        %v241 = vpack.c.bf16 %v229, %v228
        %v242 = vpack.c.bf16 %v231, %v230
        %v243 = vpack.c.bf16 %v233, %v232
        %v244 = vpack.c.bf16 %v235, %v234
        %v245 = vpack.c.bf16 %v237, %v236
        %246 = vmatpush.bf16.msra.mxu0 %v245
        %247 = vmatpush.bf16.msra.mxu0 %v244
        %248 = vmatpush.bf16.msra.mxu0 %v243
        %249 = vmatpush.bf16.msra.mxu0 %v242
        %250 = vmatpush.bf16.msra.mxu0 %v241
        %251 = vmatpush.bf16.msra.mxu0 %v240
        %252 = vmatpush.bf16.msra.mxu0 %v239
        %253 = vmatpush.bf16.msra.mxu0 %v238
        %254 = vmatmul.bf16.gmra.mxu0 %v184
        %v255 = vpop.f32.mrf.mxu0
        %v256 = vadd.f32 0.0, %v255
        %v257 = vpop.f32.mrf.mxu0
        %258 = vdwg.mxu0
        %v259 = vpack.c.bf16 %v256, %v256
        %v260 = vld [vmem:[#allocation2] sm:$0xf]
        %v261 = vld [vmem:[#allocation2 + $0x4] sm:$0xf]
        %vm262 = vcmp.eq.s32.totalorder %v186, %v204
        %vm263 = vcmp.eq.s32.totalorder %v187, %v204
        %vm264 = vcmp.eq.s32.totalorder %v188, %v204
        %vm265 = vcmp.eq.s32.totalorder %v189, %v204
        %vm266 = vcmp.eq.s32.totalorder %v190, %v204
        %vm267 = vcmp.eq.s32.totalorder %v191, %v204
        %vm268 = vcmp.eq.s32.totalorder %v192, %v204
        %vm269 = vcmp.eq.s32.totalorder %v193, %v204
        %vm270 = vcmp.eq.s32.totalorder %v194, %v204
        %vm271 = vcmp.eq.s32.totalorder %v195, %v204
        %vm272 = vcmp.eq.s32.totalorder %v196, %v204
        %vm273 = vcmp.eq.s32.totalorder %v197, %v204
        %vm274 = vcmp.eq.s32.totalorder %v198, %v204
        %vm275 = vcmp.eq.s32.totalorder %v199, %v204
        %vm276 = vcmp.eq.s32.totalorder %v200, %v204
        %vm277 = vcmp.eq.s32.totalorder %v201, %v204
        %v278 = vsel %vm262, 1.0, 0.0
        %v279 = vsel %vm263, 1.0, 0.0
        %v280 = vsel %vm264, 1.0, 0.0
        %v281 = vsel %vm265, 1.0, 0.0
        %v282 = vsel %vm266, 1.0, 0.0
        %v283 = vsel %vm267, 1.0, 0.0
        %v284 = vsel %vm268, 1.0, 0.0
        %v285 = vsel %vm269, 1.0, 0.0
        %v286 = vsel %vm270, 1.0, 0.0
        %v287 = vsel %vm271, 1.0, 0.0
        %v288 = vsel %vm272, 1.0, 0.0
        %v289 = vsel %vm273, 1.0, 0.0
        %v290 = vsel %vm274, 1.0, 0.0
        %v291 = vsel %vm275, 1.0, 0.0
        %v292 = vsel %vm276, 1.0, 0.0
        %v293 = vsel %vm277, 1.0, 0.0
        %v294 = vpack.c.bf16 %v279, %v278
        %v295 = vpack.c.bf16 %v281, %v280
        %v296 = vpack.c.bf16 %v283, %v282
        %v297 = vpack.c.bf16 %v285, %v284
        %v298 = vpack.c.bf16 %v287, %v286
        %v299 = vpack.c.bf16 %v289, %v288
        %v300 = vpack.c.bf16 %v291, %v290
        %v301 = vpack.c.bf16 %v293, %v292
        %302 = vmatpush.bf16.msra.mxu0 %v301
        %303 = vmatpush.bf16.msra.mxu0 %v300
        %304 = vmatpush.bf16.msra.mxu0 %v299
        %305 = vmatpush.bf16.msra.mxu0 %v298
        %306 = vmatpush.bf16.msra.mxu0 %v297
        %307 = vmatpush.bf16.msra.mxu0 %v296
        %308 = vmatpush.bf16.msra.mxu0 %v295
        %309 = vmatpush.bf16.msra.mxu0 %v294
        %310 = vmatmul.bf16.gmra.mxu0 %v184
        %v311 = vpop.f32.mrf.mxu0
        %v312 = vadd.f32 0.0, %v311
        %v313 = vpop.f32.mrf.mxu0
        %314 = vdwg.mxu0
        %v315 = vpack.c.bf16 %v312, %v312
        %s316 = scalar_lea.vmem [#allocation2], 16
        %v317 = vld [vmem:[%s316] sm:$0xf]
        %v318 = vld [vmem:[%s316 + $0x4] sm:$0xf]
        %v321 = vunpack.c.l.b16 %v317
        %v322 = vunpack.c.l.b16 %v318
        %v323 = vpack.c.b16 %v322, %v321
        %vm324 = vcmask 7168
        %v326 = vsel %vm324, %v323, 0
        %vm328 = vcmask 1040384
        %v329 = vsel 0, 4294967295, 65535
        %v330 = vsel %vm328, %v329, 0
        %v332 = vand.u32 %v315, %v330
        %334 = vmatpush.bf16.msra.mxu0 0
        %335 = vmatpush.bf16.msra.mxu0 0
        %336 = vmatpush.bf16.msra.mxu0 0
        %337 = vmatpush.bf16.msra.mxu0 0
        %338 = vmatpush.bf16.msra.mxu0 0
        %339 = vmatpush.bf16.msra.mxu0 0
        %340 = vmatpush.bf16.msra.mxu0 0
        %341 = vmatpush.bf16.msra.mxu0 %v332
        %342 = vmatmul.bf16.gmra.mxu0 %v326
        %v343 = vpop.f32.mrf.mxu0
        %v344 = vadd.f32 0.0, %v343
        %v345 = vpop.f32.mrf.mxu0
        %v346 = vadd.f32 0.0, %v345
        %347 = vdwg.mxu0
        %v350 = vunpack.c.l.b16 %v260
        %v351 = vunpack.c.l.b16 %v261
        %v352 = vpack.c.b16 %v351, %v350
        %v354 = vsel %vm324, %v352, 0
        %v357 = vand.u32 %v259, %v330
        %359 = vmatpush.bf16.msra.mxu0 0
        %360 = vmatpush.bf16.msra.mxu0 0
        %361 = vmatpush.bf16.msra.mxu0 0
        %362 = vmatpush.bf16.msra.mxu0 0
        %363 = vmatpush.bf16.msra.mxu0 0
        %364 = vmatpush.bf16.msra.mxu0 0
        %365 = vmatpush.bf16.msra.mxu0 0
        %366 = vmatpush.bf16.msra.mxu0 %v357
        %367 = vmatmul.bf16.gmra.mxu0 %v354
        %v368 = vpop.f32.mrf.mxu0
        %v369 = vadd.f32 %v344, %v368
        %v370 = vpop.f32.mrf.mxu0
        %v371 = vadd.f32 %v346, %v370
        %372 = vdwg.mxu0
        %v373 = vadd.s32 %v204, 1
        %vm374 = vcmp.eq.s32.totalorder %v186, %v373
        %vm375 = vcmp.eq.s32.totalorder %v187, %v373
        %vm376 = vcmp.eq.s32.totalorder %v188, %v373
        %vm377 = vcmp.eq.s32.totalorder %v189, %v373
        %vm378 = vcmp.eq.s32.totalorder %v190, %v373
        %vm379 = vcmp.eq.s32.totalorder %v191, %v373
        %vm380 = vcmp.eq.s32.totalorder %v192, %v373
        %vm381 = vcmp.eq.s32.totalorder %v193, %v373
        %vm382 = vcmp.eq.s32.totalorder %v194, %v373
        %vm383 = vcmp.eq.s32.totalorder %v195, %v373
        %vm384 = vcmp.eq.s32.totalorder %v196, %v373
        %vm385 = vcmp.eq.s32.totalorder %v197, %v373
        %vm386 = vcmp.eq.s32.totalorder %v198, %v373
        %vm387 = vcmp.eq.s32.totalorder %v199, %v373
        %vm388 = vcmp.eq.s32.totalorder %v200, %v373
        %vm389 = vcmp.eq.s32.totalorder %v201, %v373
        %v390 = vsel %vm374, 1.0, 0.0
        %v391 = vsel %vm375, 1.0, 0.0
        %v392 = vsel %vm376, 1.0, 0.0
        %v393 = vsel %vm377, 1.0, 0.0
        %v394 = vsel %vm378, 1.0, 0.0
        %v395 = vsel %vm379, 1.0, 0.0
        %v396 = vsel %vm380, 1.0, 0.0
        %v397 = vsel %vm381, 1.0, 0.0
        %v398 = vsel %vm382, 1.0, 0.0
        %v399 = vsel %vm383, 1.0, 0.0
        %v400 = vsel %vm384, 1.0, 0.0
        %v401 = vsel %vm385, 1.0, 0.0
        %v402 = vsel %vm386, 1.0, 0.0
        %v403 = vsel %vm387, 1.0, 0.0
        %v404 = vsel %vm388, 1.0, 0.0
        %v405 = vsel %vm389, 1.0, 0.0
        %v406 = vpack.c.bf16 %v391, %v390
        %v407 = vpack.c.bf16 %v393, %v392
        %v408 = vpack.c.bf16 %v395, %v394
        %v409 = vpack.c.bf16 %v397, %v396
        %v410 = vpack.c.bf16 %v399, %v398
        %v411 = vpack.c.bf16 %v401, %v400
        %v412 = vpack.c.bf16 %v403, %v402
        %v413 = vpack.c.bf16 %v405, %v404
        %414 = vmatpush.bf16.msra.mxu0 %v413
        %415 = vmatpush.bf16.msra.mxu0 %v412
        %416 = vmatpush.bf16.msra.mxu0 %v411
        %417 = vmatpush.bf16.msra.mxu0 %v410
        %418 = vmatpush.bf16.msra.mxu0 %v409
        %419 = vmatpush.bf16.msra.mxu0 %v408
        %420 = vmatpush.bf16.msra.mxu0 %v407
        %421 = vmatpush.bf16.msra.mxu0 %v406
        %422 = vmatmul.bf16.gmra.mxu0 %v184
        %v423 = vpop.f32.mrf.mxu0
        %v424 = vadd.f32 0.0, %v423
        %v425 = vpop.f32.mrf.mxu0
        %426 = vdwg.mxu0
        %v427 = vpack.c.bf16 %v424, %v424
        %s428 = scalar_lea.vmem [#allocation2], 32
        %v429 = vld [vmem:[%s428] sm:$0xf]
        %v430 = vld [vmem:[%s428 + $0x4] sm:$0xf]
        %v433 = vunpack.c.l.b16 %v429
        %v434 = vunpack.c.l.b16 %v430
        %v435 = vpack.c.b16 %v434, %v433
        %v437 = vsel %vm324, %v435, 0
        %v440 = vand.u32 %v427, %v330
        %442 = vmatpush.bf16.msra.mxu0 0
        %443 = vmatpush.bf16.msra.mxu0 0
        %444 = vmatpush.bf16.msra.mxu0 0
        %445 = vmatpush.bf16.msra.mxu0 0
        %446 = vmatpush.bf16.msra.mxu0 0
        %447 = vmatpush.bf16.msra.mxu0 0
        %448 = vmatpush.bf16.msra.mxu0 0
        %449 = vmatpush.bf16.msra.mxu0 %v440
        %450 = vmatmul.bf16.gmra.mxu0 %v437
        %v451 = vpop.f32.mrf.mxu0
        %v452 = vadd.f32 0.0, %v451
        %v453 = vpop.f32.mrf.mxu0
        %v454 = vadd.f32 0.0, %v453
        %455 = vdwg.mxu0
        %v456 = vadd.f32 %v369, %v452
        %v457 = vadd.f32 %v371, %v454
        %v458 = vld [vmem:[%s2] sm:$0xff]
        %v459 = vld [vmem:[%s2 + $0x8] sm:$0xff]
        %461 = vset.pattern.permute.xlu0 0
        %462 = vperm.xlu0 %461, %v458
        %v463 = vpop.permute.xlu0 %462
        %466 = vset.pattern.permute.xlu0 0
        %467 = vperm.xlu0 %466, %v459
        %v468 = vpop.permute.xlu0 %467
        %v470 = vadd.f32 %v456, %v463
        %v471 = vadd.f32 %v457, %v468
        %v472 = vmax.f32 %v470, 0.0
        %v473 = vmax.f32 %v471, 0.0
        %v474 = vpack.c.bf16 %v473, %v472
        %v475 = vadd.s32 %v203, 4294967295
        %vm476 = vcmp.eq.s32.totalorder %v186, %v475
        %vm477 = vcmp.eq.s32.totalorder %v187, %v475
        %vm478 = vcmp.eq.s32.totalorder %v188, %v475
        %vm479 = vcmp.eq.s32.totalorder %v189, %v475
        %vm480 = vcmp.eq.s32.totalorder %v190, %v475
        %vm481 = vcmp.eq.s32.totalorder %v191, %v475
        %vm482 = vcmp.eq.s32.totalorder %v192, %v475
        %vm483 = vcmp.eq.s32.totalorder %v193, %v475
        %v484 = vsel %vm476, 1.0, 0.0
        %v485 = vsel %vm477, 1.0, 0.0
        %v486 = vsel %vm478, 1.0, 0.0
        %v487 = vsel %vm479, 1.0, 0.0
        %v488 = vsel %vm480, 1.0, 0.0
        %v489 = vsel %vm481, 1.0, 0.0
        %v490 = vsel %vm482, 1.0, 0.0
        %v491 = vsel %vm483, 1.0, 0.0
        %v492 = vpack.c.bf16 %v485, %v484
        %v493 = vpack.c.bf16 %v487, %v486
        %v494 = vpack.c.bf16 %v489, %v488
        %v495 = vpack.c.bf16 %v491, %v490
        %vm496 = vcmask 523264
        %v498 = vsel %vm496, %v474, 0
        %500 = vmatpush.bf16.msra.mxu0 0
        %501 = vmatpush.bf16.msra.mxu0 0
        %502 = vmatpush.bf16.msra.mxu0 0
        %503 = vmatpush.bf16.msra.mxu0 0
        %504 = vmatpush.bf16.msra.mxu0 %v495
        %505 = vmatpush.bf16.msra.mxu0 %v494
        %506 = vmatpush.bf16.msra.mxu0 %v493
        %507 = vmatpush.bf16.msra.mxu0 %v492
        %508 = vmatmul.bf16.gmra.mxu0 %v498
        %v509 = vpop.f32.mrf.mxu0
        %v510 = vadd.f32 0.0, %v509
        %v511 = vpop.f32.mrf.mxu0
        %v512 = vadd.f32 0.0, %v511
        %513 = vdwg.mxu0
        %v514 = vpack.c.bf16 %v512, %v510
        %s515 = scalar_lea.vmem [#allocation2], 48
        %v516 = vld [vmem:[%s515] sm:$0xf]
        %v517 = vld [vmem:[%s515 + $0x4] sm:$0xf]
        %s518 = scalar_lea.vmem [#allocation2], 64
        %v519 = vld [vmem:[%s518] sm:$0xf]
        %v520 = vld [vmem:[%s518 + $0x4] sm:$0xf]
        %v523 = vunpack.c.l.b16 %v519
        %v524 = vunpack.c.l.b16 %v520
        %v525 = vpack.c.b16 %v524, %v523
        %vm526 = vcmask 130048
        %v528 = vsel %vm526, %v525, 0
        %530 = vmatpush.bf16.msra.mxu0 0
        %531 = vmatpush.bf16.msra.mxu0 0
        %532 = vmatpush.bf16.msra.mxu0 0
        %533 = vmatpush.bf16.msra.mxu0 0
        %534 = vmatpush.bf16.msra.mxu0 0
        %535 = vmatpush.bf16.msra.mxu0 0
        %536 = vmatpush.bf16.msra.mxu0 0
        %537 = vmatpush.bf16.msra.mxu0 %v474
        %538 = vmatmul.bf16.gmra.mxu0 %v528
        %v539 = vpop.f32.mrf.mxu0
        %v540 = vadd.f32 0.0, %v539
        %v541 = vpop.f32.mrf.mxu0
        %v542 = vadd.f32 0.0, %v541
        %543 = vdwg.mxu0
        %v546 = vunpack.c.l.b16 %v516
        %v547 = vunpack.c.l.b16 %v517
        %v548 = vpack.c.b16 %v547, %v546
        %v550 = vsel %vm526, %v548, 0
        %552 = vmatpush.bf16.msra.mxu0 0
        %553 = vmatpush.bf16.msra.mxu0 0
        %554 = vmatpush.bf16.msra.mxu0 0
        %555 = vmatpush.bf16.msra.mxu0 0
        %556 = vmatpush.bf16.msra.mxu0 0
        %557 = vmatpush.bf16.msra.mxu0 0
        %558 = vmatpush.bf16.msra.mxu0 0
        %559 = vmatpush.bf16.msra.mxu0 %v514
        %560 = vmatmul.bf16.gmra.mxu0 %v550
        %v561 = vpop.f32.mrf.mxu0
        %v562 = vadd.f32 %v540, %v561
        %v563 = vpop.f32.mrf.mxu0
        %v564 = vadd.f32 %v542, %v563
        %565 = vdwg.mxu0
        %v566 = vadd.s32 %v203, 1
        %vm567 = vcmp.eq.s32.totalorder %v186, %v566
        %vm568 = vcmp.eq.s32.totalorder %v187, %v566
        %vm569 = vcmp.eq.s32.totalorder %v188, %v566
        %vm570 = vcmp.eq.s32.totalorder %v189, %v566
        %vm571 = vcmp.eq.s32.totalorder %v190, %v566
        %vm572 = vcmp.eq.s32.totalorder %v191, %v566
        %vm573 = vcmp.eq.s32.totalorder %v192, %v566
        %vm574 = vcmp.eq.s32.totalorder %v193, %v566
        %v575 = vsel %vm567, 1.0, 0.0
        %v576 = vsel %vm568, 1.0, 0.0
        %v577 = vsel %vm569, 1.0, 0.0
        %v578 = vsel %vm570, 1.0, 0.0
        %v579 = vsel %vm571, 1.0, 0.0
        %v580 = vsel %vm572, 1.0, 0.0
        %v581 = vsel %vm573, 1.0, 0.0
        %v582 = vsel %vm574, 1.0, 0.0
        %v583 = vpack.c.bf16 %v576, %v575
        %v584 = vpack.c.bf16 %v578, %v577
        %v585 = vpack.c.bf16 %v580, %v579
        %v586 = vpack.c.bf16 %v582, %v581
        %587 = vmatpush.bf16.msra.mxu0 0
        %588 = vmatpush.bf16.msra.mxu0 0
        %589 = vmatpush.bf16.msra.mxu0 0
        %590 = vmatpush.bf16.msra.mxu0 0
        %591 = vmatpush.bf16.msra.mxu0 %v586
        %592 = vmatpush.bf16.msra.mxu0 %v585
        %593 = vmatpush.bf16.msra.mxu0 %v584
        %594 = vmatpush.bf16.msra.mxu0 %v583
        %595 = vmatmul.bf16.gmra.mxu0 %v498
        %v596 = vpop.f32.mrf.mxu0
        %v597 = vadd.f32 0.0, %v596
        %v598 = vpop.f32.mrf.mxu0
        %v599 = vadd.f32 0.0, %v598
        %600 = vdwg.mxu0
        %v601 = vpack.c.bf16 %v599, %v597
        %s602 = scalar_lea.vmem [#allocation2], 80
        %v603 = vld [vmem:[%s602] sm:$0xf]
        %v604 = vld [vmem:[%s602 + $0x4] sm:$0xf]
        %v607 = vunpack.c.l.b16 %v603
        %v608 = vunpack.c.l.b16 %v604
        %v609 = vpack.c.b16 %v608, %v607
        %v611 = vsel %vm526, %v609, 0
        %613 = vmatpush.bf16.msra.mxu0 0
        %614 = vmatpush.bf16.msra.mxu0 0
        %615 = vmatpush.bf16.msra.mxu0 0
        %616 = vmatpush.bf16.msra.mxu0 0
        %617 = vmatpush.bf16.msra.mxu0 0
        %618 = vmatpush.bf16.msra.mxu0 0
        %619 = vmatpush.bf16.msra.mxu0 0
        %620 = vmatpush.bf16.msra.mxu0 %v601
        %621 = vmatmul.bf16.gmra.mxu0 %v611
        %v622 = vpop.f32.mrf.mxu0
        %v623 = vadd.f32 0.0, %v622
        %v624 = vpop.f32.mrf.mxu0
        %v625 = vadd.f32 0.0, %v624
        %626 = vdwg.mxu0
        %v627 = vadd.f32 %v562, %v623
        %v628 = vadd.f32 %v564, %v625
        %s629 = scalar_lea.vmem %s2, 32
        %v630 = vld [vmem:[%s629] sm:$0xff]
        %v631 = vld [vmem:[%s629 + $0x8] sm:$0xff]
        %633 = vset.pattern.permute.xlu0 0
        %634 = vperm.xlu0 %633, %v630
        %v635 = vpop.permute.xlu0 %634
        %638 = vset.pattern.permute.xlu0 0
        %639 = vperm.xlu0 %638, %v631
        %v640 = vpop.permute.xlu0 %639
        %v642 = vadd.f32 %v627, %v635
        %v643 = vadd.f32 %v628, %v640
        %v644 = vmax.f32 %v642, 0.0
        %v645 = vmax.f32 %v643, 0.0
        %v646 = vpack.c.bf16 %v645, %v644
        %v648 = vsel %vm496, %v646, 0
        %650 = vmatpush.bf16.msra.mxu0 0
        %651 = vmatpush.bf16.msra.mxu0 0
        %652 = vmatpush.bf16.msra.mxu0 0
        %653 = vmatpush.bf16.msra.mxu0 0
        %654 = vmatpush.bf16.msra.mxu0 %v495
        %655 = vmatpush.bf16.msra.mxu0 %v494
        %656 = vmatpush.bf16.msra.mxu0 %v493
        %657 = vmatpush.bf16.msra.mxu0 %v492
        %658 = vmatmul.bf16.gmra.mxu0 %v648
        %v659 = vpop.f32.mrf.mxu0
        %v660 = vadd.f32 0.0, %v659
        %v661 = vpop.f32.mrf.mxu0
        %v662 = vadd.f32 0.0, %v661
        %663 = vdwg.mxu0
        %v664 = vpack.c.bf16 %v662, %v660
        %s665 = scalar_lea.vmem [#allocation2], 96
        %v666 = vld [vmem:[%s665] sm:$0xf]
        %v667 = vld [vmem:[%s665 + $0x4] sm:$0xf]
        %s668 = scalar_lea.vmem [#allocation2], 112
        %v669 = vld [vmem:[%s668] sm:$0xf]
        %v670 = vld [vmem:[%s668 + $0x4] sm:$0xf]
        %v673 = vunpack.c.l.b16 %v669
        %v674 = vunpack.c.l.b16 %v670
        %v675 = vpack.c.b16 %v674, %v673
        %v677 = vsel %vm526, %v675, 0
        %679 = vmatpush.bf16.msra.mxu0 0
        %680 = vmatpush.bf16.msra.mxu0 0
        %681 = vmatpush.bf16.msra.mxu0 0
        %682 = vmatpush.bf16.msra.mxu0 0
        %683 = vmatpush.bf16.msra.mxu0 0
        %684 = vmatpush.bf16.msra.mxu0 0
        %685 = vmatpush.bf16.msra.mxu0 0
        %686 = vmatpush.bf16.msra.mxu0 %v646
        %687 = vmatmul.bf16.gmra.mxu0 %v677
        %v688 = vpop.f32.mrf.mxu0
        %v689 = vadd.f32 0.0, %v688
        %v690 = vpop.f32.mrf.mxu0
        %v691 = vadd.f32 0.0, %v690
        %692 = vdwg.mxu0
        %v695 = vunpack.c.l.b16 %v666
        %v696 = vunpack.c.l.b16 %v667
        %v697 = vpack.c.b16 %v696, %v695
        %v699 = vsel %vm526, %v697, 0
        %701 = vmatpush.bf16.msra.mxu0 0
        %702 = vmatpush.bf16.msra.mxu0 0
        %703 = vmatpush.bf16.msra.mxu0 0
        %704 = vmatpush.bf16.msra.mxu0 0
        %705 = vmatpush.bf16.msra.mxu0 0
        %706 = vmatpush.bf16.msra.mxu0 0
        %707 = vmatpush.bf16.msra.mxu0 0
        %708 = vmatpush.bf16.msra.mxu0 %v664
        %709 = vmatmul.bf16.gmra.mxu0 %v699
        %v710 = vpop.f32.mrf.mxu0
        %v711 = vadd.f32 %v689, %v710
        %v712 = vpop.f32.mrf.mxu0
        %v713 = vadd.f32 %v691, %v712
        %714 = vdwg.mxu0
        %715 = vmatpush.bf16.msra.mxu0 0
        %716 = vmatpush.bf16.msra.mxu0 0
        %717 = vmatpush.bf16.msra.mxu0 0
        %718 = vmatpush.bf16.msra.mxu0 0
        %719 = vmatpush.bf16.msra.mxu0 %v586
        %720 = vmatpush.bf16.msra.mxu0 %v585
        %721 = vmatpush.bf16.msra.mxu0 %v584
        %722 = vmatpush.bf16.msra.mxu0 %v583
        %723 = vmatmul.bf16.gmra.mxu0 %v648
        %v724 = vpop.f32.mrf.mxu0
        %v725 = vadd.f32 0.0, %v724
        %v726 = vpop.f32.mrf.mxu0
        %v727 = vadd.f32 0.0, %v726
        %728 = vdwg.mxu0
        %v729 = vpack.c.bf16 %v727, %v725
        %s730 = scalar_lea.vmem [#allocation2], 128
        %v731 = vld [vmem:[%s730] sm:$0xf]
        %v732 = vld [vmem:[%s730 + $0x4] sm:$0xf]
        %v735 = vunpack.c.l.b16 %v731
        %v736 = vunpack.c.l.b16 %v732
        %v737 = vpack.c.b16 %v736, %v735
        %v739 = vsel %vm526, %v737, 0
        %741 = vmatpush.bf16.msra.mxu0 0
        %742 = vmatpush.bf16.msra.mxu0 0
        %743 = vmatpush.bf16.msra.mxu0 0
        %744 = vmatpush.bf16.msra.mxu0 0
        %745 = vmatpush.bf16.msra.mxu0 0
        %746 = vmatpush.bf16.msra.mxu0 0
        %747 = vmatpush.bf16.msra.mxu0 0
        %748 = vmatpush.bf16.msra.mxu0 %v729
        %749 = vmatmul.bf16.gmra.mxu0 %v739
        %v750 = vpop.f32.mrf.mxu0
        %v751 = vadd.f32 0.0, %v750
        %v752 = vpop.f32.mrf.mxu0
        %v753 = vadd.f32 0.0, %v752
        %754 = vdwg.mxu0
        %v755 = vadd.f32 %v711, %v751
        %v756 = vadd.f32 %v713, %v753
        %s757 = scalar_lea.vmem %s2, 64
        %v758 = vld [vmem:[%s757] sm:$0xff]
        %v759 = vld [vmem:[%s757 + $0x8] sm:$0xff]
        %761 = vset.pattern.permute.xlu0 0
        %762 = vperm.xlu0 %761, %v758
        %v763 = vpop.permute.xlu0 %762
        %766 = vset.pattern.permute.xlu0 0
        %767 = vperm.xlu0 %766, %v759
        %v768 = vpop.permute.xlu0 %767
        %v770 = vadd.f32 %v755, %v763
        %v771 = vadd.f32 %v756, %v768
        %v772 = vmax.f32 %v770, 0.0
        %v773 = vmax.f32 %v771, 0.0
        %s774 = scalar_lea.vmem [#allocation2], 144
        %v775 = vld [vmem:[%s774] sm:$0xf]
        %v776 = vld [vmem:[%s774 + $0x4] sm:$0xf]
        %s777 = scalar_lea.vmem [#allocation2], 160
        %v778 = vld [vmem:[%s777] sm:$0xf]
        %v779 = vld [vmem:[%s777 + $0x4] sm:$0xf]
        %v782 = vunpack.c.l.b16 %v778
        %v783 = vunpack.c.l.b16 %v779
        %v784 = vpack.c.b16 %v783, %v782
        %v786 = vsel %vm324, %v784, 0
        %788 = vmatpush.bf16.msra.mxu0 0
        %789 = vmatpush.bf16.msra.mxu0 0
        %790 = vmatpush.bf16.msra.mxu0 0
        %791 = vmatpush.bf16.msra.mxu0 0
        %792 = vmatpush.bf16.msra.mxu0 0
        %793 = vmatpush.bf16.msra.mxu0 0
        %794 = vmatpush.bf16.msra.mxu0 0
        %795 = vmatpush.bf16.msra.mxu0 %v332
        %796 = vmatmul.bf16.gmra.mxu0 %v786
        %v797 = vpop.f32.mrf.mxu0
        %v798 = vadd.f32 0.0, %v797
        %v799 = vpop.f32.mrf.mxu0
        %v800 = vadd.f32 0.0, %v799
        %801 = vdwg.mxu0
        %v804 = vunpack.c.l.b16 %v775
        %v805 = vunpack.c.l.b16 %v776
        %v806 = vpack.c.b16 %v805, %v804
        %v808 = vsel %vm324, %v806, 0
        %810 = vmatpush.bf16.msra.mxu0 0
        %811 = vmatpush.bf16.msra.mxu0 0
        %812 = vmatpush.bf16.msra.mxu0 0
        %813 = vmatpush.bf16.msra.mxu0 0
        %814 = vmatpush.bf16.msra.mxu0 0
        %815 = vmatpush.bf16.msra.mxu0 0
        %816 = vmatpush.bf16.msra.mxu0 0
        %817 = vmatpush.bf16.msra.mxu0 %v357
        %818 = vmatmul.bf16.gmra.mxu0 %v808
        %v819 = vpop.f32.mrf.mxu0
        %v820 = vadd.f32 %v798, %v819
        %v821 = vpop.f32.mrf.mxu0
        %v822 = vadd.f32 %v800, %v821
        %823 = vdwg.mxu0
        %s824 = scalar_lea.vmem [#allocation2], 176
        %v825 = vld [vmem:[%s824] sm:$0xf]
        %v826 = vld [vmem:[%s824 + $0x4] sm:$0xf]
        %v829 = vunpack.c.l.b16 %v825
        %v830 = vunpack.c.l.b16 %v826
        %v831 = vpack.c.b16 %v830, %v829
        %v833 = vsel %vm324, %v831, 0
        %835 = vmatpush.bf16.msra.mxu0 0
        %836 = vmatpush.bf16.msra.mxu0 0
        %837 = vmatpush.bf16.msra.mxu0 0
        %838 = vmatpush.bf16.msra.mxu0 0
        %839 = vmatpush.bf16.msra.mxu0 0
        %840 = vmatpush.bf16.msra.mxu0 0
        %841 = vmatpush.bf16.msra.mxu0 0
        %842 = vmatpush.bf16.msra.mxu0 %v440
        %843 = vmatmul.bf16.gmra.mxu0 %v833
        %v844 = vpop.f32.mrf.mxu0
        %v845 = vadd.f32 0.0, %v844
        %v846 = vpop.f32.mrf.mxu0
        %v847 = vadd.f32 0.0, %v846
        %848 = vdwg.mxu0
        %v849 = vadd.f32 %v820, %v845
        %v850 = vadd.f32 %v822, %v847
        %s851 = scalar_lea.vmem %s2, 96
        %v852 = vld [vmem:[%s851] sm:$0xff]
        %v853 = vld [vmem:[%s851 + $0x8] sm:$0xff]
        %855 = vset.pattern.permute.xlu0 0
        %856 = vperm.xlu0 %855, %v852
        %v857 = vpop.permute.xlu0 %856
        %860 = vset.pattern.permute.xlu0 0
        %861 = vperm.xlu0 %860, %v853
        %v862 = vpop.permute.xlu0 %861
        %v864 = vadd.f32 %v849, %v857
        %v865 = vadd.f32 %v850, %v862
        %v866 = vadd.f32 %v772, %v864
        %v867 = vadd.f32 %v773, %v865
        %v868 = vpack.c.bf16 %v867, %v866
        %v870 = vsel %vm496, %v868, 0
        %872 = vmatpush.bf16.msra.mxu0 0
        %873 = vmatpush.bf16.msra.mxu0 0
        %874 = vmatpush.bf16.msra.mxu0 0
        %875 = vmatpush.bf16.msra.mxu0 0
        %876 = vmatpush.bf16.msra.mxu0 %v241
        %877 = vmatpush.bf16.msra.mxu0 %v240
        %878 = vmatpush.bf16.msra.mxu0 %v239
        %879 = vmatpush.bf16.msra.mxu0 %v238
        %880 = vmatmul.bf16.gmra.mxu0 %v870
        %v881 = vpop.f32.mrf.mxu0
        %v882 = vadd.f32 0.0, %v881
        %v883 = vpop.f32.mrf.mxu0
        %v884 = vadd.f32 0.0, %v883
        %885 = vdwg.mxu0
        %v886 = vpack.c.bf16 %v884, %v882
        %s887 = scalar_lea.vmem [#allocation2], 192
        %v888 = vld [vmem:[%s887] sm:$0xf]
        %v889 = vld [vmem:[%s887 + $0x4] sm:$0xf]
        %v890 = vld [vmem:[%s887 + $0x8] sm:$0xf]
        %v891 = vld [vmem:[%s887 + $0xc] sm:$0xf]
        %892 = vmatpush.bf16.msra.mxu0 0
        %893 = vmatpush.bf16.msra.mxu0 0
        %894 = vmatpush.bf16.msra.mxu0 0
        %895 = vmatpush.bf16.msra.mxu0 0
        %896 = vmatpush.bf16.msra.mxu0 %v297
        %897 = vmatpush.bf16.msra.mxu0 %v296
        %898 = vmatpush.bf16.msra.mxu0 %v295
        %899 = vmatpush.bf16.msra.mxu0 %v294
        %900 = vmatmul.bf16.gmra.mxu0 %v870
        %v901 = vpop.f32.mrf.mxu0
        %v902 = vadd.f32 0.0, %v901
        %v903 = vpop.f32.mrf.mxu0
        %v904 = vadd.f32 0.0, %v903
        %905 = vdwg.mxu0
        %v906 = vpack.c.bf16 %v904, %v902
        %s907 = scalar_lea.vmem [#allocation2], 208
        %v908 = vld [vmem:[%s907] sm:$0xf]
        %v909 = vld [vmem:[%s907 + $0x4] sm:$0xf]
        %v910 = vld [vmem:[%s907 + $0x8] sm:$0xf]
        %v911 = vld [vmem:[%s907 + $0xc] sm:$0xf]
        %v916 = vunpack.c.l.b16 %v908
        %v917 = vunpack.c.l.b16 %v909
        %v918 = vunpack.c.l.b16 %v910
        %v919 = vunpack.c.l.b16 %v911
        %v920 = vpack.c.b16 %v917, %v916
        %v921 = vpack.c.b16 %v919, %v918
        %v923 = vsel %vm526, %v920, 0
        %v926 = vsel %vm526, %v921, 0
        %928 = vmatpush.bf16.msra.mxu0 0
        %929 = vmatpush.bf16.msra.mxu0 0
        %930 = vmatpush.bf16.msra.mxu0 0
        %931 = vmatpush.bf16.msra.mxu0 0
        %932 = vmatpush.bf16.msra.mxu0 0
        %933 = vmatpush.bf16.msra.mxu0 0
        %934 = vmatpush.bf16.msra.mxu0 0
        %935 = vmatpush.bf16.msra.mxu0 %v906
        %936 = vmatmul.bf16.gmra.mxu0 %v923
        %v937 = vpop.f32.mrf.mxu0
        %v938 = vadd.f32 0.0, %v937
        %v939 = vpop.f32.mrf.mxu0
        %v940 = vadd.f32 0.0, %v939
        %941 = vmatmul.bf16.gmra.mxu0 %v926
        %v942 = vpop.f32.mrf.mxu0
        %v943 = vadd.f32 0.0, %v942
        %v944 = vpop.f32.mrf.mxu0
        %v945 = vadd.f32 0.0, %v944
        %946 = vdwg.mxu0
        %v951 = vunpack.c.l.b16 %v888
        %v952 = vunpack.c.l.b16 %v889
        %v953 = vunpack.c.l.b16 %v890
        %v954 = vunpack.c.l.b16 %v891
        %v955 = vpack.c.b16 %v952, %v951
        %v956 = vpack.c.b16 %v954, %v953
        %v958 = vsel %vm526, %v955, 0
        %v961 = vsel %vm526, %v956, 0
        %963 = vmatpush.bf16.msra.mxu0 0
        %964 = vmatpush.bf16.msra.mxu0 0
        %965 = vmatpush.bf16.msra.mxu0 0
        %966 = vmatpush.bf16.msra.mxu0 0
        %967 = vmatpush.bf16.msra.mxu0 0
        %968 = vmatpush.bf16.msra.mxu0 0
        %969 = vmatpush.bf16.msra.mxu0 0
        %970 = vmatpush.bf16.msra.mxu0 %v886
        %971 = vmatmul.bf16.gmra.mxu0 %v958
        %v972 = vpop.f32.mrf.mxu0
        %v973 = vadd.f32 %v938, %v972
        %v974 = vpop.f32.mrf.mxu0
        %v975 = vadd.f32 %v940, %v974
        %976 = vmatmul.bf16.gmra.mxu0 %v961
        %v977 = vpop.f32.mrf.mxu0
        %v978 = vadd.f32 %v943, %v977
        %v979 = vpop.f32.mrf.mxu0
        %v980 = vadd.f32 %v945, %v979
        %981 = vdwg.mxu0
        %982 = vmatpush.bf16.msra.mxu0 0
        %983 = vmatpush.bf16.msra.mxu0 0
        %984 = vmatpush.bf16.msra.mxu0 0
        %985 = vmatpush.bf16.msra.mxu0 0
        %986 = vmatpush.bf16.msra.mxu0 %v409
        %987 = vmatpush.bf16.msra.mxu0 %v408
        %988 = vmatpush.bf16.msra.mxu0 %v407
        %989 = vmatpush.bf16.msra.mxu0 %v406
        %990 = vmatmul.bf16.gmra.mxu0 %v870
        %v991 = vpop.f32.mrf.mxu0
        %v992 = vadd.f32 0.0, %v991
        %v993 = vpop.f32.mrf.mxu0
        %v994 = vadd.f32 0.0, %v993
        %995 = vdwg.mxu0
        %v996 = vpack.c.bf16 %v994, %v992
        %s997 = scalar_lea.vmem [#allocation2], 224
        %v998 = vld [vmem:[%s997] sm:$0xf]
        %v999 = vld [vmem:[%s997 + $0x4] sm:$0xf]
        %v1000 = vld [vmem:[%s997 + $0x8] sm:$0xf]
        %v1001 = vld [vmem:[%s997 + $0xc] sm:$0xf]
        %v1006 = vunpack.c.l.b16 %v998
        %v1007 = vunpack.c.l.b16 %v999
        %v1008 = vunpack.c.l.b16 %v1000
        %v1009 = vunpack.c.l.b16 %v1001
        %v1010 = vpack.c.b16 %v1007, %v1006
        %v1011 = vpack.c.b16 %v1009, %v1008
        %v1013 = vsel %vm526, %v1010, 0
        %v1016 = vsel %vm526, %v1011, 0
        %1018 = vmatpush.bf16.msra.mxu0 0
        %1019 = vmatpush.bf16.msra.mxu0 0
        %1020 = vmatpush.bf16.msra.mxu0 0
        %1021 = vmatpush.bf16.msra.mxu0 0
        %1022 = vmatpush.bf16.msra.mxu0 0
        %1023 = vmatpush.bf16.msra.mxu0 0
        %1024 = vmatpush.bf16.msra.mxu0 0
        %1025 = vmatpush.bf16.msra.mxu0 %v996
        %1026 = vmatmul.bf16.gmra.mxu0 %v1013
        %v1027 = vpop.f32.mrf.mxu0
        %v1028 = vadd.f32 0.0, %v1027
        %v1029 = vpop.f32.mrf.mxu0
        %v1030 = vadd.f32 0.0, %v1029
        %1031 = vmatmul.bf16.gmra.mxu0 %v1016
        %v1032 = vpop.f32.mrf.mxu0
        %v1033 = vadd.f32 0.0, %v1032
        %v1034 = vpop.f32.mrf.mxu0
        %v1035 = vadd.f32 0.0, %v1034
        %1036 = vdwg.mxu0
        %v1037 = vadd.f32 %v973, %v1028
        %v1038 = vadd.f32 %v975, %v1030
        %v1039 = vadd.f32 %v978, %v1033
        %v1040 = vadd.f32 %v980, %v1035
        %s1041 = scalar_lea.vmem %s2, 128
        %v1042 = vld [vmem:[%s1041] sm:$0xff]
        %v1043 = vld [vmem:[%s1041 + $0x8] sm:$0xff]
        %v1044 = vld [vmem:[%s1041 + $0x10] sm:$0xff]
        %v1045 = vld [vmem:[%s1041 + $0x18] sm:$0xff]
        %1047 = vset.pattern.permute.xlu0 0
        %1048 = vperm.xlu0 %1047, %v1042
        %v1049 = vpop.permute.xlu0 %1048
        %1052 = vset.pattern.permute.xlu0 0
        %1053 = vperm.xlu0 %1052, %v1043
        %v1054 = vpop.permute.xlu0 %1053
        %1057 = vset.pattern.permute.xlu0 0
        %1058 = vperm.xlu0 %1057, %v1044
        %v1059 = vpop.permute.xlu0 %1058
        %1062 = vset.pattern.permute.xlu0 0
        %1063 = vperm.xlu0 %1062, %v1045
        %v1064 = vpop.permute.xlu0 %1063
        %v1066 = vadd.f32 %v1037, %v1049
        %v1067 = vadd.f32 %v1038, %v1054
        %v1068 = vadd.f32 %v1039, %v1059
        %v1069 = vadd.f32 %v1040, %v1064
        %v1070 = vmax.f32 %v1066, 0.0
        %v1071 = vmax.f32 %v1067, 0.0
        %v1072 = vmax.f32 %v1068, 0.0
        %v1073 = vmax.f32 %v1069, 0.0
        %v1074 = vpack.c.bf16 %v1071, %v1070
        %v1075 = vpack.c.bf16 %v1073, %v1072
        %vm1076 = vcmask 261120
        %v1078 = vsel %vm1076, %v1074, 0
        %v1081 = vsel %vm1076, %v1075, 0
        %1083 = vmatpush.bf16.msra.mxu0 0
        %1084 = vmatpush.bf16.msra.mxu0 0
        %1085 = vmatpush.bf16.msra.mxu0 0
        %1086 = vmatpush.bf16.msra.mxu0 0
        %1087 = vmatpush.bf16.msra.mxu0 0
        %1088 = vmatpush.bf16.msra.mxu0 0
        %1089 = vmatpush.bf16.msra.mxu0 %v493
        %1090 = vmatpush.bf16.msra.mxu0 %v492
        %1091 = vmatmul.bf16.gmra.mxu0 %v1078
        %v1092 = vpop.f32.mrf.mxu0
        %v1093 = vadd.f32 0.0, %v1092
        %v1094 = vpop.f32.mrf.mxu0
        %v1095 = vadd.f32 0.0, %v1094
        %1096 = vmatmul.bf16.gmra.mxu0 %v1081
        %v1097 = vpop.f32.mrf.mxu0
        %v1098 = vadd.f32 0.0, %v1097
        %v1099 = vpop.f32.mrf.mxu0
        %v1100 = vadd.f32 0.0, %v1099
        %1101 = vdwg.mxu0
        %v1102 = vpack.c.bf16 %v1095, %v1093
        %v1103 = vpack.c.bf16 %v1100, %v1098
        %s1104 = scalar_lea.vmem [#allocation2], 240
        %v1105 = vld [vmem:[%s1104] sm:$0xf]
        %v1106 = vld [vmem:[%s1104 + $0x4] sm:$0xf]
        %v1107 = vld [vmem:[%s1104 + $0x8] sm:$0xf]
        %v1108 = vld [vmem:[%s1104 + $0xc] sm:$0xf]
        %s1109 = scalar_lea.vmem [#allocation2], 256
        %v1110 = vld [vmem:[%s1109] sm:$0xf]
        %v1111 = vld [vmem:[%s1109 + $0x4] sm:$0xf]
        %v1112 = vld [vmem:[%s1109 + $0x8] sm:$0xf]
        %v1113 = vld [vmem:[%s1109 + $0xc] sm:$0xf]
        %v1118 = vunpack.c.l.b16 %v1110
        %v1119 = vunpack.c.l.b16 %v1111
        %v1120 = vunpack.c.l.b16 %v1112
        %v1121 = vunpack.c.l.b16 %v1113
        %v1122 = vpack.c.b16 %v1119, %v1118
        %v1123 = vpack.c.b16 %v1121, %v1120
        %v1125 = vsel %vm1076, %v1122, 0
        %v1128 = vsel %vm1076, %v1123, 0
        %1130 = vmatpush.bf16.msra.mxu0 0
        %1131 = vmatpush.bf16.msra.mxu0 0
        %1132 = vmatpush.bf16.msra.mxu0 0
        %1133 = vmatpush.bf16.msra.mxu0 0
        %1134 = vmatpush.bf16.msra.mxu0 0
        %1135 = vmatpush.bf16.msra.mxu0 0
        %1136 = vmatpush.bf16.msra.mxu0 %v1075
        %1137 = vmatpush.bf16.msra.mxu0 %v1074
        %1138 = vmatmul.bf16.gmra.mxu0 %v1125
        %v1139 = vpop.f32.mrf.mxu0
        %v1140 = vadd.f32 0.0, %v1139
        %v1141 = vpop.f32.mrf.mxu0
        %v1142 = vadd.f32 0.0, %v1141
        %1143 = vmatmul.bf16.gmra.mxu0 %v1128
        %v1144 = vpop.f32.mrf.mxu0
        %v1145 = vadd.f32 0.0, %v1144
        %v1146 = vpop.f32.mrf.mxu0
        %v1147 = vadd.f32 0.0, %v1146
        %1148 = vdwg.mxu0
        %v1153 = vunpack.c.l.b16 %v1105
        %v1154 = vunpack.c.l.b16 %v1106
        %v1155 = vunpack.c.l.b16 %v1107
        %v1156 = vunpack.c.l.b16 %v1108
        %v1157 = vpack.c.b16 %v1154, %v1153
        %v1158 = vpack.c.b16 %v1156, %v1155
        %v1160 = vsel %vm1076, %v1157, 0
        %v1163 = vsel %vm1076, %v1158, 0
        %1165 = vmatpush.bf16.msra.mxu0 0
        %1166 = vmatpush.bf16.msra.mxu0 0
        %1167 = vmatpush.bf16.msra.mxu0 0
        %1168 = vmatpush.bf16.msra.mxu0 0
        %1169 = vmatpush.bf16.msra.mxu0 0
        %1170 = vmatpush.bf16.msra.mxu0 0
        %1171 = vmatpush.bf16.msra.mxu0 %v1103
        %1172 = vmatpush.bf16.msra.mxu0 %v1102
        %1173 = vmatmul.bf16.gmra.mxu0 %v1160
        %v1174 = vpop.f32.mrf.mxu0
        %v1175 = vadd.f32 %v1140, %v1174
        %v1176 = vpop.f32.mrf.mxu0
        %v1177 = vadd.f32 %v1142, %v1176
        %1178 = vmatmul.bf16.gmra.mxu0 %v1163
        %v1179 = vpop.f32.mrf.mxu0
        %v1180 = vadd.f32 %v1145, %v1179
        %v1181 = vpop.f32.mrf.mxu0
        %v1182 = vadd.f32 %v1147, %v1181
        %1183 = vdwg.mxu0
        %1184 = vmatpush.bf16.msra.mxu0 0
        %1185 = vmatpush.bf16.msra.mxu0 0
        %1186 = vmatpush.bf16.msra.mxu0 0
        %1187 = vmatpush.bf16.msra.mxu0 0
        %1188 = vmatpush.bf16.msra.mxu0 0
        %1189 = vmatpush.bf16.msra.mxu0 0
        %1190 = vmatpush.bf16.msra.mxu0 %v584
        %1191 = vmatpush.bf16.msra.mxu0 %v583
        %1192 = vmatmul.bf16.gmra.mxu0 %v1078
        %v1193 = vpop.f32.mrf.mxu0
        %v1194 = vadd.f32 0.0, %v1193
        %v1195 = vpop.f32.mrf.mxu0
        %v1196 = vadd.f32 0.0, %v1195
        %1197 = vmatmul.bf16.gmra.mxu0 %v1081
        %v1198 = vpop.f32.mrf.mxu0
        %v1199 = vadd.f32 0.0, %v1198
        %v1200 = vpop.f32.mrf.mxu0
        %v1201 = vadd.f32 0.0, %v1200
        %1202 = vdwg.mxu0
        %v1203 = vpack.c.bf16 %v1196, %v1194
        %v1204 = vpack.c.bf16 %v1201, %v1199
        %s1205 = scalar_lea.vmem [#allocation2], 272
        %v1206 = vld [vmem:[%s1205] sm:$0xf]
        %v1207 = vld [vmem:[%s1205 + $0x4] sm:$0xf]
        %v1208 = vld [vmem:[%s1205 + $0x8] sm:$0xf]
        %v1209 = vld [vmem:[%s1205 + $0xc] sm:$0xf]
        %v1214 = vunpack.c.l.b16 %v1206
        %v1215 = vunpack.c.l.b16 %v1207
        %v1216 = vunpack.c.l.b16 %v1208
        %v1217 = vunpack.c.l.b16 %v1209
        %v1218 = vpack.c.b16 %v1215, %v1214
        %v1219 = vpack.c.b16 %v1217, %v1216
        %v1221 = vsel %vm1076, %v1218, 0
        %v1224 = vsel %vm1076, %v1219, 0
        %1226 = vmatpush.bf16.msra.mxu0 0
        %1227 = vmatpush.bf16.msra.mxu0 0
        %1228 = vmatpush.bf16.msra.mxu0 0
        %1229 = vmatpush.bf16.msra.mxu0 0
        %1230 = vmatpush.bf16.msra.mxu0 0
        %1231 = vmatpush.bf16.msra.mxu0 0
        %1232 = vmatpush.bf16.msra.mxu0 %v1204
        %1233 = vmatpush.bf16.msra.mxu0 %v1203
        %1234 = vmatmul.bf16.gmra.mxu0 %v1221
        %v1235 = vpop.f32.mrf.mxu0
        %v1236 = vadd.f32 0.0, %v1235
        %v1237 = vpop.f32.mrf.mxu0
        %v1238 = vadd.f32 0.0, %v1237
        %1239 = vmatmul.bf16.gmra.mxu0 %v1224
        %v1240 = vpop.f32.mrf.mxu0
        %v1241 = vadd.f32 0.0, %v1240
        %v1242 = vpop.f32.mrf.mxu0
        %v1243 = vadd.f32 0.0, %v1242
        %1244 = vdwg.mxu0
        %v1245 = vadd.f32 %v1175, %v1236
        %v1246 = vadd.f32 %v1177, %v1238
        %v1247 = vadd.f32 %v1180, %v1241
        %v1248 = vadd.f32 %v1182, %v1243
        %s1249 = scalar_lea.vmem %s2, 160
        %v1250 = vld [vmem:[%s1249] sm:$0xff]
        %v1251 = vld [vmem:[%s1249 + $0x8] sm:$0xff]
        %v1252 = vld [vmem:[%s1249 + $0x10] sm:$0xff]
        %v1253 = vld [vmem:[%s1249 + $0x18] sm:$0xff]
        %1255 = vset.pattern.permute.xlu0 0
        %1256 = vperm.xlu0 %1255, %v1250
        %v1257 = vpop.permute.xlu0 %1256
        %1260 = vset.pattern.permute.xlu0 0
        %1261 = vperm.xlu0 %1260, %v1251
        %v1262 = vpop.permute.xlu0 %1261
        %1265 = vset.pattern.permute.xlu0 0
        %1266 = vperm.xlu0 %1265, %v1252
        %v1267 = vpop.permute.xlu0 %1266
        %1270 = vset.pattern.permute.xlu0 0
        %1271 = vperm.xlu0 %1270, %v1253
        %v1272 = vpop.permute.xlu0 %1271
        %v1274 = vadd.f32 %v1245, %v1257
        %v1275 = vadd.f32 %v1246, %v1262
        %v1276 = vadd.f32 %v1247, %v1267
        %v1277 = vadd.f32 %v1248, %v1272
        %v1278 = vmax.f32 %v1274, 0.0
        %v1279 = vmax.f32 %v1275, 0.0
        %v1280 = vmax.f32 %v1276, 0.0
        %v1281 = vmax.f32 %v1277, 0.0
        %v1282 = vpack.c.bf16 %v1279, %v1278
        %v1283 = vpack.c.bf16 %v1281, %v1280
        %v1285 = vsel %vm1076, %v1282, 0
        %v1288 = vsel %vm1076, %v1283, 0
        %1290 = vmatpush.bf16.msra.mxu0 0
        %1291 = vmatpush.bf16.msra.mxu0 0
        %1292 = vmatpush.bf16.msra.mxu0 0
        %1293 = vmatpush.bf16.msra.mxu0 0
        %1294 = vmatpush.bf16.msra.mxu0 0
        %1295 = vmatpush.bf16.msra.mxu0 0
        %1296 = vmatpush.bf16.msra.mxu0 %v493
        %1297 = vmatpush.bf16.msra.mxu0 %v492
        %1298 = vmatmul.bf16.gmra.mxu0 %v1285
        %v1299 = vpop.f32.mrf.mxu0
        %v1300 = vadd.f32 0.0, %v1299
        %v1301 = vpop.f32.mrf.mxu0
        %v1302 = vadd.f32 0.0, %v1301
        %1303 = vmatmul.bf16.gmra.mxu0 %v1288
        %v1304 = vpop.f32.mrf.mxu0
        %v1305 = vadd.f32 0.0, %v1304
        %v1306 = vpop.f32.mrf.mxu0
        %v1307 = vadd.f32 0.0, %v1306
        %1308 = vdwg.mxu0
        %v1309 = vpack.c.bf16 %v1302, %v1300
        %v1310 = vpack.c.bf16 %v1307, %v1305
        %s1311 = scalar_lea.vmem [#allocation2], 288
        %v1312 = vld [vmem:[%s1311] sm:$0xf]
        %v1313 = vld [vmem:[%s1311 + $0x4] sm:$0xf]
        %v1314 = vld [vmem:[%s1311 + $0x8] sm:$0xf]
        %v1315 = vld [vmem:[%s1311 + $0xc] sm:$0xf]
        %s1316 = scalar_lea.vmem [#allocation2], 304
        %v1317 = vld [vmem:[%s1316] sm:$0xf]
        %v1318 = vld [vmem:[%s1316 + $0x4] sm:$0xf]
        %v1319 = vld [vmem:[%s1316 + $0x8] sm:$0xf]
        %v1320 = vld [vmem:[%s1316 + $0xc] sm:$0xf]
        %v1325 = vunpack.c.l.b16 %v1317
        %v1326 = vunpack.c.l.b16 %v1318
        %v1327 = vunpack.c.l.b16 %v1319
        %v1328 = vunpack.c.l.b16 %v1320
        %v1329 = vpack.c.b16 %v1326, %v1325
        %v1330 = vpack.c.b16 %v1328, %v1327
        %v1332 = vsel %vm1076, %v1329, 0
        %v1335 = vsel %vm1076, %v1330, 0
        %1337 = vmatpush.bf16.msra.mxu0 0
        %1338 = vmatpush.bf16.msra.mxu0 0
        %1339 = vmatpush.bf16.msra.mxu0 0
        %1340 = vmatpush.bf16.msra.mxu0 0
        %1341 = vmatpush.bf16.msra.mxu0 0
        %1342 = vmatpush.bf16.msra.mxu0 0
        %1343 = vmatpush.bf16.msra.mxu0 %v1283
        %1344 = vmatpush.bf16.msra.mxu0 %v1282
        %1345 = vmatmul.bf16.gmra.mxu0 %v1332
        %v1346 = vpop.f32.mrf.mxu0
        %v1347 = vadd.f32 0.0, %v1346
        %v1348 = vpop.f32.mrf.mxu0
        %v1349 = vadd.f32 0.0, %v1348
        %1350 = vmatmul.bf16.gmra.mxu0 %v1335
        %v1351 = vpop.f32.mrf.mxu0
        %v1352 = vadd.f32 0.0, %v1351
        %v1353 = vpop.f32.mrf.mxu0
        %v1354 = vadd.f32 0.0, %v1353
        %1355 = vdwg.mxu0
        %v1360 = vunpack.c.l.b16 %v1312
        %v1361 = vunpack.c.l.b16 %v1313
        %v1362 = vunpack.c.l.b16 %v1314
        %v1363 = vunpack.c.l.b16 %v1315
        %v1364 = vpack.c.b16 %v1361, %v1360
        %v1365 = vpack.c.b16 %v1363, %v1362
        %v1367 = vsel %vm1076, %v1364, 0
        %v1370 = vsel %vm1076, %v1365, 0
        %1372 = vmatpush.bf16.msra.mxu0 0
        %1373 = vmatpush.bf16.msra.mxu0 0
        %1374 = vmatpush.bf16.msra.mxu0 0
        %1375 = vmatpush.bf16.msra.mxu0 0
        %1376 = vmatpush.bf16.msra.mxu0 0
        %1377 = vmatpush.bf16.msra.mxu0 0
        %1378 = vmatpush.bf16.msra.mxu0 %v1310
        %1379 = vmatpush.bf16.msra.mxu0 %v1309
        %1380 = vmatmul.bf16.gmra.mxu0 %v1367
        %v1381 = vpop.f32.mrf.mxu0
        %v1382 = vadd.f32 %v1347, %v1381
        %v1383 = vpop.f32.mrf.mxu0
        %v1384 = vadd.f32 %v1349, %v1383
        %1385 = vmatmul.bf16.gmra.mxu0 %v1370
        %v1386 = vpop.f32.mrf.mxu0
        %v1387 = vadd.f32 %v1352, %v1386
        %v1388 = vpop.f32.mrf.mxu0
        %v1389 = vadd.f32 %v1354, %v1388
        %1390 = vdwg.mxu0
        %1391 = vmatpush.bf16.msra.mxu0 0
        %1392 = vmatpush.bf16.msra.mxu0 0
        %1393 = vmatpush.bf16.msra.mxu0 0
        %1394 = vmatpush.bf16.msra.mxu0 0
        %1395 = vmatpush.bf16.msra.mxu0 0
        %1396 = vmatpush.bf16.msra.mxu0 0
        %1397 = vmatpush.bf16.msra.mxu0 %v584
        %1398 = vmatpush.bf16.msra.mxu0 %v583
        %1399 = vmatmul.bf16.gmra.mxu0 %v1285
        %v1400 = vpop.f32.mrf.mxu0
        %v1401 = vadd.f32 0.0, %v1400
        %v1402 = vpop.f32.mrf.mxu0
        %v1403 = vadd.f32 0.0, %v1402
        %1404 = vmatmul.bf16.gmra.mxu0 %v1288
        %v1405 = vpop.f32.mrf.mxu0
        %v1406 = vadd.f32 0.0, %v1405
        %v1407 = vpop.f32.mrf.mxu0
        %v1408 = vadd.f32 0.0, %v1407
        %1409 = vdwg.mxu0
        %v1410 = vpack.c.bf16 %v1403, %v1401
        %v1411 = vpack.c.bf16 %v1408, %v1406
        %s1412 = scalar_lea.vmem [#allocation2], 320
        %v1413 = vld [vmem:[%s1412] sm:$0xf]
        %v1414 = vld [vmem:[%s1412 + $0x4] sm:$0xf]
        %v1415 = vld [vmem:[%s1412 + $0x8] sm:$0xf]
        %v1416 = vld [vmem:[%s1412 + $0xc] sm:$0xf]
        %v1421 = vunpack.c.l.b16 %v1413
        %v1422 = vunpack.c.l.b16 %v1414
        %v1423 = vunpack.c.l.b16 %v1415
        %v1424 = vunpack.c.l.b16 %v1416
        %v1425 = vpack.c.b16 %v1422, %v1421
        %v1426 = vpack.c.b16 %v1424, %v1423
        %v1428 = vsel %vm1076, %v1425, 0
        %v1431 = vsel %vm1076, %v1426, 0
        %1433 = vmatpush.bf16.msra.mxu0 0
        %1434 = vmatpush.bf16.msra.mxu0 0
        %1435 = vmatpush.bf16.msra.mxu0 0
        %1436 = vmatpush.bf16.msra.mxu0 0
        %1437 = vmatpush.bf16.msra.mxu0 0
        %1438 = vmatpush.bf16.msra.mxu0 0
        %1439 = vmatpush.bf16.msra.mxu0 %v1411
        %1440 = vmatpush.bf16.msra.mxu0 %v1410
        %1441 = vmatmul.bf16.gmra.mxu0 %v1428
        %v1442 = vpop.f32.mrf.mxu0
        %v1443 = vadd.f32 0.0, %v1442
        %v1444 = vpop.f32.mrf.mxu0
        %v1445 = vadd.f32 0.0, %v1444
        %1446 = vmatmul.bf16.gmra.mxu0 %v1431
        %v1447 = vpop.f32.mrf.mxu0
        %v1448 = vadd.f32 0.0, %v1447
        %v1449 = vpop.f32.mrf.mxu0
        %v1450 = vadd.f32 0.0, %v1449
        %1451 = vdwg.mxu0
        %v1452 = vadd.f32 %v1382, %v1443
        %v1453 = vadd.f32 %v1384, %v1445
        %v1454 = vadd.f32 %v1387, %v1448
        %v1455 = vadd.f32 %v1389, %v1450
        %s1456 = scalar_lea.vmem %s2, 192
        %v1457 = vld [vmem:[%s1456] sm:$0xff]
        %v1458 = vld [vmem:[%s1456 + $0x8] sm:$0xff]
        %v1459 = vld [vmem:[%s1456 + $0x10] sm:$0xff]
        %v1460 = vld [vmem:[%s1456 + $0x18] sm:$0xff]
        %1462 = vset.pattern.permute.xlu0 0
        %1463 = vperm.xlu0 %1462, %v1457
        %v1464 = vpop.permute.xlu0 %1463
        %1467 = vset.pattern.permute.xlu0 0
        %1468 = vperm.xlu0 %1467, %v1458
        %v1469 = vpop.permute.xlu0 %1468
        %1472 = vset.pattern.permute.xlu0 0
        %1473 = vperm.xlu0 %1472, %v1459
        %v1474 = vpop.permute.xlu0 %1473
        %1477 = vset.pattern.permute.xlu0 0
        %1478 = vperm.xlu0 %1477, %v1460
        %v1479 = vpop.permute.xlu0 %1478
        %v1481 = vadd.f32 %v1452, %v1464
        %v1482 = vadd.f32 %v1453, %v1469
        %v1483 = vadd.f32 %v1454, %v1474
        %v1484 = vadd.f32 %v1455, %v1479
        %v1485 = vmax.f32 %v1481, 0.0
        %v1486 = vmax.f32 %v1482, 0.0
        %v1487 = vmax.f32 %v1483, 0.0
        %v1488 = vmax.f32 %v1484, 0.0
        %s1489 = scalar_lea.vmem [#allocation2], 336
        %v1490 = vld [vmem:[%s1489] sm:$0xf]
        %v1491 = vld [vmem:[%s1489 + $0x4] sm:$0xf]
        %v1492 = vld [vmem:[%s1489 + $0x8] sm:$0xf]
        %v1493 = vld [vmem:[%s1489 + $0xc] sm:$0xf]
        %s1494 = scalar_lea.vmem [#allocation2], 352
        %v1495 = vld [vmem:[%s1494] sm:$0xf]
        %v1496 = vld [vmem:[%s1494 + $0x4] sm:$0xf]
        %v1497 = vld [vmem:[%s1494 + $0x8] sm:$0xf]
        %v1498 = vld [vmem:[%s1494 + $0xc] sm:$0xf]
        %v1503 = vunpack.c.l.b16 %v1495
        %v1504 = vunpack.c.l.b16 %v1496
        %v1505 = vunpack.c.l.b16 %v1497
        %v1506 = vunpack.c.l.b16 %v1498
        %v1507 = vpack.c.b16 %v1504, %v1503
        %v1508 = vpack.c.b16 %v1506, %v1505
        %v1510 = vsel %vm526, %v1507, 0
        %v1513 = vsel %vm526, %v1508, 0
        %1515 = vmatpush.bf16.msra.mxu0 0
        %1516 = vmatpush.bf16.msra.mxu0 0
        %1517 = vmatpush.bf16.msra.mxu0 0
        %1518 = vmatpush.bf16.msra.mxu0 0
        %1519 = vmatpush.bf16.msra.mxu0 0
        %1520 = vmatpush.bf16.msra.mxu0 0
        %1521 = vmatpush.bf16.msra.mxu0 0
        %1522 = vmatpush.bf16.msra.mxu0 %v906
        %1523 = vmatmul.bf16.gmra.mxu0 %v1510
        %v1524 = vpop.f32.mrf.mxu0
        %v1525 = vadd.f32 0.0, %v1524
        %v1526 = vpop.f32.mrf.mxu0
        %v1527 = vadd.f32 0.0, %v1526
        %1528 = vmatmul.bf16.gmra.mxu0 %v1513
        %v1529 = vpop.f32.mrf.mxu0
        %v1530 = vadd.f32 0.0, %v1529
        %v1531 = vpop.f32.mrf.mxu0
        %v1532 = vadd.f32 0.0, %v1531
        %1533 = vdwg.mxu0
        %v1538 = vunpack.c.l.b16 %v1490
        %v1539 = vunpack.c.l.b16 %v1491
        %v1540 = vunpack.c.l.b16 %v1492
        %v1541 = vunpack.c.l.b16 %v1493
        %v1542 = vpack.c.b16 %v1539, %v1538
        %v1543 = vpack.c.b16 %v1541, %v1540
        %v1545 = vsel %vm526, %v1542, 0
        %v1548 = vsel %vm526, %v1543, 0
        %1550 = vmatpush.bf16.msra.mxu0 0
        %1551 = vmatpush.bf16.msra.mxu0 0
        %1552 = vmatpush.bf16.msra.mxu0 0
        %1553 = vmatpush.bf16.msra.mxu0 0
        %1554 = vmatpush.bf16.msra.mxu0 0
        %1555 = vmatpush.bf16.msra.mxu0 0
        %1556 = vmatpush.bf16.msra.mxu0 0
        %1557 = vmatpush.bf16.msra.mxu0 %v886
        %1558 = vmatmul.bf16.gmra.mxu0 %v1545
        %v1559 = vpop.f32.mrf.mxu0
        %v1560 = vadd.f32 %v1525, %v1559
        %v1561 = vpop.f32.mrf.mxu0
        %v1562 = vadd.f32 %v1527, %v1561
        %1563 = vmatmul.bf16.gmra.mxu0 %v1548
        %v1564 = vpop.f32.mrf.mxu0
        %v1565 = vadd.f32 %v1530, %v1564
        %v1566 = vpop.f32.mrf.mxu0
        %v1567 = vadd.f32 %v1532, %v1566
        %1568 = vdwg.mxu0
        %s1569 = scalar_lea.vmem [#allocation2], 368
        %v1570 = vld [vmem:[%s1569] sm:$0xf]
        %v1571 = vld [vmem:[%s1569 + $0x4] sm:$0xf]
        %v1572 = vld [vmem:[%s1569 + $0x8] sm:$0xf]
        %v1573 = vld [vmem:[%s1569 + $0xc] sm:$0xf]
        %v1578 = vunpack.c.l.b16 %v1570
        %v1579 = vunpack.c.l.b16 %v1571
        %v1580 = vunpack.c.l.b16 %v1572
        %v1581 = vunpack.c.l.b16 %v1573
        %v1582 = vpack.c.b16 %v1579, %v1578
        %v1583 = vpack.c.b16 %v1581, %v1580
        %v1585 = vsel %vm526, %v1582, 0
        %v1588 = vsel %vm526, %v1583, 0
        %1590 = vmatpush.bf16.msra.mxu0 0
        %1591 = vmatpush.bf16.msra.mxu0 0
        %1592 = vmatpush.bf16.msra.mxu0 0
        %1593 = vmatpush.bf16.msra.mxu0 0
        %1594 = vmatpush.bf16.msra.mxu0 0
        %1595 = vmatpush.bf16.msra.mxu0 0
        %1596 = vmatpush.bf16.msra.mxu0 0
        %1597 = vmatpush.bf16.msra.mxu0 %v996
        %1598 = vmatmul.bf16.gmra.mxu0 %v1585
        %v1599 = vpop.f32.mrf.mxu0
        %v1600 = vadd.f32 0.0, %v1599
        %v1601 = vpop.f32.mrf.mxu0
        %v1602 = vadd.f32 0.0, %v1601
        %1603 = vmatmul.bf16.gmra.mxu0 %v1588
        %v1604 = vpop.f32.mrf.mxu0
        %v1605 = vadd.f32 0.0, %v1604
        %v1606 = vpop.f32.mrf.mxu0
        %v1607 = vadd.f32 0.0, %v1606
        %1608 = vdwg.mxu0
        %v1609 = vadd.f32 %v1560, %v1600
        %v1610 = vadd.f32 %v1562, %v1602
        %v1611 = vadd.f32 %v1565, %v1605
        %v1612 = vadd.f32 %v1567, %v1607
        %s1613 = scalar_lea.vmem %s2, 224
        %v1614 = vld [vmem:[%s1613] sm:$0xff]
        %v1615 = vld [vmem:[%s1613 + $0x8] sm:$0xff]
        %v1616 = vld [vmem:[%s1613 + $0x10] sm:$0xff]
        %v1617 = vld [vmem:[%s1613 + $0x18] sm:$0xff]
        %1619 = vset.pattern.permute.xlu0 0
        %1620 = vperm.xlu0 %1619, %v1614
        %v1621 = vpop.permute.xlu0 %1620
        %1624 = vset.pattern.permute.xlu0 0
        %1625 = vperm.xlu0 %1624, %v1615
        %v1626 = vpop.permute.xlu0 %1625
        %1629 = vset.pattern.permute.xlu0 0
        %1630 = vperm.xlu0 %1629, %v1616
        %v1631 = vpop.permute.xlu0 %1630
        %1634 = vset.pattern.permute.xlu0 0
        %1635 = vperm.xlu0 %1634, %v1617
        %v1636 = vpop.permute.xlu0 %1635
        %v1638 = vadd.f32 %v1609, %v1621
        %v1639 = vadd.f32 %v1610, %v1626
        %v1640 = vadd.f32 %v1611, %v1631
        %v1641 = vadd.f32 %v1612, %v1636
        %v1642 = vadd.f32 %v1485, %v1638
        %v1643 = vadd.f32 %v1486, %v1639
        %v1644 = vadd.f32 %v1487, %v1640
        %v1645 = vadd.f32 %v1488, %v1641
        %v1646 = vpack.c.bf16 %v1643, %v1642
        %v1647 = vpack.c.bf16 %v1645, %v1644
        %v1649 = vsel %vm1076, %v1646, 0
        %v1652 = vsel %vm1076, %v1647, 0
        %1654 = vmatpush.bf16.msra.mxu0 0
        %1655 = vmatpush.bf16.msra.mxu0 0
        %1656 = vmatpush.bf16.msra.mxu0 0
        %1657 = vmatpush.bf16.msra.mxu0 0
        %1658 = vmatpush.bf16.msra.mxu0 0
        %1659 = vmatpush.bf16.msra.mxu0 0
        %1660 = vmatpush.bf16.msra.mxu0 %v239
        %1661 = vmatpush.bf16.msra.mxu0 %v238
        %1662 = vmatmul.bf16.gmra.mxu0 %v1649
        %v1663 = vpop.f32.mrf.mxu0
        %v1664 = vadd.f32 0.0, %v1663
        %v1665 = vpop.f32.mrf.mxu0
        %v1666 = vadd.f32 0.0, %v1665
        %1667 = vmatmul.bf16.gmra.mxu0 %v1652
        %v1668 = vpop.f32.mrf.mxu0
        %v1669 = vadd.f32 0.0, %v1668
        %v1670 = vpop.f32.mrf.mxu0
        %v1671 = vadd.f32 0.0, %v1670
        %1672 = vdwg.mxu0
        %v1673 = vpack.c.bf16 %v1666, %v1664
        %v1674 = vpack.c.bf16 %v1671, %v1669
        %s1675 = scalar_lea.vmem [#allocation2], 384
        %v1676 = vld [vmem:[%s1675] sm:$0xf]
        %v1677 = vld [vmem:[%s1675 + $0x4] sm:$0xf]
        %v1678 = vld [vmem:[%s1675 + $0x8] sm:$0xf]
        %v1679 = vld [vmem:[%s1675 + $0xc] sm:$0xf]
        %1680 = vmatpush.bf16.msra.mxu0 0
        %1681 = vmatpush.bf16.msra.mxu0 0
        %1682 = vmatpush.bf16.msra.mxu0 0
        %1683 = vmatpush.bf16.msra.mxu0 0
        %1684 = vmatpush.bf16.msra.mxu0 0
        %1685 = vmatpush.bf16.msra.mxu0 0
        %1686 = vmatpush.bf16.msra.mxu0 %v295
        %1687 = vmatpush.bf16.msra.mxu0 %v294
        %1688 = vmatmul.bf16.gmra.mxu0 %v1649
        %v1689 = vpop.f32.mrf.mxu0
        %v1690 = vadd.f32 0.0, %v1689
        %v1691 = vpop.f32.mrf.mxu0
        %v1692 = vadd.f32 0.0, %v1691
        %1693 = vmatmul.bf16.gmra.mxu0 %v1652
        %v1694 = vpop.f32.mrf.mxu0
        %v1695 = vadd.f32 0.0, %v1694
        %v1696 = vpop.f32.mrf.mxu0
        %v1697 = vadd.f32 0.0, %v1696
        %1698 = vdwg.mxu0
        %v1699 = vpack.c.bf16 %v1692, %v1690
        %v1700 = vpack.c.bf16 %v1697, %v1695
        %s1701 = scalar_lea.vmem [#allocation2], 400
        %v1702 = vld [vmem:[%s1701] sm:$0xf]
        %v1703 = vld [vmem:[%s1701 + $0x4] sm:$0xf]
        %v1704 = vld [vmem:[%s1701 + $0x8] sm:$0xf]
        %v1705 = vld [vmem:[%s1701 + $0xc] sm:$0xf]
        %v1710 = vunpack.c.l.b16 %v1702
        %v1711 = vunpack.c.l.b16 %v1703
        %v1712 = vunpack.c.l.b16 %v1704
        %v1713 = vunpack.c.l.b16 %v1705
        %v1714 = vpack.c.b16 %v1711, %v1710
        %v1715 = vpack.c.b16 %v1713, %v1712
        %v1717 = vsel %vm1076, %v1714, 0
        %v1720 = vsel %vm1076, %v1715, 0
        %1722 = vmatpush.bf16.msra.mxu0 0
        %1723 = vmatpush.bf16.msra.mxu0 0
        %1724 = vmatpush.bf16.msra.mxu0 0
        %1725 = vmatpush.bf16.msra.mxu0 0
        %1726 = vmatpush.bf16.msra.mxu0 0
        %1727 = vmatpush.bf16.msra.mxu0 0
        %1728 = vmatpush.bf16.msra.mxu0 %v1700
        %1729 = vmatpush.bf16.msra.mxu0 %v1699
        %1730 = vmatmul.bf16.gmra.mxu0 %v1717
        %v1731 = vpop.f32.mrf.mxu0
        %v1732 = vadd.f32 0.0, %v1731
        %v1733 = vpop.f32.mrf.mxu0
        %v1734 = vadd.f32 0.0, %v1733
        %1735 = vmatmul.bf16.gmra.mxu0 %v1720
        %v1736 = vpop.f32.mrf.mxu0
        %v1737 = vadd.f32 0.0, %v1736
        %v1738 = vpop.f32.mrf.mxu0
        %v1739 = vadd.f32 0.0, %v1738
        %1740 = vdwg.mxu0
        %v1745 = vunpack.c.l.b16 %v1676
        %v1746 = vunpack.c.l.b16 %v1677
        %v1747 = vunpack.c.l.b16 %v1678
        %v1748 = vunpack.c.l.b16 %v1679
        %v1749 = vpack.c.b16 %v1746, %v1745
        %v1750 = vpack.c.b16 %v1748, %v1747
        %v1752 = vsel %vm1076, %v1749, 0
        %v1755 = vsel %vm1076, %v1750, 0
        %1757 = vmatpush.bf16.msra.mxu0 0
        %1758 = vmatpush.bf16.msra.mxu0 0
        %1759 = vmatpush.bf16.msra.mxu0 0
        %1760 = vmatpush.bf16.msra.mxu0 0
        %1761 = vmatpush.bf16.msra.mxu0 0
        %1762 = vmatpush.bf16.msra.mxu0 0
        %1763 = vmatpush.bf16.msra.mxu0 %v1674
        %1764 = vmatpush.bf16.msra.mxu0 %v1673
        %1765 = vmatmul.bf16.gmra.mxu0 %v1752
        %v1766 = vpop.f32.mrf.mxu0
        %v1767 = vadd.f32 %v1732, %v1766
        %v1768 = vpop.f32.mrf.mxu0
        %v1769 = vadd.f32 %v1734, %v1768
        %1770 = vmatmul.bf16.gmra.mxu0 %v1755
        %v1771 = vpop.f32.mrf.mxu0
        %v1772 = vadd.f32 %v1737, %v1771
        %v1773 = vpop.f32.mrf.mxu0
        %v1774 = vadd.f32 %v1739, %v1773
        %1775 = vdwg.mxu0
        %1776 = vmatpush.bf16.msra.mxu0 0
        %1777 = vmatpush.bf16.msra.mxu0 0
        %1778 = vmatpush.bf16.msra.mxu0 0
        %1779 = vmatpush.bf16.msra.mxu0 0
        %1780 = vmatpush.bf16.msra.mxu0 0
        %1781 = vmatpush.bf16.msra.mxu0 0
        %1782 = vmatpush.bf16.msra.mxu0 %v407
        %1783 = vmatpush.bf16.msra.mxu0 %v406
        %1784 = vmatmul.bf16.gmra.mxu0 %v1649
        %v1785 = vpop.f32.mrf.mxu0
        %v1786 = vadd.f32 0.0, %v1785
        %v1787 = vpop.f32.mrf.mxu0
        %v1788 = vadd.f32 0.0, %v1787
        %1789 = vmatmul.bf16.gmra.mxu0 %v1652
        %v1790 = vpop.f32.mrf.mxu0
        %v1791 = vadd.f32 0.0, %v1790
        %v1792 = vpop.f32.mrf.mxu0
        %v1793 = vadd.f32 0.0, %v1792
        %1794 = vdwg.mxu0
        %v1795 = vpack.c.bf16 %v1788, %v1786
        %v1796 = vpack.c.bf16 %v1793, %v1791
        %s1797 = scalar_lea.vmem [#allocation2], 416
        %v1798 = vld [vmem:[%s1797] sm:$0xf]
        %v1799 = vld [vmem:[%s1797 + $0x4] sm:$0xf]
        %v1800 = vld [vmem:[%s1797 + $0x8] sm:$0xf]
        %v1801 = vld [vmem:[%s1797 + $0xc] sm:$0xf]
        %v1806 = vunpack.c.l.b16 %v1798
        %v1807 = vunpack.c.l.b16 %v1799
        %v1808 = vunpack.c.l.b16 %v1800
        %v1809 = vunpack.c.l.b16 %v1801
        %v1810 = vpack.c.b16 %v1807, %v1806
        %v1811 = vpack.c.b16 %v1809, %v1808
        %v1813 = vsel %vm1076, %v1810, 0
        %v1816 = vsel %vm1076, %v1811, 0
        %1818 = vmatpush.bf16.msra.mxu0 0
        %1819 = vmatpush.bf16.msra.mxu0 0
        %1820 = vmatpush.bf16.msra.mxu0 0
        %1821 = vmatpush.bf16.msra.mxu0 0
        %1822 = vmatpush.bf16.msra.mxu0 0
        %1823 = vmatpush.bf16.msra.mxu0 0
        %1824 = vmatpush.bf16.msra.mxu0 %v1796
        %1825 = vmatpush.bf16.msra.mxu0 %v1795
        %1826 = vmatmul.bf16.gmra.mxu0 %v1813
        %v1827 = vpop.f32.mrf.mxu0
        %v1828 = vadd.f32 0.0, %v1827
        %v1829 = vpop.f32.mrf.mxu0
        %v1830 = vadd.f32 0.0, %v1829
        %1831 = vmatmul.bf16.gmra.mxu0 %v1816
        %v1832 = vpop.f32.mrf.mxu0
        %v1833 = vadd.f32 0.0, %v1832
        %v1834 = vpop.f32.mrf.mxu0
        %v1835 = vadd.f32 0.0, %v1834
        %1836 = vdwg.mxu0
        %v1837 = vadd.f32 %v1767, %v1828
        %v1838 = vadd.f32 %v1769, %v1830
        %v1839 = vadd.f32 %v1772, %v1833
        %v1840 = vadd.f32 %v1774, %v1835
        %s1841 = scalar_lea.vmem %s2, 256
        %v1842 = vld [vmem:[%s1841] sm:$0xff]
        %v1843 = vld [vmem:[%s1841 + $0x8] sm:$0xff]
        %v1844 = vld [vmem:[%s1841 + $0x10] sm:$0xff]
        %v1845 = vld [vmem:[%s1841 + $0x18] sm:$0xff]
        %1847 = vset.pattern.permute.xlu0 0
        %1848 = vperm.xlu0 %1847, %v1842
        %v1849 = vpop.permute.xlu0 %1848
        %1852 = vset.pattern.permute.xlu0 0
        %1853 = vperm.xlu0 %1852, %v1843
        %v1854 = vpop.permute.xlu0 %1853
        %1857 = vset.pattern.permute.xlu0 0
        %1858 = vperm.xlu0 %1857, %v1844
        %v1859 = vpop.permute.xlu0 %1858
        %1862 = vset.pattern.permute.xlu0 0
        %1863 = vperm.xlu0 %1862, %v1845
        %v1864 = vpop.permute.xlu0 %1863
        %v1866 = vadd.f32 %v1837, %v1849
        %v1867 = vadd.f32 %v1838, %v1854
        %v1868 = vadd.f32 %v1839, %v1859
        %v1869 = vadd.f32 %v1840, %v1864
        %v1870 = vmax.f32 %v1866, 0.0
        %v1871 = vmax.f32 %v1867, 0.0
        %v1872 = vmax.f32 %v1868, 0.0
        %v1873 = vmax.f32 %v1869, 0.0
        %v1874 = vpack.c.bf16 %v1871, %v1870
        %v1875 = vpack.c.bf16 %v1873, %v1872
        %v1877 = vsel %vm526, %v1874, 0
        %v1880 = vsel %vm526, %v1875, 0
        %1882 = vmatpush.bf16.msra.mxu0 0
        %1883 = vmatpush.bf16.msra.mxu0 0
        %1884 = vmatpush.bf16.msra.mxu0 0
        %1885 = vmatpush.bf16.msra.mxu0 0
        %1886 = vmatpush.bf16.msra.mxu0 0
        %1887 = vmatpush.bf16.msra.mxu0 0
        %1888 = vmatpush.bf16.msra.mxu0 0
        %1889 = vmatpush.bf16.msra.mxu0 %v492
        %1890 = vmatmul.bf16.gmra.mxu0 %v1877
        %v1891 = vpop.f32.mrf.mxu0
        %v1892 = vadd.f32 0.0, %v1891
        %v1893 = vpop.f32.mrf.mxu0
        %v1894 = vadd.f32 0.0, %v1893
        %1895 = vmatmul.bf16.gmra.mxu0 %v1880
        %v1896 = vpop.f32.mrf.mxu0
        %v1897 = vadd.f32 0.0, %v1896
        %v1898 = vpop.f32.mrf.mxu0
        %v1899 = vadd.f32 0.0, %v1898
        %1900 = vdwg.mxu0
        %v1901 = vpack.c.bf16 %v1894, %v1892
        %v1902 = vpack.c.bf16 %v1899, %v1897
        %s1903 = scalar_lea.vmem [#allocation2], 432
        %v1904 = vld [vmem:[%s1903] sm:$0xf]
        %v1905 = vld [vmem:[%s1903 + $0x4] sm:$0xf]
        %v1906 = vld [vmem:[%s1903 + $0x8] sm:$0xf]
        %v1907 = vld [vmem:[%s1903 + $0xc] sm:$0xf]
        %s1908 = scalar_lea.vmem [#allocation2], 448
        %v1909 = vld [vmem:[%s1908] sm:$0xf]
        %v1910 = vld [vmem:[%s1908 + $0x4] sm:$0xf]
        %v1911 = vld [vmem:[%s1908 + $0x8] sm:$0xf]
        %v1912 = vld [vmem:[%s1908 + $0xc] sm:$0xf]
        %v1917 = vunpack.c.l.b16 %v1909
        %v1918 = vunpack.c.l.b16 %v1910
        %v1919 = vunpack.c.l.b16 %v1911
        %v1920 = vunpack.c.l.b16 %v1912
        %v1921 = vpack.c.b16 %v1918, %v1917
        %v1922 = vpack.c.b16 %v1920, %v1919
        %v1924 = vsel %vm1076, %v1921, 0
        %v1927 = vsel %vm1076, %v1922, 0
        %1929 = vmatpush.bf16.msra.mxu0 0
        %1930 = vmatpush.bf16.msra.mxu0 0
        %1931 = vmatpush.bf16.msra.mxu0 0
        %1932 = vmatpush.bf16.msra.mxu0 0
        %1933 = vmatpush.bf16.msra.mxu0 0
        %1934 = vmatpush.bf16.msra.mxu0 0
        %1935 = vmatpush.bf16.msra.mxu0 %v1875
        %1936 = vmatpush.bf16.msra.mxu0 %v1874
        %1937 = vmatmul.bf16.gmra.mxu0 %v1924
        %v1938 = vpop.f32.mrf.mxu0
        %v1939 = vadd.f32 0.0, %v1938
        %v1940 = vpop.f32.mrf.mxu0
        %v1941 = vadd.f32 0.0, %v1940
        %1942 = vmatmul.bf16.gmra.mxu0 %v1927
        %v1943 = vpop.f32.mrf.mxu0
        %v1944 = vadd.f32 0.0, %v1943
        %v1945 = vpop.f32.mrf.mxu0
        %v1946 = vadd.f32 0.0, %v1945
        %1947 = vdwg.mxu0
        %v1952 = vunpack.c.l.b16 %v1904
        %v1953 = vunpack.c.l.b16 %v1905
        %v1954 = vunpack.c.l.b16 %v1906
        %v1955 = vunpack.c.l.b16 %v1907
        %v1956 = vpack.c.b16 %v1953, %v1952
        %v1957 = vpack.c.b16 %v1955, %v1954
        %v1959 = vsel %vm1076, %v1956, 0
        %v1962 = vsel %vm1076, %v1957, 0
        %1964 = vmatpush.bf16.msra.mxu0 0
        %1965 = vmatpush.bf16.msra.mxu0 0
        %1966 = vmatpush.bf16.msra.mxu0 0
        %1967 = vmatpush.bf16.msra.mxu0 0
        %1968 = vmatpush.bf16.msra.mxu0 0
        %1969 = vmatpush.bf16.msra.mxu0 0
        %1970 = vmatpush.bf16.msra.mxu0 %v1902
        %1971 = vmatpush.bf16.msra.mxu0 %v1901
        %1972 = vmatmul.bf16.gmra.mxu0 %v1959
        %v1973 = vpop.f32.mrf.mxu0
        %v1974 = vadd.f32 %v1939, %v1973
        %v1975 = vpop.f32.mrf.mxu0
        %v1976 = vadd.f32 %v1941, %v1975
        %1977 = vmatmul.bf16.gmra.mxu0 %v1962
        %v1978 = vpop.f32.mrf.mxu0
        %v1979 = vadd.f32 %v1944, %v1978
        %v1980 = vpop.f32.mrf.mxu0
        %v1981 = vadd.f32 %v1946, %v1980
        %1982 = vdwg.mxu0
        %1983 = vmatpush.bf16.msra.mxu0 0
        %1984 = vmatpush.bf16.msra.mxu0 0
        %1985 = vmatpush.bf16.msra.mxu0 0
        %1986 = vmatpush.bf16.msra.mxu0 0
        %1987 = vmatpush.bf16.msra.mxu0 0
        %1988 = vmatpush.bf16.msra.mxu0 0
        %1989 = vmatpush.bf16.msra.mxu0 0
        %1990 = vmatpush.bf16.msra.mxu0 %v583
        %1991 = vmatmul.bf16.gmra.mxu0 %v1877
        %v1992 = vpop.f32.mrf.mxu0
        %v1993 = vadd.f32 0.0, %v1992
        %v1994 = vpop.f32.mrf.mxu0
        %v1995 = vadd.f32 0.0, %v1994
        %1996 = vmatmul.bf16.gmra.mxu0 %v1880
        %v1997 = vpop.f32.mrf.mxu0
        %v1998 = vadd.f32 0.0, %v1997
        %v1999 = vpop.f32.mrf.mxu0
        %v2000 = vadd.f32 0.0, %v1999
        %2001 = vdwg.mxu0
        %v2002 = vpack.c.bf16 %v1995, %v1993
        %v2003 = vpack.c.bf16 %v2000, %v1998
        %s2004 = scalar_lea.vmem [#allocation2], 464
        %v2005 = vld [vmem:[%s2004] sm:$0xf]
        %v2006 = vld [vmem:[%s2004 + $0x4] sm:$0xf]
        %v2007 = vld [vmem:[%s2004 + $0x8] sm:$0xf]
        %v2008 = vld [vmem:[%s2004 + $0xc] sm:$0xf]
        %v2013 = vunpack.c.l.b16 %v2005
        %v2014 = vunpack.c.l.b16 %v2006
        %v2015 = vunpack.c.l.b16 %v2007
        %v2016 = vunpack.c.l.b16 %v2008
        %v2017 = vpack.c.b16 %v2014, %v2013
        %v2018 = vpack.c.b16 %v2016, %v2015
        %v2020 = vsel %vm1076, %v2017, 0
        %v2023 = vsel %vm1076, %v2018, 0
        %2025 = vmatpush.bf16.msra.mxu0 0
        %2026 = vmatpush.bf16.msra.mxu0 0
        %2027 = vmatpush.bf16.msra.mxu0 0
        %2028 = vmatpush.bf16.msra.mxu0 0
        %2029 = vmatpush.bf16.msra.mxu0 0
        %2030 = vmatpush.bf16.msra.mxu0 0
        %2031 = vmatpush.bf16.msra.mxu0 %v2003
        %2032 = vmatpush.bf16.msra.mxu0 %v2002
        %2033 = vmatmul.bf16.gmra.mxu0 %v2020
        %v2034 = vpop.f32.mrf.mxu0
        %v2035 = vadd.f32 0.0, %v2034
        %v2036 = vpop.f32.mrf.mxu0
        %v2037 = vadd.f32 0.0, %v2036
        %2038 = vmatmul.bf16.gmra.mxu0 %v2023
        %v2039 = vpop.f32.mrf.mxu0
        %v2040 = vadd.f32 0.0, %v2039
        %v2041 = vpop.f32.mrf.mxu0
        %v2042 = vadd.f32 0.0, %v2041
        %2043 = vdwg.mxu0
        %v2044 = vadd.f32 %v1974, %v2035
        %v2045 = vadd.f32 %v1976, %v2037
        %v2046 = vadd.f32 %v1979, %v2040
        %v2047 = vadd.f32 %v1981, %v2042
        %s2048 = scalar_lea.vmem %s2, 288
        %v2049 = vld [vmem:[%s2048] sm:$0xff]
        %v2050 = vld [vmem:[%s2048 + $0x8] sm:$0xff]
        %v2051 = vld [vmem:[%s2048 + $0x10] sm:$0xff]
        %v2052 = vld [vmem:[%s2048 + $0x18] sm:$0xff]
        %2054 = vset.pattern.permute.xlu0 0
        %2055 = vperm.xlu0 %2054, %v2049
        %v2056 = vpop.permute.xlu0 %2055
        %2059 = vset.pattern.permute.xlu0 0
        %2060 = vperm.xlu0 %2059, %v2050
        %v2061 = vpop.permute.xlu0 %2060
        %2064 = vset.pattern.permute.xlu0 0
        %2065 = vperm.xlu0 %2064, %v2051
        %v2066 = vpop.permute.xlu0 %2065
        %2069 = vset.pattern.permute.xlu0 0
        %2070 = vperm.xlu0 %2069, %v2052
        %v2071 = vpop.permute.xlu0 %2070
        %v2073 = vadd.f32 %v2044, %v2056
        %v2074 = vadd.f32 %v2045, %v2061
        %v2075 = vadd.f32 %v2046, %v2066
        %v2076 = vadd.f32 %v2047, %v2071
        %v2077 = vmax.f32 %v2073, 0.0
        %v2078 = vmax.f32 %v2074, 0.0
        %v2079 = vmax.f32 %v2075, 0.0
        %v2080 = vmax.f32 %v2076, 0.0
        %v2081 = vpack.c.bf16 %v2078, %v2077
        %v2082 = vpack.c.bf16 %v2080, %v2079
        %v2084 = vsel %vm526, %v2081, 0
        %v2087 = vsel %vm526, %v2082, 0
        %2089 = vmatpush.bf16.msra.mxu0 0
        %2090 = vmatpush.bf16.msra.mxu0 0
        %2091 = vmatpush.bf16.msra.mxu0 0
        %2092 = vmatpush.bf16.msra.mxu0 0
        %2093 = vmatpush.bf16.msra.mxu0 0
        %2094 = vmatpush.bf16.msra.mxu0 0
        %2095 = vmatpush.bf16.msra.mxu0 0
        %2096 = vmatpush.bf16.msra.mxu0 %v492
        %2097 = vmatmul.bf16.gmra.mxu0 %v2084
        %v2098 = vpop.f32.mrf.mxu0
        %v2099 = vadd.f32 0.0, %v2098
        %v2100 = vpop.f32.mrf.mxu0
        %v2101 = vadd.f32 0.0, %v2100
        %2102 = vmatmul.bf16.gmra.mxu0 %v2087
        %v2103 = vpop.f32.mrf.mxu0
        %v2104 = vadd.f32 0.0, %v2103
        %v2105 = vpop.f32.mrf.mxu0
        %v2106 = vadd.f32 0.0, %v2105
        %2107 = vdwg.mxu0
        %v2108 = vpack.c.bf16 %v2101, %v2099
        %v2109 = vpack.c.bf16 %v2106, %v2104
        %s2110 = scalar_lea.vmem [#allocation2], 480
        %v2111 = vld [vmem:[%s2110] sm:$0xf]
        %v2112 = vld [vmem:[%s2110 + $0x4] sm:$0xf]
        %v2113 = vld [vmem:[%s2110 + $0x8] sm:$0xf]
        %v2114 = vld [vmem:[%s2110 + $0xc] sm:$0xf]
        %s2115 = scalar_lea.vmem [#allocation2], 496
        %v2116 = vld [vmem:[%s2115] sm:$0xf]
        %v2117 = vld [vmem:[%s2115 + $0x4] sm:$0xf]
        %v2118 = vld [vmem:[%s2115 + $0x8] sm:$0xf]
        %v2119 = vld [vmem:[%s2115 + $0xc] sm:$0xf]
        %v2124 = vunpack.c.l.b16 %v2116
        %v2125 = vunpack.c.l.b16 %v2117
        %v2126 = vunpack.c.l.b16 %v2118
        %v2127 = vunpack.c.l.b16 %v2119
        %v2128 = vpack.c.b16 %v2125, %v2124
        %v2129 = vpack.c.b16 %v2127, %v2126
        %v2131 = vsel %vm1076, %v2128, 0
        %v2134 = vsel %vm1076, %v2129, 0
        %2136 = vmatpush.bf16.msra.mxu0 0
        %2137 = vmatpush.bf16.msra.mxu0 0
        %2138 = vmatpush.bf16.msra.mxu0 0
        %2139 = vmatpush.bf16.msra.mxu0 0
        %2140 = vmatpush.bf16.msra.mxu0 0
        %2141 = vmatpush.bf16.msra.mxu0 0
        %2142 = vmatpush.bf16.msra.mxu0 %v2082
        %2143 = vmatpush.bf16.msra.mxu0 %v2081
        %2144 = vmatmul.bf16.gmra.mxu0 %v2131
        %v2145 = vpop.f32.mrf.mxu0
        %v2146 = vadd.f32 0.0, %v2145
        %v2147 = vpop.f32.mrf.mxu0
        %v2148 = vadd.f32 0.0, %v2147
        %2149 = vmatmul.bf16.gmra.mxu0 %v2134
        %v2150 = vpop.f32.mrf.mxu0
        %v2151 = vadd.f32 0.0, %v2150
        %v2152 = vpop.f32.mrf.mxu0
        %v2153 = vadd.f32 0.0, %v2152
        %2154 = vdwg.mxu0
        %v2159 = vunpack.c.l.b16 %v2111
        %v2160 = vunpack.c.l.b16 %v2112
        %v2161 = vunpack.c.l.b16 %v2113
        %v2162 = vunpack.c.l.b16 %v2114
        %v2163 = vpack.c.b16 %v2160, %v2159
        %v2164 = vpack.c.b16 %v2162, %v2161
        %v2166 = vsel %vm1076, %v2163, 0
        %v2169 = vsel %vm1076, %v2164, 0
        %2171 = vmatpush.bf16.msra.mxu0 0
        %2172 = vmatpush.bf16.msra.mxu0 0
        %2173 = vmatpush.bf16.msra.mxu0 0
        %2174 = vmatpush.bf16.msra.mxu0 0
        %2175 = vmatpush.bf16.msra.mxu0 0
        %2176 = vmatpush.bf16.msra.mxu0 0
        %2177 = vmatpush.bf16.msra.mxu0 %v2109
        %2178 = vmatpush.bf16.msra.mxu0 %v2108
        %2179 = vmatmul.bf16.gmra.mxu0 %v2166
        %v2180 = vpop.f32.mrf.mxu0
        %v2181 = vadd.f32 %v2146, %v2180
        %v2182 = vpop.f32.mrf.mxu0
        %v2183 = vadd.f32 %v2148, %v2182
        %2184 = vmatmul.bf16.gmra.mxu0 %v2169
        %v2185 = vpop.f32.mrf.mxu0
        %v2186 = vadd.f32 %v2151, %v2185
        %v2187 = vpop.f32.mrf.mxu0
        %v2188 = vadd.f32 %v2153, %v2187
        %2189 = vdwg.mxu0
        %2190 = vmatpush.bf16.msra.mxu0 0
        %2191 = vmatpush.bf16.msra.mxu0 0
        %2192 = vmatpush.bf16.msra.mxu0 0
        %2193 = vmatpush.bf16.msra.mxu0 0
        %2194 = vmatpush.bf16.msra.mxu0 0
        %2195 = vmatpush.bf16.msra.mxu0 0
        %2196 = vmatpush.bf16.msra.mxu0 0
        %2197 = vmatpush.bf16.msra.mxu0 %v583
        %2198 = vmatmul.bf16.gmra.mxu0 %v2084
        %v2199 = vpop.f32.mrf.mxu0
        %v2200 = vadd.f32 0.0, %v2199
        %v2201 = vpop.f32.mrf.mxu0
        %v2202 = vadd.f32 0.0, %v2201
        %2203 = vmatmul.bf16.gmra.mxu0 %v2087
        %v2204 = vpop.f32.mrf.mxu0
        %v2205 = vadd.f32 0.0, %v2204
        %v2206 = vpop.f32.mrf.mxu0
        %v2207 = vadd.f32 0.0, %v2206
        %2208 = vdwg.mxu0
        %v2209 = vpack.c.bf16 %v2202, %v2200
        %v2210 = vpack.c.bf16 %v2207, %v2205
        %s2211 = scalar_lea.vmem [#allocation2], 512
        %v2212 = vld [vmem:[%s2211] sm:$0xf]
        %v2213 = vld [vmem:[%s2211 + $0x4] sm:$0xf]
        %v2214 = vld [vmem:[%s2211 + $0x8] sm:$0xf]
        %v2215 = vld [vmem:[%s2211 + $0xc] sm:$0xf]
        %v2220 = vunpack.c.l.b16 %v2212
        %v2221 = vunpack.c.l.b16 %v2213
        %v2222 = vunpack.c.l.b16 %v2214
        %v2223 = vunpack.c.l.b16 %v2215
        %v2224 = vpack.c.b16 %v2221, %v2220
        %v2225 = vpack.c.b16 %v2223, %v2222
        %v2227 = vsel %vm1076, %v2224, 0
        %v2230 = vsel %vm1076, %v2225, 0
        %2232 = vmatpush.bf16.msra.mxu0 0
        %2233 = vmatpush.bf16.msra.mxu0 0
        %2234 = vmatpush.bf16.msra.mxu0 0
        %2235 = vmatpush.bf16.msra.mxu0 0
        %2236 = vmatpush.bf16.msra.mxu0 0
        %2237 = vmatpush.bf16.msra.mxu0 0
        %2238 = vmatpush.bf16.msra.mxu0 %v2210
        %2239 = vmatpush.bf16.msra.mxu0 %v2209
        %2240 = vmatmul.bf16.gmra.mxu0 %v2227
        %v2241 = vpop.f32.mrf.mxu0
        %v2242 = vadd.f32 0.0, %v2241
        %v2243 = vpop.f32.mrf.mxu0
        %v2244 = vadd.f32 0.0, %v2243
        %2245 = vmatmul.bf16.gmra.mxu0 %v2230
        %v2246 = vpop.f32.mrf.mxu0
        %v2247 = vadd.f32 0.0, %v2246
        %v2248 = vpop.f32.mrf.mxu0
        %v2249 = vadd.f32 0.0, %v2248
        %2250 = vdwg.mxu0
        %v2251 = vadd.f32 %v2181, %v2242
        %v2252 = vadd.f32 %v2183, %v2244
        %v2253 = vadd.f32 %v2186, %v2247
        %v2254 = vadd.f32 %v2188, %v2249
        %s2255 = scalar_lea.vmem %s2, 320
        %v2256 = vld [vmem:[%s2255] sm:$0xff]
        %v2257 = vld [vmem:[%s2255 + $0x8] sm:$0xff]
        %v2258 = vld [vmem:[%s2255 + $0x10] sm:$0xff]
        %v2259 = vld [vmem:[%s2255 + $0x18] sm:$0xff]
        %2261 = vset.pattern.permute.xlu0 0
        %2262 = vperm.xlu0 %2261, %v2256
        %v2263 = vpop.permute.xlu0 %2262
        %2266 = vset.pattern.permute.xlu0 0
        %2267 = vperm.xlu0 %2266, %v2257
        %v2268 = vpop.permute.xlu0 %2267
        %2271 = vset.pattern.permute.xlu0 0
        %2272 = vperm.xlu0 %2271, %v2258
        %v2273 = vpop.permute.xlu0 %2272
        %2276 = vset.pattern.permute.xlu0 0
        %2277 = vperm.xlu0 %2276, %v2259
        %v2278 = vpop.permute.xlu0 %2277
        %v2280 = vadd.f32 %v2251, %v2263
        %v2281 = vadd.f32 %v2252, %v2268
        %v2282 = vadd.f32 %v2253, %v2273
        %v2283 = vadd.f32 %v2254, %v2278
        %v2284 = vmax.f32 %v2280, 0.0
        %v2285 = vmax.f32 %v2281, 0.0
        %v2286 = vmax.f32 %v2282, 0.0
        %v2287 = vmax.f32 %v2283, 0.0
        %s2288 = scalar_lea.vmem [#allocation2], 528
        %v2289 = vld [vmem:[%s2288] sm:$0xf]
        %v2290 = vld [vmem:[%s2288 + $0x4] sm:$0xf]
        %v2291 = vld [vmem:[%s2288 + $0x8] sm:$0xf]
        %v2292 = vld [vmem:[%s2288 + $0xc] sm:$0xf]
        %s2293 = scalar_lea.vmem [#allocation2], 544
        %v2294 = vld [vmem:[%s2293] sm:$0xf]
        %v2295 = vld [vmem:[%s2293 + $0x4] sm:$0xf]
        %v2296 = vld [vmem:[%s2293 + $0x8] sm:$0xf]
        %v2297 = vld [vmem:[%s2293 + $0xc] sm:$0xf]
        %v2302 = vunpack.c.l.b16 %v2294
        %v2303 = vunpack.c.l.b16 %v2295
        %v2304 = vunpack.c.l.b16 %v2296
        %v2305 = vunpack.c.l.b16 %v2297
        %v2306 = vpack.c.b16 %v2303, %v2302
        %v2307 = vpack.c.b16 %v2305, %v2304
        %v2309 = vsel %vm1076, %v2306, 0
        %v2312 = vsel %vm1076, %v2307, 0
        %2314 = vmatpush.bf16.msra.mxu0 0
        %2315 = vmatpush.bf16.msra.mxu0 0
        %2316 = vmatpush.bf16.msra.mxu0 0
        %2317 = vmatpush.bf16.msra.mxu0 0
        %2318 = vmatpush.bf16.msra.mxu0 0
        %2319 = vmatpush.bf16.msra.mxu0 0
        %2320 = vmatpush.bf16.msra.mxu0 %v1700
        %2321 = vmatpush.bf16.msra.mxu0 %v1699
        %2322 = vmatmul.bf16.gmra.mxu0 %v2309
        %v2323 = vpop.f32.mrf.mxu0
        %v2324 = vadd.f32 0.0, %v2323
        %v2325 = vpop.f32.mrf.mxu0
        %v2326 = vadd.f32 0.0, %v2325
        %2327 = vmatmul.bf16.gmra.mxu0 %v2312
        %v2328 = vpop.f32.mrf.mxu0
        %v2329 = vadd.f32 0.0, %v2328
        %v2330 = vpop.f32.mrf.mxu0
        %v2331 = vadd.f32 0.0, %v2330
        %2332 = vdwg.mxu0
        %v2337 = vunpack.c.l.b16 %v2289
        %v2338 = vunpack.c.l.b16 %v2290
        %v2339 = vunpack.c.l.b16 %v2291
        %v2340 = vunpack.c.l.b16 %v2292
        %v2341 = vpack.c.b16 %v2338, %v2337
        %v2342 = vpack.c.b16 %v2340, %v2339
        %v2344 = vsel %vm1076, %v2341, 0
        %v2347 = vsel %vm1076, %v2342, 0
        %2349 = vmatpush.bf16.msra.mxu0 0
        %2350 = vmatpush.bf16.msra.mxu0 0
        %2351 = vmatpush.bf16.msra.mxu0 0
        %2352 = vmatpush.bf16.msra.mxu0 0
        %2353 = vmatpush.bf16.msra.mxu0 0
        %2354 = vmatpush.bf16.msra.mxu0 0
        %2355 = vmatpush.bf16.msra.mxu0 %v1674
        %2356 = vmatpush.bf16.msra.mxu0 %v1673
        %2357 = vmatmul.bf16.gmra.mxu0 %v2344
        %v2358 = vpop.f32.mrf.mxu0
        %v2359 = vadd.f32 %v2324, %v2358
        %v2360 = vpop.f32.mrf.mxu0
        %v2361 = vadd.f32 %v2326, %v2360
        %2362 = vmatmul.bf16.gmra.mxu0 %v2347
        %v2363 = vpop.f32.mrf.mxu0
        %v2364 = vadd.f32 %v2329, %v2363
        %v2365 = vpop.f32.mrf.mxu0
        %v2366 = vadd.f32 %v2331, %v2365
        %2367 = vdwg.mxu0
        %s2368 = scalar_lea.vmem [#allocation2], 560
        %v2369 = vld [vmem:[%s2368] sm:$0xf]
        %v2370 = vld [vmem:[%s2368 + $0x4] sm:$0xf]
        %v2371 = vld [vmem:[%s2368 + $0x8] sm:$0xf]
        %v2372 = vld [vmem:[%s2368 + $0xc] sm:$0xf]
        %v2377 = vunpack.c.l.b16 %v2369
        %v2378 = vunpack.c.l.b16 %v2370
        %v2379 = vunpack.c.l.b16 %v2371
        %v2380 = vunpack.c.l.b16 %v2372
        %v2381 = vpack.c.b16 %v2378, %v2377
        %v2382 = vpack.c.b16 %v2380, %v2379
        %v2384 = vsel %vm1076, %v2381, 0
        %v2387 = vsel %vm1076, %v2382, 0
        %2389 = vmatpush.bf16.msra.mxu0 0
        %2390 = vmatpush.bf16.msra.mxu0 0
        %2391 = vmatpush.bf16.msra.mxu0 0
        %2392 = vmatpush.bf16.msra.mxu0 0
        %2393 = vmatpush.bf16.msra.mxu0 0
        %2394 = vmatpush.bf16.msra.mxu0 0
        %2395 = vmatpush.bf16.msra.mxu0 %v1796
        %2396 = vmatpush.bf16.msra.mxu0 %v1795
        %2397 = vmatmul.bf16.gmra.mxu0 %v2384
        %v2398 = vpop.f32.mrf.mxu0
        %v2399 = vadd.f32 0.0, %v2398
        %v2400 = vpop.f32.mrf.mxu0
        %v2401 = vadd.f32 0.0, %v2400
        %2402 = vmatmul.bf16.gmra.mxu0 %v2387
        %v2403 = vpop.f32.mrf.mxu0
        %v2404 = vadd.f32 0.0, %v2403
        %v2405 = vpop.f32.mrf.mxu0
        %v2406 = vadd.f32 0.0, %v2405
        %2407 = vdwg.mxu0
        %v2408 = vadd.f32 %v2359, %v2399
        %v2409 = vadd.f32 %v2361, %v2401
        %v2410 = vadd.f32 %v2364, %v2404
        %v2411 = vadd.f32 %v2366, %v2406
        %s2412 = scalar_lea.vmem %s2, 352
        %v2413 = vld [vmem:[%s2412] sm:$0xff]
        %v2414 = vld [vmem:[%s2412 + $0x8] sm:$0xff]
        %v2415 = vld [vmem:[%s2412 + $0x10] sm:$0xff]
        %v2416 = vld [vmem:[%s2412 + $0x18] sm:$0xff]
        %2418 = vset.pattern.permute.xlu0 0
        %2419 = vperm.xlu0 %2418, %v2413
        %v2420 = vpop.permute.xlu0 %2419
        %2423 = vset.pattern.permute.xlu0 0
        %2424 = vperm.xlu0 %2423, %v2414
        %v2425 = vpop.permute.xlu0 %2424
        %2428 = vset.pattern.permute.xlu0 0
        %2429 = vperm.xlu0 %2428, %v2415
        %v2430 = vpop.permute.xlu0 %2429
        %2433 = vset.pattern.permute.xlu0 0
        %2434 = vperm.xlu0 %2433, %v2416
        %v2435 = vpop.permute.xlu0 %2434
        %v2437 = vadd.f32 %v2408, %v2420
        %v2438 = vadd.f32 %v2409, %v2425
        %v2439 = vadd.f32 %v2410, %v2430
        %v2440 = vadd.f32 %v2411, %v2435
        %v2441 = vadd.f32 %v2284, %v2437
        %v2442 = vadd.f32 %v2285, %v2438
        %v2443 = vadd.f32 %v2286, %v2439
        %v2444 = vadd.f32 %v2287, %v2440
        %v2445 = vpack.c.bf16 %v2442, %v2441
        %v2446 = vpack.c.bf16 %v2444, %v2443
        %v2448 = vsel %vm526, %v2445, 0
        %v2451 = vsel %vm526, %v2446, 0
        %2453 = vmatpush.bf16.msra.mxu0 0
        %2454 = vmatpush.bf16.msra.mxu0 0
        %2455 = vmatpush.bf16.msra.mxu0 0
        %2456 = vmatpush.bf16.msra.mxu0 0
        %2457 = vmatpush.bf16.msra.mxu0 0
        %2458 = vmatpush.bf16.msra.mxu0 0
        %2459 = vmatpush.bf16.msra.mxu0 0
        %2460 = vmatpush.bf16.msra.mxu0 %v238
        %2461 = vmatmul.bf16.gmra.mxu0 %v2448
        %v2462 = vpop.f32.mrf.mxu0
        %v2463 = vadd.f32 0.0, %v2462
        %v2464 = vpop.f32.mrf.mxu0
        %v2465 = vadd.f32 0.0, %v2464
        %2466 = vmatmul.bf16.gmra.mxu0 %v2451
        %v2467 = vpop.f32.mrf.mxu0
        %v2468 = vadd.f32 0.0, %v2467
        %v2469 = vpop.f32.mrf.mxu0
        %v2470 = vadd.f32 0.0, %v2469
        %2471 = vdwg.mxu0
        %v2472 = vpack.c.bf16 %v2465, %v2463
        %v2473 = vpack.c.bf16 %v2470, %v2468
        %s2474 = scalar_lea.vmem [#allocation2], 576
        %v2475 = vld [vmem:[%s2474] sm:$0xf]
        %v2476 = vld [vmem:[%s2474 + $0x4] sm:$0xf]
        %v2477 = vld [vmem:[%s2474 + $0x8] sm:$0xf]
        %v2478 = vld [vmem:[%s2474 + $0xc] sm:$0xf]
        %2479 = vmatpush.bf16.msra.mxu0 0
        %2480 = vmatpush.bf16.msra.mxu0 0
        %2481 = vmatpush.bf16.msra.mxu0 0
        %2482 = vmatpush.bf16.msra.mxu0 0
        %2483 = vmatpush.bf16.msra.mxu0 0
        %2484 = vmatpush.bf16.msra.mxu0 0
        %2485 = vmatpush.bf16.msra.mxu0 0
        %2486 = vmatpush.bf16.msra.mxu0 %v294
        %2487 = vmatmul.bf16.gmra.mxu0 %v2448
        %v2488 = vpop.f32.mrf.mxu0
        %v2489 = vadd.f32 0.0, %v2488
        %v2490 = vpop.f32.mrf.mxu0
        %v2491 = vadd.f32 0.0, %v2490
        %2492 = vmatmul.bf16.gmra.mxu0 %v2451
        %v2493 = vpop.f32.mrf.mxu0
        %v2494 = vadd.f32 0.0, %v2493
        %v2495 = vpop.f32.mrf.mxu0
        %v2496 = vadd.f32 0.0, %v2495
        %2497 = vdwg.mxu0
        %v2498 = vpack.c.bf16 %v2491, %v2489
        %v2499 = vpack.c.bf16 %v2496, %v2494
        %s2500 = scalar_lea.vmem [#allocation2], 592
        %v2501 = vld [vmem:[%s2500] sm:$0xf]
        %v2502 = vld [vmem:[%s2500 + $0x4] sm:$0xf]
        %v2503 = vld [vmem:[%s2500 + $0x8] sm:$0xf]
        %v2504 = vld [vmem:[%s2500 + $0xc] sm:$0xf]
        %v2509 = vunpack.c.l.b16 %v2501
        %v2510 = vunpack.c.l.b16 %v2502
        %v2511 = vunpack.c.l.b16 %v2503
        %v2512 = vunpack.c.l.b16 %v2504
        %v2513 = vpack.c.b16 %v2510, %v2509
        %v2514 = vpack.c.b16 %v2512, %v2511
        %v2516 = vsel %vm1076, %v2513, 0
        %v2519 = vsel %vm1076, %v2514, 0
        %2521 = vmatpush.bf16.msra.mxu0 0
        %2522 = vmatpush.bf16.msra.mxu0 0
        %2523 = vmatpush.bf16.msra.mxu0 0
        %2524 = vmatpush.bf16.msra.mxu0 0
        %2525 = vmatpush.bf16.msra.mxu0 0
        %2526 = vmatpush.bf16.msra.mxu0 0
        %2527 = vmatpush.bf16.msra.mxu0 %v2499
        %2528 = vmatpush.bf16.msra.mxu0 %v2498
        %2529 = vmatmul.bf16.gmra.mxu0 %v2516
        %v2530 = vpop.f32.mrf.mxu0
        %v2531 = vadd.f32 0.0, %v2530
        %v2532 = vpop.f32.mrf.mxu0
        %v2533 = vadd.f32 0.0, %v2532
        %2534 = vmatmul.bf16.gmra.mxu0 %v2519
        %v2535 = vpop.f32.mrf.mxu0
        %v2536 = vadd.f32 0.0, %v2535
        %v2537 = vpop.f32.mrf.mxu0
        %v2538 = vadd.f32 0.0, %v2537
        %2539 = vdwg.mxu0
        %v2544 = vunpack.c.l.b16 %v2475
        %v2545 = vunpack.c.l.b16 %v2476
        %v2546 = vunpack.c.l.b16 %v2477
        %v2547 = vunpack.c.l.b16 %v2478
        %v2548 = vpack.c.b16 %v2545, %v2544
        %v2549 = vpack.c.b16 %v2547, %v2546
        %v2551 = vsel %vm1076, %v2548, 0
        %v2554 = vsel %vm1076, %v2549, 0
        %2556 = vmatpush.bf16.msra.mxu0 0
        %2557 = vmatpush.bf16.msra.mxu0 0
        %2558 = vmatpush.bf16.msra.mxu0 0
        %2559 = vmatpush.bf16.msra.mxu0 0
        %2560 = vmatpush.bf16.msra.mxu0 0
        %2561 = vmatpush.bf16.msra.mxu0 0
        %2562 = vmatpush.bf16.msra.mxu0 %v2473
        %2563 = vmatpush.bf16.msra.mxu0 %v2472
        %2564 = vmatmul.bf16.gmra.mxu0 %v2551
        %v2565 = vpop.f32.mrf.mxu0
        %v2566 = vadd.f32 %v2531, %v2565
        %v2567 = vpop.f32.mrf.mxu0
        %v2568 = vadd.f32 %v2533, %v2567
        %2569 = vmatmul.bf16.gmra.mxu0 %v2554
        %v2570 = vpop.f32.mrf.mxu0
        %v2571 = vadd.f32 %v2536, %v2570
        %v2572 = vpop.f32.mrf.mxu0
        %v2573 = vadd.f32 %v2538, %v2572
        %2574 = vdwg.mxu0
        %2575 = vmatpush.bf16.msra.mxu0 0
        %2576 = vmatpush.bf16.msra.mxu0 0
        %2577 = vmatpush.bf16.msra.mxu0 0
        %2578 = vmatpush.bf16.msra.mxu0 0
        %2579 = vmatpush.bf16.msra.mxu0 0
        %2580 = vmatpush.bf16.msra.mxu0 0
        %2581 = vmatpush.bf16.msra.mxu0 0
        %2582 = vmatpush.bf16.msra.mxu0 %v406
        %2583 = vmatmul.bf16.gmra.mxu0 %v2448
        %v2584 = vpop.f32.mrf.mxu0
        %v2585 = vadd.f32 0.0, %v2584
        %v2586 = vpop.f32.mrf.mxu0
        %v2587 = vadd.f32 0.0, %v2586
        %2588 = vmatmul.bf16.gmra.mxu0 %v2451
        %v2589 = vpop.f32.mrf.mxu0
        %v2590 = vadd.f32 0.0, %v2589
        %v2591 = vpop.f32.mrf.mxu0
        %v2592 = vadd.f32 0.0, %v2591
        %2593 = vdwg.mxu0
        %v2594 = vpack.c.bf16 %v2587, %v2585
        %v2595 = vpack.c.bf16 %v2592, %v2590
        %s2596 = scalar_lea.vmem [#allocation2], 608
        %v2597 = vld [vmem:[%s2596] sm:$0xf]
        %v2598 = vld [vmem:[%s2596 + $0x4] sm:$0xf]
        %v2599 = vld [vmem:[%s2596 + $0x8] sm:$0xf]
        %v2600 = vld [vmem:[%s2596 + $0xc] sm:$0xf]
        %v2605 = vunpack.c.l.b16 %v2597
        %v2606 = vunpack.c.l.b16 %v2598
        %v2607 = vunpack.c.l.b16 %v2599
        %v2608 = vunpack.c.l.b16 %v2600
        %v2609 = vpack.c.b16 %v2606, %v2605
        %v2610 = vpack.c.b16 %v2608, %v2607
        %v2612 = vsel %vm1076, %v2609, 0
        %v2615 = vsel %vm1076, %v2610, 0
        %2617 = vmatpush.bf16.msra.mxu0 0
        %2618 = vmatpush.bf16.msra.mxu0 0
        %2619 = vmatpush.bf16.msra.mxu0 0
        %2620 = vmatpush.bf16.msra.mxu0 0
        %2621 = vmatpush.bf16.msra.mxu0 0
        %2622 = vmatpush.bf16.msra.mxu0 0
        %2623 = vmatpush.bf16.msra.mxu0 %v2595
        %2624 = vmatpush.bf16.msra.mxu0 %v2594
        %2625 = vmatmul.bf16.gmra.mxu0 %v2612
        %v2626 = vpop.f32.mrf.mxu0
        %v2627 = vadd.f32 0.0, %v2626
        %v2628 = vpop.f32.mrf.mxu0
        %v2629 = vadd.f32 0.0, %v2628
        %2630 = vmatmul.bf16.gmra.mxu0 %v2615
        %v2631 = vpop.f32.mrf.mxu0
        %v2632 = vadd.f32 0.0, %v2631
        %v2633 = vpop.f32.mrf.mxu0
        %v2634 = vadd.f32 0.0, %v2633
        %2635 = vdwg.mxu0
        %v2636 = vadd.f32 %v2566, %v2627
        %v2637 = vadd.f32 %v2568, %v2629
        %v2638 = vadd.f32 %v2571, %v2632
        %v2639 = vadd.f32 %v2573, %v2634
        %s2640 = scalar_lea.vmem %s2, 384
        %v2641 = vld [vmem:[%s2640] sm:$0xff]
        %v2642 = vld [vmem:[%s2640 + $0x8] sm:$0xff]
        %v2643 = vld [vmem:[%s2640 + $0x10] sm:$0xff]
        %v2644 = vld [vmem:[%s2640 + $0x18] sm:$0xff]
        %2646 = vset.pattern.permute.xlu0 0
        %2647 = vperm.xlu0 %2646, %v2641
        %v2648 = vpop.permute.xlu0 %2647
        %2651 = vset.pattern.permute.xlu0 0
        %2652 = vperm.xlu0 %2651, %v2642
        %v2653 = vpop.permute.xlu0 %2652
        %2656 = vset.pattern.permute.xlu0 0
        %2657 = vperm.xlu0 %2656, %v2643
        %v2658 = vpop.permute.xlu0 %2657
        %2661 = vset.pattern.permute.xlu0 0
        %2662 = vperm.xlu0 %2661, %v2644
        %v2663 = vpop.permute.xlu0 %2662
        %v2665 = vadd.f32 %v2636, %v2648
        %v2666 = vadd.f32 %v2637, %v2653
        %v2667 = vadd.f32 %v2638, %v2658
        %v2668 = vadd.f32 %v2639, %v2663
        %v2669 = vmax.f32 %v2665, 0.0
        %v2670 = vmax.f32 %v2666, 0.0
        %v2671 = vmax.f32 %v2667, 0.0
        %v2672 = vmax.f32 %v2668, 0.0
        %v2673 = vpack.c.bf16 %v2670, %v2669
        %v2674 = vpack.c.bf16 %v2672, %v2671
        %v2675 = vpack.c.bf16 %v484, %v484
        %vm2676 = vcmask 64512
        %v2678 = vsel %vm2676, %v2673, 0
        %v2681 = vsel %vm2676, %v2674, 0
        %vm2683 = vcmask 1043456
        %v2685 = vsel %vm2683, %v2675, 0
        %2687 = vmatpush.bf16.msra.mxu0 0
        %2688 = vmatpush.bf16.msra.mxu0 0
        %2689 = vmatpush.bf16.msra.mxu0 0
        %2690 = vmatpush.bf16.msra.mxu0 0
        %2691 = vmatpush.bf16.msra.mxu0 0
        %2692 = vmatpush.bf16.msra.mxu0 0
        %2693 = vmatpush.bf16.msra.mxu0 0
        %2694 = vmatpush.bf16.msra.mxu0 %v2685
        %2695 = vmatmul.bf16.gmra.mxu0 %v2678
        %v2696 = vpop.f32.mrf.mxu0
        %v2697 = vadd.f32 0.0, %v2696
        %v2698 = vpop.f32.mrf.mxu0
        %v2699 = vadd.f32 0.0, %v2698
        %2700 = vmatmul.bf16.gmra.mxu0 %v2681
        %v2701 = vpop.f32.mrf.mxu0
        %v2702 = vadd.f32 0.0, %v2701
        %v2703 = vpop.f32.mrf.mxu0
        %v2704 = vadd.f32 0.0, %v2703
        %2705 = vdwg.mxu0
        %v2706 = vpack.c.bf16 %v2699, %v2697
        %v2707 = vpack.c.bf16 %v2704, %v2702
        %s2708 = scalar_lea.vmem [#allocation2], 624
        %v2709 = vld [vmem:[%s2708] sm:$0xf]
        %v2710 = vld [vmem:[%s2708 + $0x4] sm:$0xf]
        %v2711 = vld [vmem:[%s2708 + $0x8] sm:$0xf]
        %v2712 = vld [vmem:[%s2708 + $0xc] sm:$0xf]
        %s2713 = scalar_lea.vmem [#allocation2], 640
        %v2714 = vld [vmem:[%s2713] sm:$0xf]
        %v2715 = vld [vmem:[%s2713 + $0x4] sm:$0xf]
        %v2716 = vld [vmem:[%s2713 + $0x8] sm:$0xf]
        %v2717 = vld [vmem:[%s2713 + $0xc] sm:$0xf]
        %v2722 = vunpack.c.l.b16 %v2714
        %v2723 = vunpack.c.l.b16 %v2715
        %v2724 = vunpack.c.l.b16 %v2716
        %v2725 = vunpack.c.l.b16 %v2717
        %v2726 = vpack.c.b16 %v2723, %v2722
        %v2727 = vpack.c.b16 %v2725, %v2724
        %v2729 = vsel %vm1076, %v2726, 0
        %v2732 = vsel %vm1076, %v2727, 0
        %2734 = vmatpush.bf16.msra.mxu0 0
        %2735 = vmatpush.bf16.msra.mxu0 0
        %2736 = vmatpush.bf16.msra.mxu0 0
        %2737 = vmatpush.bf16.msra.mxu0 0
        %2738 = vmatpush.bf16.msra.mxu0 0
        %2739 = vmatpush.bf16.msra.mxu0 0
        %2740 = vmatpush.bf16.msra.mxu0 %v2674
        %2741 = vmatpush.bf16.msra.mxu0 %v2673
        %2742 = vmatmul.bf16.gmra.mxu0 %v2729
        %v2743 = vpop.f32.mrf.mxu0
        %v2744 = vadd.f32 0.0, %v2743
        %v2745 = vpop.f32.mrf.mxu0
        %v2746 = vadd.f32 0.0, %v2745
        %2747 = vmatmul.bf16.gmra.mxu0 %v2732
        %v2748 = vpop.f32.mrf.mxu0
        %v2749 = vadd.f32 0.0, %v2748
        %v2750 = vpop.f32.mrf.mxu0
        %v2751 = vadd.f32 0.0, %v2750
        %2752 = vdwg.mxu0
        %v2757 = vunpack.c.l.b16 %v2709
        %v2758 = vunpack.c.l.b16 %v2710
        %v2759 = vunpack.c.l.b16 %v2711
        %v2760 = vunpack.c.l.b16 %v2712
        %v2761 = vpack.c.b16 %v2758, %v2757
        %v2762 = vpack.c.b16 %v2760, %v2759
        %v2764 = vsel %vm1076, %v2761, 0
        %v2767 = vsel %vm1076, %v2762, 0
        %2769 = vmatpush.bf16.msra.mxu0 0
        %2770 = vmatpush.bf16.msra.mxu0 0
        %2771 = vmatpush.bf16.msra.mxu0 0
        %2772 = vmatpush.bf16.msra.mxu0 0
        %2773 = vmatpush.bf16.msra.mxu0 0
        %2774 = vmatpush.bf16.msra.mxu0 0
        %2775 = vmatpush.bf16.msra.mxu0 %v2707
        %2776 = vmatpush.bf16.msra.mxu0 %v2706
        %2777 = vmatmul.bf16.gmra.mxu0 %v2764
        %v2778 = vpop.f32.mrf.mxu0
        %v2779 = vadd.f32 %v2744, %v2778
        %v2780 = vpop.f32.mrf.mxu0
        %v2781 = vadd.f32 %v2746, %v2780
        %2782 = vmatmul.bf16.gmra.mxu0 %v2767
        %v2783 = vpop.f32.mrf.mxu0
        %v2784 = vadd.f32 %v2749, %v2783
        %v2785 = vpop.f32.mrf.mxu0
        %v2786 = vadd.f32 %v2751, %v2785
        %2787 = vdwg.mxu0
        %v2788 = vpack.c.bf16 %v575, %v575
        %v2790 = vsel %vm2683, %v2788, 0
        %2792 = vmatpush.bf16.msra.mxu0 0
        %2793 = vmatpush.bf16.msra.mxu0 0
        %2794 = vmatpush.bf16.msra.mxu0 0
        %2795 = vmatpush.bf16.msra.mxu0 0
        %2796 = vmatpush.bf16.msra.mxu0 0
        %2797 = vmatpush.bf16.msra.mxu0 0
        %2798 = vmatpush.bf16.msra.mxu0 0
        %2799 = vmatpush.bf16.msra.mxu0 %v2790
        %2800 = vmatmul.bf16.gmra.mxu0 %v2678
        %v2801 = vpop.f32.mrf.mxu0
        %v2802 = vadd.f32 0.0, %v2801
        %v2803 = vpop.f32.mrf.mxu0
        %v2804 = vadd.f32 0.0, %v2803
        %2805 = vmatmul.bf16.gmra.mxu0 %v2681
        %v2806 = vpop.f32.mrf.mxu0
        %v2807 = vadd.f32 0.0, %v2806
        %v2808 = vpop.f32.mrf.mxu0
        %v2809 = vadd.f32 0.0, %v2808
        %2810 = vdwg.mxu0
        %v2811 = vpack.c.bf16 %v2804, %v2802
        %v2812 = vpack.c.bf16 %v2809, %v2807
        %s2813 = scalar_lea.vmem [#allocation2], 656
        %v2814 = vld [vmem:[%s2813] sm:$0xf]
        %v2815 = vld [vmem:[%s2813 + $0x4] sm:$0xf]
        %v2816 = vld [vmem:[%s2813 + $0x8] sm:$0xf]
        %v2817 = vld [vmem:[%s2813 + $0xc] sm:$0xf]
        %v2822 = vunpack.c.l.b16 %v2814
        %v2823 = vunpack.c.l.b16 %v2815
        %v2824 = vunpack.c.l.b16 %v2816
        %v2825 = vunpack.c.l.b16 %v2817
        %v2826 = vpack.c.b16 %v2823, %v2822
        %v2827 = vpack.c.b16 %v2825, %v2824
        %v2829 = vsel %vm1076, %v2826, 0
        %v2832 = vsel %vm1076, %v2827, 0
        %2834 = vmatpush.bf16.msra.mxu0 0
        %2835 = vmatpush.bf16.msra.mxu0 0
        %2836 = vmatpush.bf16.msra.mxu0 0
        %2837 = vmatpush.bf16.msra.mxu0 0
        %2838 = vmatpush.bf16.msra.mxu0 0
        %2839 = vmatpush.bf16.msra.mxu0 0
        %2840 = vmatpush.bf16.msra.mxu0 %v2812
        %2841 = vmatpush.bf16.msra.mxu0 %v2811
        %2842 = vmatmul.bf16.gmra.mxu0 %v2829
        %v2843 = vpop.f32.mrf.mxu0
        %v2844 = vadd.f32 0.0, %v2843
        %v2845 = vpop.f32.mrf.mxu0
        %v2846 = vadd.f32 0.0, %v2845
        %2847 = vmatmul.bf16.gmra.mxu0 %v2832
        %v2848 = vpop.f32.mrf.mxu0
        %v2849 = vadd.f32 0.0, %v2848
        %v2850 = vpop.f32.mrf.mxu0
        %v2851 = vadd.f32 0.0, %v2850
        %2852 = vdwg.mxu0
        %v2853 = vadd.f32 %v2779, %v2844
        %v2854 = vadd.f32 %v2781, %v2846
        %v2855 = vadd.f32 %v2784, %v2849
        %v2856 = vadd.f32 %v2786, %v2851
        %s2857 = scalar_lea.vmem %s2, 416
        %v2858 = vld [vmem:[%s2857] sm:$0xff]
        %v2859 = vld [vmem:[%s2857 + $0x8] sm:$0xff]
        %v2860 = vld [vmem:[%s2857 + $0x10] sm:$0xff]
        %v2861 = vld [vmem:[%s2857 + $0x18] sm:$0xff]
        %2863 = vset.pattern.permute.xlu0 0
        %2864 = vperm.xlu0 %2863, %v2858
        %v2865 = vpop.permute.xlu0 %2864
        %2868 = vset.pattern.permute.xlu0 0
        %2869 = vperm.xlu0 %2868, %v2859
        %v2870 = vpop.permute.xlu0 %2869
        %2873 = vset.pattern.permute.xlu0 0
        %2874 = vperm.xlu0 %2873, %v2860
        %v2875 = vpop.permute.xlu0 %2874
        %2878 = vset.pattern.permute.xlu0 0
        %2879 = vperm.xlu0 %2878, %v2861
        %v2880 = vpop.permute.xlu0 %2879
        %v2882 = vadd.f32 %v2853, %v2865
        %v2883 = vadd.f32 %v2854, %v2870
        %v2884 = vadd.f32 %v2855, %v2875
        %v2885 = vadd.f32 %v2856, %v2880
        %v2886 = vmax.f32 %v2882, 0.0
        %v2887 = vmax.f32 %v2883, 0.0
        %v2888 = vmax.f32 %v2884, 0.0
        %v2889 = vmax.f32 %v2885, 0.0
        %v2890 = vpack.c.bf16 %v2887, %v2886
        %v2891 = vpack.c.bf16 %v2889, %v2888
        %v2893 = vsel %vm2676, %v2890, 0
        %v2896 = vsel %vm2676, %v2891, 0
        %2898 = vmatpush.bf16.msra.mxu0 0
        %2899 = vmatpush.bf16.msra.mxu0 0
        %2900 = vmatpush.bf16.msra.mxu0 0
        %2901 = vmatpush.bf16.msra.mxu0 0
        %2902 = vmatpush.bf16.msra.mxu0 0
        %2903 = vmatpush.bf16.msra.mxu0 0
        %2904 = vmatpush.bf16.msra.mxu0 0
        %2905 = vmatpush.bf16.msra.mxu0 %v2685
        %2906 = vmatmul.bf16.gmra.mxu0 %v2893
        %v2907 = vpop.f32.mrf.mxu0
        %v2908 = vadd.f32 0.0, %v2907
        %v2909 = vpop.f32.mrf.mxu0
        %v2910 = vadd.f32 0.0, %v2909
        %2911 = vmatmul.bf16.gmra.mxu0 %v2896
        %v2912 = vpop.f32.mrf.mxu0
        %v2913 = vadd.f32 0.0, %v2912
        %v2914 = vpop.f32.mrf.mxu0
        %v2915 = vadd.f32 0.0, %v2914
        %2916 = vdwg.mxu0
        %v2917 = vpack.c.bf16 %v2910, %v2908
        %v2918 = vpack.c.bf16 %v2915, %v2913
        %s2919 = scalar_lea.vmem [#allocation2], 672
        %v2920 = vld [vmem:[%s2919] sm:$0xf]
        %v2921 = vld [vmem:[%s2919 + $0x4] sm:$0xf]
        %v2922 = vld [vmem:[%s2919 + $0x8] sm:$0xf]
        %v2923 = vld [vmem:[%s2919 + $0xc] sm:$0xf]
        %s2924 = scalar_lea.vmem [#allocation2], 688
        %v2925 = vld [vmem:[%s2924] sm:$0xf]
        %v2926 = vld [vmem:[%s2924 + $0x4] sm:$0xf]
        %v2927 = vld [vmem:[%s2924 + $0x8] sm:$0xf]
        %v2928 = vld [vmem:[%s2924 + $0xc] sm:$0xf]
        %v2933 = vunpack.c.l.b16 %v2925
        %v2934 = vunpack.c.l.b16 %v2926
        %v2935 = vunpack.c.l.b16 %v2927
        %v2936 = vunpack.c.l.b16 %v2928
        %v2937 = vpack.c.b16 %v2934, %v2933
        %v2938 = vpack.c.b16 %v2936, %v2935
        %v2940 = vsel %vm1076, %v2937, 0
        %v2943 = vsel %vm1076, %v2938, 0
        %2945 = vmatpush.bf16.msra.mxu0 0
        %2946 = vmatpush.bf16.msra.mxu0 0
        %2947 = vmatpush.bf16.msra.mxu0 0
        %2948 = vmatpush.bf16.msra.mxu0 0
        %2949 = vmatpush.bf16.msra.mxu0 0
        %2950 = vmatpush.bf16.msra.mxu0 0
        %2951 = vmatpush.bf16.msra.mxu0 %v2891
        %2952 = vmatpush.bf16.msra.mxu0 %v2890
        %2953 = vmatmul.bf16.gmra.mxu0 %v2940
        %v2954 = vpop.f32.mrf.mxu0
        %v2955 = vadd.f32 0.0, %v2954
        %v2956 = vpop.f32.mrf.mxu0
        %v2957 = vadd.f32 0.0, %v2956
        %2958 = vmatmul.bf16.gmra.mxu0 %v2943
        %v2959 = vpop.f32.mrf.mxu0
        %v2960 = vadd.f32 0.0, %v2959
        %v2961 = vpop.f32.mrf.mxu0
        %v2962 = vadd.f32 0.0, %v2961
        %2963 = vdwg.mxu0
        %v2968 = vunpack.c.l.b16 %v2920
        %v2969 = vunpack.c.l.b16 %v2921
        %v2970 = vunpack.c.l.b16 %v2922
        %v2971 = vunpack.c.l.b16 %v2923
        %v2972 = vpack.c.b16 %v2969, %v2968
        %v2973 = vpack.c.b16 %v2971, %v2970
        %v2975 = vsel %vm1076, %v2972, 0
        %v2978 = vsel %vm1076, %v2973, 0
        %2980 = vmatpush.bf16.msra.mxu0 0
        %2981 = vmatpush.bf16.msra.mxu0 0
        %2982 = vmatpush.bf16.msra.mxu0 0
        %2983 = vmatpush.bf16.msra.mxu0 0
        %2984 = vmatpush.bf16.msra.mxu0 0
        %2985 = vmatpush.bf16.msra.mxu0 0
        %2986 = vmatpush.bf16.msra.mxu0 %v2918
        %2987 = vmatpush.bf16.msra.mxu0 %v2917
        %2988 = vmatmul.bf16.gmra.mxu0 %v2975
        %v2989 = vpop.f32.mrf.mxu0
        %v2990 = vadd.f32 %v2955, %v2989
        %v2991 = vpop.f32.mrf.mxu0
        %v2992 = vadd.f32 %v2957, %v2991
        %2993 = vmatmul.bf16.gmra.mxu0 %v2978
        %v2994 = vpop.f32.mrf.mxu0
        %v2995 = vadd.f32 %v2960, %v2994
        %v2996 = vpop.f32.mrf.mxu0
        %v2997 = vadd.f32 %v2962, %v2996
        %2998 = vdwg.mxu0
        %2999 = vmatpush.bf16.msra.mxu0 0
        %3000 = vmatpush.bf16.msra.mxu0 0
        %3001 = vmatpush.bf16.msra.mxu0 0
        %3002 = vmatpush.bf16.msra.mxu0 0
        %3003 = vmatpush.bf16.msra.mxu0 0
        %3004 = vmatpush.bf16.msra.mxu0 0
        %3005 = vmatpush.bf16.msra.mxu0 0
        %3006 = vmatpush.bf16.msra.mxu0 %v2790
        %3007 = vmatmul.bf16.gmra.mxu0 %v2893
        %v3008 = vpop.f32.mrf.mxu0
        %v3009 = vadd.f32 0.0, %v3008
        %v3010 = vpop.f32.mrf.mxu0
        %v3011 = vadd.f32 0.0, %v3010
        %3012 = vmatmul.bf16.gmra.mxu0 %v2896
        %v3013 = vpop.f32.mrf.mxu0
        %v3014 = vadd.f32 0.0, %v3013
        %v3015 = vpop.f32.mrf.mxu0
        %v3016 = vadd.f32 0.0, %v3015
        %3017 = vdwg.mxu0
        %v3018 = vpack.c.bf16 %v3011, %v3009
        %v3019 = vpack.c.bf16 %v3016, %v3014
        %s3020 = scalar_lea.vmem [#allocation2], 704
        %v3021 = vld [vmem:[%s3020] sm:$0xf]
        %v3022 = vld [vmem:[%s3020 + $0x4] sm:$0xf]
        %v3023 = vld [vmem:[%s3020 + $0x8] sm:$0xf]
        %v3024 = vld [vmem:[%s3020 + $0xc] sm:$0xf]
        %v3029 = vunpack.c.l.b16 %v3021
        %v3030 = vunpack.c.l.b16 %v3022
        %v3031 = vunpack.c.l.b16 %v3023
        %v3032 = vunpack.c.l.b16 %v3024
        %v3033 = vpack.c.b16 %v3030, %v3029
        %v3034 = vpack.c.b16 %v3032, %v3031
        %v3036 = vsel %vm1076, %v3033, 0
        %v3039 = vsel %vm1076, %v3034, 0
        %3041 = vmatpush.bf16.msra.mxu0 0
        %3042 = vmatpush.bf16.msra.mxu0 0
        %3043 = vmatpush.bf16.msra.mxu0 0
        %3044 = vmatpush.bf16.msra.mxu0 0
        %3045 = vmatpush.bf16.msra.mxu0 0
        %3046 = vmatpush.bf16.msra.mxu0 0
        %3047 = vmatpush.bf16.msra.mxu0 %v3019
        %3048 = vmatpush.bf16.msra.mxu0 %v3018
        %3049 = vmatmul.bf16.gmra.mxu0 %v3036
        %v3050 = vpop.f32.mrf.mxu0
        %v3051 = vadd.f32 0.0, %v3050
        %v3052 = vpop.f32.mrf.mxu0
        %v3053 = vadd.f32 0.0, %v3052
        %3054 = vmatmul.bf16.gmra.mxu0 %v3039
        %v3055 = vpop.f32.mrf.mxu0
        %v3056 = vadd.f32 0.0, %v3055
        %v3057 = vpop.f32.mrf.mxu0
        %v3058 = vadd.f32 0.0, %v3057
        %3059 = vdwg.mxu0
        %v3060 = vadd.f32 %v2990, %v3051
        %v3061 = vadd.f32 %v2992, %v3053
        %v3062 = vadd.f32 %v2995, %v3056
        %v3063 = vadd.f32 %v2997, %v3058
        %s3064 = scalar_lea.vmem %s2, 448
        %v3065 = vld [vmem:[%s3064] sm:$0xff]
        %v3066 = vld [vmem:[%s3064 + $0x8] sm:$0xff]
        %v3067 = vld [vmem:[%s3064 + $0x10] sm:$0xff]
        %v3068 = vld [vmem:[%s3064 + $0x18] sm:$0xff]
        %3070 = vset.pattern.permute.xlu0 0
        %3071 = vperm.xlu0 %3070, %v3065
        %v3072 = vpop.permute.xlu0 %3071
        %3075 = vset.pattern.permute.xlu0 0
        %3076 = vperm.xlu0 %3075, %v3066
        %v3077 = vpop.permute.xlu0 %3076
        %3080 = vset.pattern.permute.xlu0 0
        %3081 = vperm.xlu0 %3080, %v3067
        %v3082 = vpop.permute.xlu0 %3081
        %3085 = vset.pattern.permute.xlu0 0
        %3086 = vperm.xlu0 %3085, %v3068
        %v3087 = vpop.permute.xlu0 %3086
        %v3089 = vadd.f32 %v3060, %v3072
        %v3090 = vadd.f32 %v3061, %v3077
        %v3091 = vadd.f32 %v3062, %v3082
        %v3092 = vadd.f32 %v3063, %v3087
        %v3093 = vmax.f32 %v3089, 0.0
        %v3094 = vmax.f32 %v3090, 0.0
        %v3095 = vmax.f32 %v3091, 0.0
        %v3096 = vmax.f32 %v3092, 0.0
        %s3097 = scalar_lea.vmem [#allocation2], 720
        %v3098 = vld [vmem:[%s3097] sm:$0xf]
        %v3099 = vld [vmem:[%s3097 + $0x4] sm:$0xf]
        %v3100 = vld [vmem:[%s3097 + $0x8] sm:$0xf]
        %v3101 = vld [vmem:[%s3097 + $0xc] sm:$0xf]
        %s3102 = scalar_lea.vmem [#allocation2], 736
        %v3103 = vld [vmem:[%s3102] sm:$0xf]
        %v3104 = vld [vmem:[%s3102 + $0x4] sm:$0xf]
        %v3105 = vld [vmem:[%s3102 + $0x8] sm:$0xf]
        %v3106 = vld [vmem:[%s3102 + $0xc] sm:$0xf]
        %v3111 = vunpack.c.l.b16 %v3103
        %v3112 = vunpack.c.l.b16 %v3104
        %v3113 = vunpack.c.l.b16 %v3105
        %v3114 = vunpack.c.l.b16 %v3106
        %v3115 = vpack.c.b16 %v3112, %v3111
        %v3116 = vpack.c.b16 %v3114, %v3113
        %v3118 = vsel %vm1076, %v3115, 0
        %v3121 = vsel %vm1076, %v3116, 0
        %3123 = vmatpush.bf16.msra.mxu0 0
        %3124 = vmatpush.bf16.msra.mxu0 0
        %3125 = vmatpush.bf16.msra.mxu0 0
        %3126 = vmatpush.bf16.msra.mxu0 0
        %3127 = vmatpush.bf16.msra.mxu0 0
        %3128 = vmatpush.bf16.msra.mxu0 0
        %3129 = vmatpush.bf16.msra.mxu0 %v2499
        %3130 = vmatpush.bf16.msra.mxu0 %v2498
        %3131 = vmatmul.bf16.gmra.mxu0 %v3118
        %v3132 = vpop.f32.mrf.mxu0
        %v3133 = vadd.f32 0.0, %v3132
        %v3134 = vpop.f32.mrf.mxu0
        %v3135 = vadd.f32 0.0, %v3134
        %3136 = vmatmul.bf16.gmra.mxu0 %v3121
        %v3137 = vpop.f32.mrf.mxu0
        %v3138 = vadd.f32 0.0, %v3137
        %v3139 = vpop.f32.mrf.mxu0
        %v3140 = vadd.f32 0.0, %v3139
        %3141 = vdwg.mxu0
        %v3146 = vunpack.c.l.b16 %v3098
        %v3147 = vunpack.c.l.b16 %v3099
        %v3148 = vunpack.c.l.b16 %v3100
        %v3149 = vunpack.c.l.b16 %v3101
        %v3150 = vpack.c.b16 %v3147, %v3146
        %v3151 = vpack.c.b16 %v3149, %v3148
        %v3153 = vsel %vm1076, %v3150, 0
        %v3156 = vsel %vm1076, %v3151, 0
        %3158 = vmatpush.bf16.msra.mxu0 0
        %3159 = vmatpush.bf16.msra.mxu0 0
        %3160 = vmatpush.bf16.msra.mxu0 0
        %3161 = vmatpush.bf16.msra.mxu0 0
        %3162 = vmatpush.bf16.msra.mxu0 0
        %3163 = vmatpush.bf16.msra.mxu0 0
        %3164 = vmatpush.bf16.msra.mxu0 %v2473
        %3165 = vmatpush.bf16.msra.mxu0 %v2472
        %3166 = vmatmul.bf16.gmra.mxu0 %v3153
        %v3167 = vpop.f32.mrf.mxu0
        %v3168 = vadd.f32 %v3133, %v3167
        %v3169 = vpop.f32.mrf.mxu0
        %v3170 = vadd.f32 %v3135, %v3169
        %3171 = vmatmul.bf16.gmra.mxu0 %v3156
        %v3172 = vpop.f32.mrf.mxu0
        %v3173 = vadd.f32 %v3138, %v3172
        %v3174 = vpop.f32.mrf.mxu0
        %v3175 = vadd.f32 %v3140, %v3174
        %3176 = vdwg.mxu0
        %s3177 = scalar_lea.vmem [#allocation2], 752
        %v3178 = vld [vmem:[%s3177] sm:$0xf]
        %v3179 = vld [vmem:[%s3177 + $0x4] sm:$0xf]
        %v3180 = vld [vmem:[%s3177 + $0x8] sm:$0xf]
        %v3181 = vld [vmem:[%s3177 + $0xc] sm:$0xf]
        %v3186 = vunpack.c.l.b16 %v3178
        %v3187 = vunpack.c.l.b16 %v3179
        %v3188 = vunpack.c.l.b16 %v3180
        %v3189 = vunpack.c.l.b16 %v3181
        %v3190 = vpack.c.b16 %v3187, %v3186
        %v3191 = vpack.c.b16 %v3189, %v3188
        %v3193 = vsel %vm1076, %v3190, 0
        %v3196 = vsel %vm1076, %v3191, 0
        %3198 = vmatpush.bf16.msra.mxu0 0
        %3199 = vmatpush.bf16.msra.mxu0 0
        %3200 = vmatpush.bf16.msra.mxu0 0
        %3201 = vmatpush.bf16.msra.mxu0 0
        %3202 = vmatpush.bf16.msra.mxu0 0
        %3203 = vmatpush.bf16.msra.mxu0 0
        %3204 = vmatpush.bf16.msra.mxu0 %v2595
        %3205 = vmatpush.bf16.msra.mxu0 %v2594
        %3206 = vmatmul.bf16.gmra.mxu0 %v3193
        %v3207 = vpop.f32.mrf.mxu0
        %v3208 = vadd.f32 0.0, %v3207
        %v3209 = vpop.f32.mrf.mxu0
        %v3210 = vadd.f32 0.0, %v3209
        %3211 = vmatmul.bf16.gmra.mxu0 %v3196
        %v3212 = vpop.f32.mrf.mxu0
        %v3213 = vadd.f32 0.0, %v3212
        %v3214 = vpop.f32.mrf.mxu0
        %v3215 = vadd.f32 0.0, %v3214
        %3216 = vdwg.mxu0
        %v3217 = vadd.f32 %v3168, %v3208
        %v3218 = vadd.f32 %v3170, %v3210
        %v3219 = vadd.f32 %v3173, %v3213
        %v3220 = vadd.f32 %v3175, %v3215
        %s3221 = scalar_lea.vmem %s2, 480
        %v3222 = vld [vmem:[%s3221] sm:$0xff]
        %v3223 = vld [vmem:[%s3221 + $0x8] sm:$0xff]
        %v3224 = vld [vmem:[%s3221 + $0x10] sm:$0xff]
        %v3225 = vld [vmem:[%s3221 + $0x18] sm:$0xff]
        %3227 = vset.pattern.permute.xlu0 0
        %3228 = vperm.xlu0 %3227, %v3222
        %v3229 = vpop.permute.xlu0 %3228
        %3232 = vset.pattern.permute.xlu0 0
        %3233 = vperm.xlu0 %3232, %v3223
        %v3234 = vpop.permute.xlu0 %3233
        %3237 = vset.pattern.permute.xlu0 0
        %3238 = vperm.xlu0 %3237, %v3224
        %v3239 = vpop.permute.xlu0 %3238
        %3242 = vset.pattern.permute.xlu0 0
        %3243 = vperm.xlu0 %3242, %v3225
        %v3244 = vpop.permute.xlu0 %3243
        %v3246 = vadd.f32 %v3217, %v3229
        %v3247 = vadd.f32 %v3218, %v3234
        %v3248 = vadd.f32 %v3219, %v3239
        %v3249 = vadd.f32 %v3220, %v3244
        %v3250 = vadd.f32 %v3093, %v3246
        %v3251 = vadd.f32 %v3094, %v3247
        %v3252 = vadd.f32 %v3095, %v3248
        %v3253 = vadd.f32 %v3096, %v3249
        %v3254 = vpack.c.bf16 %v3251, %v3250
        %v3255 = vpack.c.bf16 %v3253, %v3252
        %v3256 = vpack.c.bf16 %v222, %v222
        %v3258 = vsel %vm2676, %v3254, 0
        %v3261 = vsel %vm2676, %v3255, 0
        %v3264 = vsel %vm2683, %v3256, 0
        %3266 = vmatpush.bf16.msra.mxu0 0
        %3267 = vmatpush.bf16.msra.mxu0 0
        %3268 = vmatpush.bf16.msra.mxu0 0
        %3269 = vmatpush.bf16.msra.mxu0 0
        %3270 = vmatpush.bf16.msra.mxu0 0
        %3271 = vmatpush.bf16.msra.mxu0 0
        %3272 = vmatpush.bf16.msra.mxu0 0
        %3273 = vmatpush.bf16.msra.mxu0 %v3264
        %3274 = vmatmul.bf16.gmra.mxu0 %v3258
        %v3275 = vpop.f32.mrf.mxu0
        %v3276 = vadd.f32 0.0, %v3275
        %v3277 = vpop.f32.mrf.mxu0
        %v3278 = vadd.f32 0.0, %v3277
        %3279 = vmatmul.bf16.gmra.mxu0 %v3261
        %v3280 = vpop.f32.mrf.mxu0
        %v3281 = vadd.f32 0.0, %v3280
        %v3282 = vpop.f32.mrf.mxu0
        %v3283 = vadd.f32 0.0, %v3282
        %3284 = vdwg.mxu0
        %v3285 = vpack.c.bf16 %v3278, %v3276
        %v3286 = vpack.c.bf16 %v3283, %v3281
        %s3287 = scalar_lea.vmem [#allocation2], 768
        %v3288 = vld [vmem:[%s3287] sm:$0xf]
        %v3289 = vld [vmem:[%s3287 + $0x4] sm:$0xf]
        %v3290 = vld [vmem:[%s3287 + $0x8] sm:$0xf]
        %v3291 = vld [vmem:[%s3287 + $0xc] sm:$0xf]
        %v3292 = vpack.c.bf16 %v278, %v278
        %v3294 = vsel %vm2683, %v3292, 0
        %3296 = vmatpush.bf16.msra.mxu0 0
        %3297 = vmatpush.bf16.msra.mxu0 0
        %3298 = vmatpush.bf16.msra.mxu0 0
        %3299 = vmatpush.bf16.msra.mxu0 0
        %3300 = vmatpush.bf16.msra.mxu0 0
        %3301 = vmatpush.bf16.msra.mxu0 0
        %3302 = vmatpush.bf16.msra.mxu0 0
        %3303 = vmatpush.bf16.msra.mxu0 %v3294
        %3304 = vmatmul.bf16.gmra.mxu0 %v3258
        %v3305 = vpop.f32.mrf.mxu0
        %v3306 = vadd.f32 0.0, %v3305
        %v3307 = vpop.f32.mrf.mxu0
        %v3308 = vadd.f32 0.0, %v3307
        %3309 = vmatmul.bf16.gmra.mxu0 %v3261
        %v3310 = vpop.f32.mrf.mxu0
        %v3311 = vadd.f32 0.0, %v3310
        %v3312 = vpop.f32.mrf.mxu0
        %v3313 = vadd.f32 0.0, %v3312
        %3314 = vdwg.mxu0
        %v3315 = vpack.c.bf16 %v3308, %v3306
        %v3316 = vpack.c.bf16 %v3313, %v3311
        %s3317 = scalar_lea.vmem [#allocation2], 784
        %v3318 = vld [vmem:[%s3317] sm:$0xf]
        %v3319 = vld [vmem:[%s3317 + $0x4] sm:$0xf]
        %v3320 = vld [vmem:[%s3317 + $0x8] sm:$0xf]
        %v3321 = vld [vmem:[%s3317 + $0xc] sm:$0xf]
        %v3326 = vunpack.c.l.b16 %v3318
        %v3327 = vunpack.c.l.b16 %v3319
        %v3328 = vunpack.c.l.b16 %v3320
        %v3329 = vunpack.c.l.b16 %v3321
        %v3330 = vpack.c.b16 %v3327, %v3326
        %v3331 = vpack.c.b16 %v3329, %v3328
        %v3333 = vsel %vm1076, %v3330, 0
        %v3336 = vsel %vm1076, %v3331, 0
        %3338 = vmatpush.bf16.msra.mxu0 0
        %3339 = vmatpush.bf16.msra.mxu0 0
        %3340 = vmatpush.bf16.msra.mxu0 0
        %3341 = vmatpush.bf16.msra.mxu0 0
        %3342 = vmatpush.bf16.msra.mxu0 0
        %3343 = vmatpush.bf16.msra.mxu0 0
        %3344 = vmatpush.bf16.msra.mxu0 %v3316
        %3345 = vmatpush.bf16.msra.mxu0 %v3315
        %3346 = vmatmul.bf16.gmra.mxu0 %v3333
        %v3347 = vpop.f32.mrf.mxu0
        %v3348 = vadd.f32 0.0, %v3347
        %v3349 = vpop.f32.mrf.mxu0
        %v3350 = vadd.f32 0.0, %v3349
        %3351 = vmatmul.bf16.gmra.mxu0 %v3336
        %v3352 = vpop.f32.mrf.mxu0
        %v3353 = vadd.f32 0.0, %v3352
        %v3354 = vpop.f32.mrf.mxu0
        %v3355 = vadd.f32 0.0, %v3354
        %3356 = vdwg.mxu0
        %v3361 = vunpack.c.l.b16 %v3288
        %v3362 = vunpack.c.l.b16 %v3289
        %v3363 = vunpack.c.l.b16 %v3290
        %v3364 = vunpack.c.l.b16 %v3291
        %v3365 = vpack.c.b16 %v3362, %v3361
        %v3366 = vpack.c.b16 %v3364, %v3363
        %v3368 = vsel %vm1076, %v3365, 0
        %v3371 = vsel %vm1076, %v3366, 0
        %3373 = vmatpush.bf16.msra.mxu0 0
        %3374 = vmatpush.bf16.msra.mxu0 0
        %3375 = vmatpush.bf16.msra.mxu0 0
        %3376 = vmatpush.bf16.msra.mxu0 0
        %3377 = vmatpush.bf16.msra.mxu0 0
        %3378 = vmatpush.bf16.msra.mxu0 0
        %3379 = vmatpush.bf16.msra.mxu0 %v3286
        %3380 = vmatpush.bf16.msra.mxu0 %v3285
        %3381 = vmatmul.bf16.gmra.mxu0 %v3368
        %v3382 = vpop.f32.mrf.mxu0
        %v3383 = vadd.f32 %v3348, %v3382
        %v3384 = vpop.f32.mrf.mxu0
        %v3385 = vadd.f32 %v3350, %v3384
        %3386 = vmatmul.bf16.gmra.mxu0 %v3371
        %v3387 = vpop.f32.mrf.mxu0
        %v3388 = vadd.f32 %v3353, %v3387
        %v3389 = vpop.f32.mrf.mxu0
        %v3390 = vadd.f32 %v3355, %v3389
        %3391 = vdwg.mxu0
        %v3392 = vpack.c.bf16 %v390, %v390
        %v3394 = vsel %vm2683, %v3392, 0
        %3396 = vmatpush.bf16.msra.mxu0 0
        %3397 = vmatpush.bf16.msra.mxu0 0
        %3398 = vmatpush.bf16.msra.mxu0 0
        %3399 = vmatpush.bf16.msra.mxu0 0
        %3400 = vmatpush.bf16.msra.mxu0 0
        %3401 = vmatpush.bf16.msra.mxu0 0
        %3402 = vmatpush.bf16.msra.mxu0 0
        %3403 = vmatpush.bf16.msra.mxu0 %v3394
        %3404 = vmatmul.bf16.gmra.mxu0 %v3258
        %v3405 = vpop.f32.mrf.mxu0
        %v3406 = vadd.f32 0.0, %v3405
        %v3407 = vpop.f32.mrf.mxu0
        %v3408 = vadd.f32 0.0, %v3407
        %3409 = vmatmul.bf16.gmra.mxu0 %v3261
        %v3410 = vpop.f32.mrf.mxu0
        %v3411 = vadd.f32 0.0, %v3410
        %v3412 = vpop.f32.mrf.mxu0
        %v3413 = vadd.f32 0.0, %v3412
        %3414 = vdwg.mxu0
        %v3415 = vpack.c.bf16 %v3408, %v3406
        %v3416 = vpack.c.bf16 %v3413, %v3411
        %s3417 = scalar_lea.vmem [#allocation2], 800
        %v3418 = vld [vmem:[%s3417] sm:$0xf]
        %v3419 = vld [vmem:[%s3417 + $0x4] sm:$0xf]
        %v3420 = vld [vmem:[%s3417 + $0x8] sm:$0xf]
        %v3421 = vld [vmem:[%s3417 + $0xc] sm:$0xf]
        %v3426 = vunpack.c.l.b16 %v3418
        %v3427 = vunpack.c.l.b16 %v3419
        %v3428 = vunpack.c.l.b16 %v3420
        %v3429 = vunpack.c.l.b16 %v3421
        %v3430 = vpack.c.b16 %v3427, %v3426
        %v3431 = vpack.c.b16 %v3429, %v3428
        %v3433 = vsel %vm1076, %v3430, 0
        %v3436 = vsel %vm1076, %v3431, 0
        %3438 = vmatpush.bf16.msra.mxu0 0
        %3439 = vmatpush.bf16.msra.mxu0 0
        %3440 = vmatpush.bf16.msra.mxu0 0
        %3441 = vmatpush.bf16.msra.mxu0 0
        %3442 = vmatpush.bf16.msra.mxu0 0
        %3443 = vmatpush.bf16.msra.mxu0 0
        %3444 = vmatpush.bf16.msra.mxu0 %v3416
        %3445 = vmatpush.bf16.msra.mxu0 %v3415
        %3446 = vmatmul.bf16.gmra.mxu0 %v3433
        %v3447 = vpop.f32.mrf.mxu0
        %v3448 = vadd.f32 0.0, %v3447
        %v3449 = vpop.f32.mrf.mxu0
        %v3450 = vadd.f32 0.0, %v3449
        %3451 = vmatmul.bf16.gmra.mxu0 %v3436
        %v3452 = vpop.f32.mrf.mxu0
        %v3453 = vadd.f32 0.0, %v3452
        %v3454 = vpop.f32.mrf.mxu0
        %v3455 = vadd.f32 0.0, %v3454
        %3456 = vdwg.mxu0
        %v3457 = vadd.f32 %v3383, %v3448
        %v3458 = vadd.f32 %v3385, %v3450
        %v3459 = vadd.f32 %v3388, %v3453
        %v3460 = vadd.f32 %v3390, %v3455
        %s3461 = scalar_lea.vmem %s2, 512
        %v3462 = vld [vmem:[%s3461] sm:$0xff]
        %v3463 = vld [vmem:[%s3461 + $0x8] sm:$0xff]
        %v3464 = vld [vmem:[%s3461 + $0x10] sm:$0xff]
        %v3465 = vld [vmem:[%s3461 + $0x18] sm:$0xff]
        %3467 = vset.pattern.permute.xlu0 0
        %3468 = vperm.xlu0 %3467, %v3462
        %v3469 = vpop.permute.xlu0 %3468
        %3472 = vset.pattern.permute.xlu0 0
        %3473 = vperm.xlu0 %3472, %v3463
        %v3474 = vpop.permute.xlu0 %3473
        %3477 = vset.pattern.permute.xlu0 0
        %3478 = vperm.xlu0 %3477, %v3464
        %v3479 = vpop.permute.xlu0 %3478
        %3482 = vset.pattern.permute.xlu0 0
        %3483 = vperm.xlu0 %3482, %v3465
        %v3484 = vpop.permute.xlu0 %3483
        %v3486 = vadd.f32 %v3457, %v3469
        %v3487 = vadd.f32 %v3458, %v3474
        %v3488 = vadd.f32 %v3459, %v3479
        %v3489 = vadd.f32 %v3460, %v3484
        %v3490 = vmax.f32 %v3486, 0.0
        %v3491 = vmax.f32 %v3487, 0.0
        %v3492 = vmax.f32 %v3488, 0.0
        %v3493 = vmax.f32 %v3489, 0.0
        %v3494 = vpack.c.bf16 %v3491, %v3490
        %v3495 = vpack.c.bf16 %v3493, %v3492
        %vm3496 = vcmask 31744
        %v3498 = vsel %vm3496, %v3494, 0
        %v3501 = vsel %vm3496, %v3495, 0
        %vm3503 = vcmask 1041408
        %v3504 = vsel %vm3503, %v2675, 0
        %3506 = vmatpush.bf16.msra.mxu0 0
        %3507 = vmatpush.bf16.msra.mxu0 0
        %3508 = vmatpush.bf16.msra.mxu0 0
        %3509 = vmatpush.bf16.msra.mxu0 0
        %3510 = vmatpush.bf16.msra.mxu0 0
        %3511 = vmatpush.bf16.msra.mxu0 0
        %3512 = vmatpush.bf16.msra.mxu0 0
        %3513 = vmatpush.bf16.msra.mxu0 %v3504
        %3514 = vmatmul.bf16.gmra.mxu0 %v3498
        %v3515 = vpop.f32.mrf.mxu0
        %v3516 = vadd.f32 0.0, %v3515
        %v3517 = vpop.f32.mrf.mxu0
        %v3518 = vadd.f32 0.0, %v3517
        %3519 = vmatmul.bf16.gmra.mxu0 %v3501
        %v3520 = vpop.f32.mrf.mxu0
        %v3521 = vadd.f32 0.0, %v3520
        %v3522 = vpop.f32.mrf.mxu0
        %v3523 = vadd.f32 0.0, %v3522
        %3524 = vdwg.mxu0
        %v3525 = vpack.c.bf16 %v3518, %v3516
        %v3526 = vpack.c.bf16 %v3523, %v3521
        %s3527 = scalar_lea.vmem [#allocation2], 816
        %v3528 = vld [vmem:[%s3527] sm:$0xf]
        %v3529 = vld [vmem:[%s3527 + $0x4] sm:$0xf]
        %v3530 = vld [vmem:[%s3527 + $0x8] sm:$0xf]
        %v3531 = vld [vmem:[%s3527 + $0xc] sm:$0xf]
        %s3532 = scalar_lea.vmem [#allocation2], 832
        %v3533 = vld [vmem:[%s3532] sm:$0xf]
        %v3534 = vld [vmem:[%s3532 + $0x4] sm:$0xf]
        %v3535 = vld [vmem:[%s3532 + $0x8] sm:$0xf]
        %v3536 = vld [vmem:[%s3532 + $0xc] sm:$0xf]
        %v3541 = vunpack.c.l.b16 %v3533
        %v3542 = vunpack.c.l.b16 %v3534
        %v3543 = vunpack.c.l.b16 %v3535
        %v3544 = vunpack.c.l.b16 %v3536
        %v3545 = vpack.c.b16 %v3542, %v3541
        %v3546 = vpack.c.b16 %v3544, %v3543
        %v3548 = vsel %vm1076, %v3545, 0
        %v3551 = vsel %vm1076, %v3546, 0
        %3553 = vmatpush.bf16.msra.mxu0 0
        %3554 = vmatpush.bf16.msra.mxu0 0
        %3555 = vmatpush.bf16.msra.mxu0 0
        %3556 = vmatpush.bf16.msra.mxu0 0
        %3557 = vmatpush.bf16.msra.mxu0 0
        %3558 = vmatpush.bf16.msra.mxu0 0
        %3559 = vmatpush.bf16.msra.mxu0 %v3495
        %3560 = vmatpush.bf16.msra.mxu0 %v3494
        %3561 = vmatmul.bf16.gmra.mxu0 %v3548
        %v3562 = vpop.f32.mrf.mxu0
        %v3563 = vadd.f32 0.0, %v3562
        %v3564 = vpop.f32.mrf.mxu0
        %v3565 = vadd.f32 0.0, %v3564
        %3566 = vmatmul.bf16.gmra.mxu0 %v3551
        %v3567 = vpop.f32.mrf.mxu0
        %v3568 = vadd.f32 0.0, %v3567
        %v3569 = vpop.f32.mrf.mxu0
        %v3570 = vadd.f32 0.0, %v3569
        %3571 = vdwg.mxu0
        %v3576 = vunpack.c.l.b16 %v3528
        %v3577 = vunpack.c.l.b16 %v3529
        %v3578 = vunpack.c.l.b16 %v3530
        %v3579 = vunpack.c.l.b16 %v3531
        %v3580 = vpack.c.b16 %v3577, %v3576
        %v3581 = vpack.c.b16 %v3579, %v3578
        %v3583 = vsel %vm1076, %v3580, 0
        %v3586 = vsel %vm1076, %v3581, 0
        %3588 = vmatpush.bf16.msra.mxu0 0
        %3589 = vmatpush.bf16.msra.mxu0 0
        %3590 = vmatpush.bf16.msra.mxu0 0
        %3591 = vmatpush.bf16.msra.mxu0 0
        %3592 = vmatpush.bf16.msra.mxu0 0
        %3593 = vmatpush.bf16.msra.mxu0 0
        %3594 = vmatpush.bf16.msra.mxu0 %v3526
        %3595 = vmatpush.bf16.msra.mxu0 %v3525
        %3596 = vmatmul.bf16.gmra.mxu0 %v3583
        %v3597 = vpop.f32.mrf.mxu0
        %v3598 = vadd.f32 %v3563, %v3597
        %v3599 = vpop.f32.mrf.mxu0
        %v3600 = vadd.f32 %v3565, %v3599
        %3601 = vmatmul.bf16.gmra.mxu0 %v3586
        %v3602 = vpop.f32.mrf.mxu0
        %v3603 = vadd.f32 %v3568, %v3602
        %v3604 = vpop.f32.mrf.mxu0
        %v3605 = vadd.f32 %v3570, %v3604
        %3606 = vdwg.mxu0
        %v3607 = vsel %vm3503, %v2788, 0
        %3609 = vmatpush.bf16.msra.mxu0 0
        %3610 = vmatpush.bf16.msra.mxu0 0
        %3611 = vmatpush.bf16.msra.mxu0 0
        %3612 = vmatpush.bf16.msra.mxu0 0
        %3613 = vmatpush.bf16.msra.mxu0 0
        %3614 = vmatpush.bf16.msra.mxu0 0
        %3615 = vmatpush.bf16.msra.mxu0 0
        %3616 = vmatpush.bf16.msra.mxu0 %v3607
        %3617 = vmatmul.bf16.gmra.mxu0 %v3498
        %v3618 = vpop.f32.mrf.mxu0
        %v3619 = vadd.f32 0.0, %v3618
        %v3620 = vpop.f32.mrf.mxu0
        %v3621 = vadd.f32 0.0, %v3620
        %3622 = vmatmul.bf16.gmra.mxu0 %v3501
        %v3623 = vpop.f32.mrf.mxu0
        %v3624 = vadd.f32 0.0, %v3623
        %v3625 = vpop.f32.mrf.mxu0
        %v3626 = vadd.f32 0.0, %v3625
        %3627 = vdwg.mxu0
        %v3628 = vpack.c.bf16 %v3621, %v3619
        %v3629 = vpack.c.bf16 %v3626, %v3624
        %s3630 = scalar_lea.vmem [#allocation2], 848
        %v3631 = vld [vmem:[%s3630] sm:$0xf]
        %v3632 = vld [vmem:[%s3630 + $0x4] sm:$0xf]
        %v3633 = vld [vmem:[%s3630 + $0x8] sm:$0xf]
        %v3634 = vld [vmem:[%s3630 + $0xc] sm:$0xf]
        %v3639 = vunpack.c.l.b16 %v3631
        %v3640 = vunpack.c.l.b16 %v3632
        %v3641 = vunpack.c.l.b16 %v3633
        %v3642 = vunpack.c.l.b16 %v3634
        %v3643 = vpack.c.b16 %v3640, %v3639
        %v3644 = vpack.c.b16 %v3642, %v3641
        %v3646 = vsel %vm1076, %v3643, 0
        %v3649 = vsel %vm1076, %v3644, 0
        %3651 = vmatpush.bf16.msra.mxu0 0
        %3652 = vmatpush.bf16.msra.mxu0 0
        %3653 = vmatpush.bf16.msra.mxu0 0
        %3654 = vmatpush.bf16.msra.mxu0 0
        %3655 = vmatpush.bf16.msra.mxu0 0
        %3656 = vmatpush.bf16.msra.mxu0 0
        %3657 = vmatpush.bf16.msra.mxu0 %v3629
        %3658 = vmatpush.bf16.msra.mxu0 %v3628
        %3659 = vmatmul.bf16.gmra.mxu0 %v3646
        %v3660 = vpop.f32.mrf.mxu0
        %v3661 = vadd.f32 0.0, %v3660
        %v3662 = vpop.f32.mrf.mxu0
        %v3663 = vadd.f32 0.0, %v3662
        %3664 = vmatmul.bf16.gmra.mxu0 %v3649
        %v3665 = vpop.f32.mrf.mxu0
        %v3666 = vadd.f32 0.0, %v3665
        %v3667 = vpop.f32.mrf.mxu0
        %v3668 = vadd.f32 0.0, %v3667
        %3669 = vdwg.mxu0
        %v3670 = vadd.f32 %v3598, %v3661
        %v3671 = vadd.f32 %v3600, %v3663
        %v3672 = vadd.f32 %v3603, %v3666
        %v3673 = vadd.f32 %v3605, %v3668
        %s3674 = scalar_lea.vmem %s2, 544
        %v3675 = vld [vmem:[%s3674] sm:$0xff]
        %v3676 = vld [vmem:[%s3674 + $0x8] sm:$0xff]
        %v3677 = vld [vmem:[%s3674 + $0x10] sm:$0xff]
        %v3678 = vld [vmem:[%s3674 + $0x18] sm:$0xff]
        %3680 = vset.pattern.permute.xlu0 0
        %3681 = vperm.xlu0 %3680, %v3675
        %v3682 = vpop.permute.xlu0 %3681
        %3685 = vset.pattern.permute.xlu0 0
        %3686 = vperm.xlu0 %3685, %v3676
        %v3687 = vpop.permute.xlu0 %3686
        %3690 = vset.pattern.permute.xlu0 0
        %3691 = vperm.xlu0 %3690, %v3677
        %v3692 = vpop.permute.xlu0 %3691
        %3695 = vset.pattern.permute.xlu0 0
        %3696 = vperm.xlu0 %3695, %v3678
        %v3697 = vpop.permute.xlu0 %3696
        %v3699 = vadd.f32 %v3670, %v3682
        %v3700 = vadd.f32 %v3671, %v3687
        %v3701 = vadd.f32 %v3672, %v3692
        %v3702 = vadd.f32 %v3673, %v3697
        %v3703 = vmax.f32 %v3699, 0.0
        %v3704 = vmax.f32 %v3700, 0.0
        %v3705 = vmax.f32 %v3701, 0.0
        %v3706 = vmax.f32 %v3702, 0.0
        %v3707 = vpack.c.bf16 %v3704, %v3703
        %v3708 = vpack.c.bf16 %v3706, %v3705
        %v3710 = vsel %vm3496, %v3707, 0
        %v3713 = vsel %vm3496, %v3708, 0
        %3715 = vmatpush.bf16.msra.mxu0 0
        %3716 = vmatpush.bf16.msra.mxu0 0
        %3717 = vmatpush.bf16.msra.mxu0 0
        %3718 = vmatpush.bf16.msra.mxu0 0
        %3719 = vmatpush.bf16.msra.mxu0 0
        %3720 = vmatpush.bf16.msra.mxu0 0
        %3721 = vmatpush.bf16.msra.mxu0 0
        %3722 = vmatpush.bf16.msra.mxu0 %v3504
        %3723 = vmatmul.bf16.gmra.mxu0 %v3710
        %v3724 = vpop.f32.mrf.mxu0
        %v3725 = vadd.f32 0.0, %v3724
        %v3726 = vpop.f32.mrf.mxu0
        %v3727 = vadd.f32 0.0, %v3726
        %3728 = vmatmul.bf16.gmra.mxu0 %v3713
        %v3729 = vpop.f32.mrf.mxu0
        %v3730 = vadd.f32 0.0, %v3729
        %v3731 = vpop.f32.mrf.mxu0
        %v3732 = vadd.f32 0.0, %v3731
        %3733 = vdwg.mxu0
        %v3734 = vpack.c.bf16 %v3727, %v3725
        %v3735 = vpack.c.bf16 %v3732, %v3730
        %s3736 = scalar_lea.vmem [#allocation2], 864
        %v3737 = vld [vmem:[%s3736] sm:$0xf]
        %v3738 = vld [vmem:[%s3736 + $0x4] sm:$0xf]
        %v3739 = vld [vmem:[%s3736 + $0x8] sm:$0xf]
        %v3740 = vld [vmem:[%s3736 + $0xc] sm:$0xf]
        %s3741 = scalar_lea.vmem [#allocation2], 880
        %v3742 = vld [vmem:[%s3741] sm:$0xf]
        %v3743 = vld [vmem:[%s3741 + $0x4] sm:$0xf]
        %v3744 = vld [vmem:[%s3741 + $0x8] sm:$0xf]
        %v3745 = vld [vmem:[%s3741 + $0xc] sm:$0xf]
        %v3750 = vunpack.c.l.b16 %v3742
        %v3751 = vunpack.c.l.b16 %v3743
        %v3752 = vunpack.c.l.b16 %v3744
        %v3753 = vunpack.c.l.b16 %v3745
        %v3754 = vpack.c.b16 %v3751, %v3750
        %v3755 = vpack.c.b16 %v3753, %v3752
        %v3757 = vsel %vm1076, %v3754, 0
        %v3760 = vsel %vm1076, %v3755, 0
        %3762 = vmatpush.bf16.msra.mxu0 0
        %3763 = vmatpush.bf16.msra.mxu0 0
        %3764 = vmatpush.bf16.msra.mxu0 0
        %3765 = vmatpush.bf16.msra.mxu0 0
        %3766 = vmatpush.bf16.msra.mxu0 0
        %3767 = vmatpush.bf16.msra.mxu0 0
        %3768 = vmatpush.bf16.msra.mxu0 %v3708
        %3769 = vmatpush.bf16.msra.mxu0 %v3707
        %3770 = vmatmul.bf16.gmra.mxu0 %v3757
        %v3771 = vpop.f32.mrf.mxu0
        %v3772 = vadd.f32 0.0, %v3771
        %v3773 = vpop.f32.mrf.mxu0
        %v3774 = vadd.f32 0.0, %v3773
        %3775 = vmatmul.bf16.gmra.mxu0 %v3760
        %v3776 = vpop.f32.mrf.mxu0
        %v3777 = vadd.f32 0.0, %v3776
        %v3778 = vpop.f32.mrf.mxu0
        %v3779 = vadd.f32 0.0, %v3778
        %3780 = vdwg.mxu0
        %v3785 = vunpack.c.l.b16 %v3737
        %v3786 = vunpack.c.l.b16 %v3738
        %v3787 = vunpack.c.l.b16 %v3739
        %v3788 = vunpack.c.l.b16 %v3740
        %v3789 = vpack.c.b16 %v3786, %v3785
        %v3790 = vpack.c.b16 %v3788, %v3787
        %v3792 = vsel %vm1076, %v3789, 0
        %v3795 = vsel %vm1076, %v3790, 0
        %3797 = vmatpush.bf16.msra.mxu0 0
        %3798 = vmatpush.bf16.msra.mxu0 0
        %3799 = vmatpush.bf16.msra.mxu0 0
        %3800 = vmatpush.bf16.msra.mxu0 0
        %3801 = vmatpush.bf16.msra.mxu0 0
        %3802 = vmatpush.bf16.msra.mxu0 0
        %3803 = vmatpush.bf16.msra.mxu0 %v3735
        %3804 = vmatpush.bf16.msra.mxu0 %v3734
        %3805 = vmatmul.bf16.gmra.mxu0 %v3792
        %v3806 = vpop.f32.mrf.mxu0
        %v3807 = vadd.f32 %v3772, %v3806
        %v3808 = vpop.f32.mrf.mxu0
        %v3809 = vadd.f32 %v3774, %v3808
        %3810 = vmatmul.bf16.gmra.mxu0 %v3795
        %v3811 = vpop.f32.mrf.mxu0
        %v3812 = vadd.f32 %v3777, %v3811
        %v3813 = vpop.f32.mrf.mxu0
        %v3814 = vadd.f32 %v3779, %v3813
        %3815 = vdwg.mxu0
        %3816 = vmatpush.bf16.msra.mxu0 0
        %3817 = vmatpush.bf16.msra.mxu0 0
        %3818 = vmatpush.bf16.msra.mxu0 0
        %3819 = vmatpush.bf16.msra.mxu0 0
        %3820 = vmatpush.bf16.msra.mxu0 0
        %3821 = vmatpush.bf16.msra.mxu0 0
        %3822 = vmatpush.bf16.msra.mxu0 0
        %3823 = vmatpush.bf16.msra.mxu0 %v3607
        %3824 = vmatmul.bf16.gmra.mxu0 %v3710
        %v3825 = vpop.f32.mrf.mxu0
        %v3826 = vadd.f32 0.0, %v3825
        %v3827 = vpop.f32.mrf.mxu0
        %v3828 = vadd.f32 0.0, %v3827
        %3829 = vmatmul.bf16.gmra.mxu0 %v3713
        %v3830 = vpop.f32.mrf.mxu0
        %v3831 = vadd.f32 0.0, %v3830
        %v3832 = vpop.f32.mrf.mxu0
        %v3833 = vadd.f32 0.0, %v3832
        %3834 = vdwg.mxu0
        %v3835 = vpack.c.bf16 %v3828, %v3826
        %v3836 = vpack.c.bf16 %v3833, %v3831
        %s3837 = scalar_lea.vmem [#allocation2], 896
        %v3838 = vld [vmem:[%s3837] sm:$0xf]
        %v3839 = vld [vmem:[%s3837 + $0x4] sm:$0xf]
        %v3840 = vld [vmem:[%s3837 + $0x8] sm:$0xf]
        %v3841 = vld [vmem:[%s3837 + $0xc] sm:$0xf]
        %v3846 = vunpack.c.l.b16 %v3838
        %v3847 = vunpack.c.l.b16 %v3839
        %v3848 = vunpack.c.l.b16 %v3840
        %v3849 = vunpack.c.l.b16 %v3841
        %v3850 = vpack.c.b16 %v3847, %v3846
        %v3851 = vpack.c.b16 %v3849, %v3848
        %v3853 = vsel %vm1076, %v3850, 0
        %v3856 = vsel %vm1076, %v3851, 0
        %3858 = vmatpush.bf16.msra.mxu0 0
        %3859 = vmatpush.bf16.msra.mxu0 0
        %3860 = vmatpush.bf16.msra.mxu0 0
        %3861 = vmatpush.bf16.msra.mxu0 0
        %3862 = vmatpush.bf16.msra.mxu0 0
        %3863 = vmatpush.bf16.msra.mxu0 0
        %3864 = vmatpush.bf16.msra.mxu0 %v3836
        %3865 = vmatpush.bf16.msra.mxu0 %v3835
        %3866 = vmatmul.bf16.gmra.mxu0 %v3853
        %v3867 = vpop.f32.mrf.mxu0
        %v3868 = vadd.f32 0.0, %v3867
        %v3869 = vpop.f32.mrf.mxu0
        %v3870 = vadd.f32 0.0, %v3869
        %3871 = vmatmul.bf16.gmra.mxu0 %v3856
        %v3872 = vpop.f32.mrf.mxu0
        %v3873 = vadd.f32 0.0, %v3872
        %v3874 = vpop.f32.mrf.mxu0
        %v3875 = vadd.f32 0.0, %v3874
        %3876 = vdwg.mxu0
        %v3877 = vadd.f32 %v3807, %v3868
        %v3878 = vadd.f32 %v3809, %v3870
        %v3879 = vadd.f32 %v3812, %v3873
        %v3880 = vadd.f32 %v3814, %v3875
        %s3881 = scalar_lea.vmem %s2, 576
        %v3882 = vld [vmem:[%s3881] sm:$0xff]
        %v3883 = vld [vmem:[%s3881 + $0x8] sm:$0xff]
        %v3884 = vld [vmem:[%s3881 + $0x10] sm:$0xff]
        %v3885 = vld [vmem:[%s3881 + $0x18] sm:$0xff]
        %3887 = vset.pattern.permute.xlu0 0
        %3888 = vperm.xlu0 %3887, %v3882
        %v3889 = vpop.permute.xlu0 %3888
        %3892 = vset.pattern.permute.xlu0 0
        %3893 = vperm.xlu0 %3892, %v3883
        %v3894 = vpop.permute.xlu0 %3893
        %3897 = vset.pattern.permute.xlu0 0
        %3898 = vperm.xlu0 %3897, %v3884
        %v3899 = vpop.permute.xlu0 %3898
        %3902 = vset.pattern.permute.xlu0 0
        %3903 = vperm.xlu0 %3902, %v3885
        %v3904 = vpop.permute.xlu0 %3903
        %v3906 = vadd.f32 %v3877, %v3889
        %v3907 = vadd.f32 %v3878, %v3894
        %v3908 = vadd.f32 %v3879, %v3899
        %v3909 = vadd.f32 %v3880, %v3904
        %v3910 = vmax.f32 %v3906, 0.0
        %v3911 = vmax.f32 %v3907, 0.0
        %v3912 = vmax.f32 %v3908, 0.0
        %v3913 = vmax.f32 %v3909, 0.0
        %s3914 = scalar_lea.vmem [#allocation2], 912
        %v3915 = vld [vmem:[%s3914] sm:$0xf]
        %v3916 = vld [vmem:[%s3914 + $0x4] sm:$0xf]
        %v3917 = vld [vmem:[%s3914 + $0x8] sm:$0xf]
        %v3918 = vld [vmem:[%s3914 + $0xc] sm:$0xf]
        %s3919 = scalar_lea.vmem [#allocation2], 928
        %v3920 = vld [vmem:[%s3919] sm:$0xf]
        %v3921 = vld [vmem:[%s3919 + $0x4] sm:$0xf]
        %v3922 = vld [vmem:[%s3919 + $0x8] sm:$0xf]
        %v3923 = vld [vmem:[%s3919 + $0xc] sm:$0xf]
        %v3928 = vunpack.c.l.b16 %v3920
        %v3929 = vunpack.c.l.b16 %v3921
        %v3930 = vunpack.c.l.b16 %v3922
        %v3931 = vunpack.c.l.b16 %v3923
        %v3932 = vpack.c.b16 %v3929, %v3928
        %v3933 = vpack.c.b16 %v3931, %v3930
        %v3935 = vsel %vm1076, %v3932, 0
        %v3938 = vsel %vm1076, %v3933, 0
        %3940 = vmatpush.bf16.msra.mxu0 0
        %3941 = vmatpush.bf16.msra.mxu0 0
        %3942 = vmatpush.bf16.msra.mxu0 0
        %3943 = vmatpush.bf16.msra.mxu0 0
        %3944 = vmatpush.bf16.msra.mxu0 0
        %3945 = vmatpush.bf16.msra.mxu0 0
        %3946 = vmatpush.bf16.msra.mxu0 %v3316
        %3947 = vmatpush.bf16.msra.mxu0 %v3315
        %3948 = vmatmul.bf16.gmra.mxu0 %v3935
        %v3949 = vpop.f32.mrf.mxu0
        %v3950 = vadd.f32 0.0, %v3949
        %v3951 = vpop.f32.mrf.mxu0
        %v3952 = vadd.f32 0.0, %v3951
        %3953 = vmatmul.bf16.gmra.mxu0 %v3938
        %v3954 = vpop.f32.mrf.mxu0
        %v3955 = vadd.f32 0.0, %v3954
        %v3956 = vpop.f32.mrf.mxu0
        %v3957 = vadd.f32 0.0, %v3956
        %3958 = vdwg.mxu0
        %v3963 = vunpack.c.l.b16 %v3915
        %v3964 = vunpack.c.l.b16 %v3916
        %v3965 = vunpack.c.l.b16 %v3917
        %v3966 = vunpack.c.l.b16 %v3918
        %v3967 = vpack.c.b16 %v3964, %v3963
        %v3968 = vpack.c.b16 %v3966, %v3965
        %v3970 = vsel %vm1076, %v3967, 0
        %v3973 = vsel %vm1076, %v3968, 0
        %3975 = vmatpush.bf16.msra.mxu0 0
        %3976 = vmatpush.bf16.msra.mxu0 0
        %3977 = vmatpush.bf16.msra.mxu0 0
        %3978 = vmatpush.bf16.msra.mxu0 0
        %3979 = vmatpush.bf16.msra.mxu0 0
        %3980 = vmatpush.bf16.msra.mxu0 0
        %3981 = vmatpush.bf16.msra.mxu0 %v3286
        %3982 = vmatpush.bf16.msra.mxu0 %v3285
        %3983 = vmatmul.bf16.gmra.mxu0 %v3970
        %v3984 = vpop.f32.mrf.mxu0
        %v3985 = vadd.f32 %v3950, %v3984
        %v3986 = vpop.f32.mrf.mxu0
        %v3987 = vadd.f32 %v3952, %v3986
        %3988 = vmatmul.bf16.gmra.mxu0 %v3973
        %v3989 = vpop.f32.mrf.mxu0
        %v3990 = vadd.f32 %v3955, %v3989
        %v3991 = vpop.f32.mrf.mxu0
        %v3992 = vadd.f32 %v3957, %v3991
        %3993 = vdwg.mxu0
        %s3994 = scalar_lea.vmem [#allocation2], 944
        %v3995 = vld [vmem:[%s3994] sm:$0xf]
        %v3996 = vld [vmem:[%s3994 + $0x4] sm:$0xf]
        %v3997 = vld [vmem:[%s3994 + $0x8] sm:$0xf]
        %v3998 = vld [vmem:[%s3994 + $0xc] sm:$0xf]
        %v4003 = vunpack.c.l.b16 %v3995
        %v4004 = vunpack.c.l.b16 %v3996
        %v4005 = vunpack.c.l.b16 %v3997
        %v4006 = vunpack.c.l.b16 %v3998
        %v4007 = vpack.c.b16 %v4004, %v4003
        %v4008 = vpack.c.b16 %v4006, %v4005
        %v4010 = vsel %vm1076, %v4007, 0
        %v4013 = vsel %vm1076, %v4008, 0
        %4015 = vmatpush.bf16.msra.mxu0 0
        %4016 = vmatpush.bf16.msra.mxu0 0
        %4017 = vmatpush.bf16.msra.mxu0 0
        %4018 = vmatpush.bf16.msra.mxu0 0
        %4019 = vmatpush.bf16.msra.mxu0 0
        %4020 = vmatpush.bf16.msra.mxu0 0
        %4021 = vmatpush.bf16.msra.mxu0 %v3416
        %4022 = vmatpush.bf16.msra.mxu0 %v3415
        %4023 = vmatmul.bf16.gmra.mxu0 %v4010
        %v4024 = vpop.f32.mrf.mxu0
        %v4025 = vadd.f32 0.0, %v4024
        %v4026 = vpop.f32.mrf.mxu0
        %v4027 = vadd.f32 0.0, %v4026
        %4028 = vmatmul.bf16.gmra.mxu0 %v4013
        %v4029 = vpop.f32.mrf.mxu0
        %v4030 = vadd.f32 0.0, %v4029
        %v4031 = vpop.f32.mrf.mxu0
        %v4032 = vadd.f32 0.0, %v4031
        %4033 = vdwg.mxu0
        %v4034 = vadd.f32 %v3985, %v4025
        %v4035 = vadd.f32 %v3987, %v4027
        %v4036 = vadd.f32 %v3990, %v4030
        %v4037 = vadd.f32 %v3992, %v4032
        %s4038 = scalar_lea.vmem %s2, 608
        %v4039 = vld [vmem:[%s4038] sm:$0xff]
        %v4040 = vld [vmem:[%s4038 + $0x8] sm:$0xff]
        %v4041 = vld [vmem:[%s4038 + $0x10] sm:$0xff]
        %v4042 = vld [vmem:[%s4038 + $0x18] sm:$0xff]
        %4044 = vset.pattern.permute.xlu0 0
        %4045 = vperm.xlu0 %4044, %v4039
        %v4046 = vpop.permute.xlu0 %4045
        %4049 = vset.pattern.permute.xlu0 0
        %4050 = vperm.xlu0 %4049, %v4040
        %v4051 = vpop.permute.xlu0 %4050
        %4054 = vset.pattern.permute.xlu0 0
        %4055 = vperm.xlu0 %4054, %v4041
        %v4056 = vpop.permute.xlu0 %4055
        %4059 = vset.pattern.permute.xlu0 0
        %4060 = vperm.xlu0 %4059, %v4042
        %v4061 = vpop.permute.xlu0 %4060
        %v4063 = vadd.f32 %v4034, %v4046
        %v4064 = vadd.f32 %v4035, %v4051
        %v4065 = vadd.f32 %v4036, %v4056
        %v4066 = vadd.f32 %v4037, %v4061
        %v4067 = vadd.f32 %v3910, %v4063
        %v4068 = vadd.f32 %v3911, %v4064
        %v4069 = vadd.f32 %v3912, %v4065
        %v4070 = vadd.f32 %v3913, %v4066
        %v4071 = vpack.c.bf16 %v4068, %v4067
        %v4072 = vpack.c.bf16 %v4070, %v4069
        %v4074 = vsel %vm3496, %v4071, 0
        %v4077 = vsel %vm3496, %v4072, 0
        %4079 = vmatpush.bf16.msra.mxu0 0
        %4080 = vmatpush.bf16.msra.mxu0 0
        %4081 = vmatpush.bf16.msra.mxu0 0
        %4082 = vmatpush.bf16.msra.mxu0 0
        %4083 = vmatpush.bf16.msra.mxu0 0
        %4084 = vmatpush.bf16.msra.mxu0 0
        %4085 = vmatpush.bf16.msra.mxu0 0
        %4086 = vmatpush.bf16.msra.mxu0 %v3504
        %4087 = vmatmul.bf16.gmra.mxu0 %v4074
        %v4088 = vpop.f32.mrf.mxu0
        %v4089 = vadd.f32 0.0, %v4088
        %v4090 = vpop.f32.mrf.mxu0
        %v4091 = vadd.f32 0.0, %v4090
        %4092 = vmatmul.bf16.gmra.mxu0 %v4077
        %v4093 = vpop.f32.mrf.mxu0
        %v4094 = vadd.f32 0.0, %v4093
        %v4095 = vpop.f32.mrf.mxu0
        %v4096 = vadd.f32 0.0, %v4095
        %4097 = vdwg.mxu0
        %v4098 = vpack.c.bf16 %v4091, %v4089
        %v4099 = vpack.c.bf16 %v4096, %v4094
        %s4100 = scalar_lea.vmem [#allocation2], 960
        %v4101 = vld [vmem:[%s4100] sm:$0xf]
        %v4102 = vld [vmem:[%s4100 + $0x4] sm:$0xf]
        %v4103 = vld [vmem:[%s4100 + $0x8] sm:$0xf]
        %v4104 = vld [vmem:[%s4100 + $0xc] sm:$0xf]
        %s4105 = scalar_lea.vmem [#allocation2], 976
        %v4106 = vld [vmem:[%s4105] sm:$0xf]
        %v4107 = vld [vmem:[%s4105 + $0x4] sm:$0xf]
        %v4108 = vld [vmem:[%s4105 + $0x8] sm:$0xf]
        %v4109 = vld [vmem:[%s4105 + $0xc] sm:$0xf]
        %v4114 = vunpack.c.l.b16 %v4106
        %v4115 = vunpack.c.l.b16 %v4107
        %v4116 = vunpack.c.l.b16 %v4108
        %v4117 = vunpack.c.l.b16 %v4109
        %v4118 = vpack.c.b16 %v4115, %v4114
        %v4119 = vpack.c.b16 %v4117, %v4116
        %v4121 = vsel %vm1076, %v4118, 0
        %v4124 = vsel %vm1076, %v4119, 0
        %4126 = vmatpush.bf16.msra.mxu0 0
        %4127 = vmatpush.bf16.msra.mxu0 0
        %4128 = vmatpush.bf16.msra.mxu0 0
        %4129 = vmatpush.bf16.msra.mxu0 0
        %4130 = vmatpush.bf16.msra.mxu0 0
        %4131 = vmatpush.bf16.msra.mxu0 0
        %4132 = vmatpush.bf16.msra.mxu0 %v4072
        %4133 = vmatpush.bf16.msra.mxu0 %v4071
        %4134 = vmatmul.bf16.gmra.mxu0 %v4121
        %v4135 = vpop.f32.mrf.mxu0
        %v4136 = vadd.f32 0.0, %v4135
        %v4137 = vpop.f32.mrf.mxu0
        %v4138 = vadd.f32 0.0, %v4137
        %4139 = vmatmul.bf16.gmra.mxu0 %v4124
        %v4140 = vpop.f32.mrf.mxu0
        %v4141 = vadd.f32 0.0, %v4140
        %v4142 = vpop.f32.mrf.mxu0
        %v4143 = vadd.f32 0.0, %v4142
        %4144 = vdwg.mxu0
        %v4149 = vunpack.c.l.b16 %v4101
        %v4150 = vunpack.c.l.b16 %v4102
        %v4151 = vunpack.c.l.b16 %v4103
        %v4152 = vunpack.c.l.b16 %v4104
        %v4153 = vpack.c.b16 %v4150, %v4149
        %v4154 = vpack.c.b16 %v4152, %v4151
        %v4156 = vsel %vm1076, %v4153, 0
        %v4159 = vsel %vm1076, %v4154, 0
        %4161 = vmatpush.bf16.msra.mxu0 0
        %4162 = vmatpush.bf16.msra.mxu0 0
        %4163 = vmatpush.bf16.msra.mxu0 0
        %4164 = vmatpush.bf16.msra.mxu0 0
        %4165 = vmatpush.bf16.msra.mxu0 0
        %4166 = vmatpush.bf16.msra.mxu0 0
        %4167 = vmatpush.bf16.msra.mxu0 %v4099
        %4168 = vmatpush.bf16.msra.mxu0 %v4098
        %4169 = vmatmul.bf16.gmra.mxu0 %v4156
        %v4170 = vpop.f32.mrf.mxu0
        %v4171 = vadd.f32 %v4136, %v4170
        %v4172 = vpop.f32.mrf.mxu0
        %v4173 = vadd.f32 %v4138, %v4172
        %4174 = vmatmul.bf16.gmra.mxu0 %v4159
        %v4175 = vpop.f32.mrf.mxu0
        %v4176 = vadd.f32 %v4141, %v4175
        %v4177 = vpop.f32.mrf.mxu0
        %v4178 = vadd.f32 %v4143, %v4177
        %4179 = vdwg.mxu0
        %4180 = vmatpush.bf16.msra.mxu0 0
        %4181 = vmatpush.bf16.msra.mxu0 0
        %4182 = vmatpush.bf16.msra.mxu0 0
        %4183 = vmatpush.bf16.msra.mxu0 0
        %4184 = vmatpush.bf16.msra.mxu0 0
        %4185 = vmatpush.bf16.msra.mxu0 0
        %4186 = vmatpush.bf16.msra.mxu0 0
        %4187 = vmatpush.bf16.msra.mxu0 %v3607
        %4188 = vmatmul.bf16.gmra.mxu0 %v4074
        %v4189 = vpop.f32.mrf.mxu0
        %v4190 = vadd.f32 0.0, %v4189
        %v4191 = vpop.f32.mrf.mxu0
        %v4192 = vadd.f32 0.0, %v4191
        %4193 = vmatmul.bf16.gmra.mxu0 %v4077
        %v4194 = vpop.f32.mrf.mxu0
        %v4195 = vadd.f32 0.0, %v4194
        %v4196 = vpop.f32.mrf.mxu0
        %v4197 = vadd.f32 0.0, %v4196
        %4198 = vdwg.mxu0
        %v4199 = vpack.c.bf16 %v4192, %v4190
        %v4200 = vpack.c.bf16 %v4197, %v4195
        %s4201 = scalar_lea.vmem [#allocation2], 992
        %v4202 = vld [vmem:[%s4201] sm:$0xf]
        %v4203 = vld [vmem:[%s4201 + $0x4] sm:$0xf]
        %v4204 = vld [vmem:[%s4201 + $0x8] sm:$0xf]
        %v4205 = vld [vmem:[%s4201 + $0xc] sm:$0xf]
        %v4210 = vunpack.c.l.b16 %v4202
        %v4211 = vunpack.c.l.b16 %v4203
        %v4212 = vunpack.c.l.b16 %v4204
        %v4213 = vunpack.c.l.b16 %v4205
        %v4214 = vpack.c.b16 %v4211, %v4210
        %v4215 = vpack.c.b16 %v4213, %v4212
        %v4217 = vsel %vm1076, %v4214, 0
        %v4220 = vsel %vm1076, %v4215, 0
        %4222 = vmatpush.bf16.msra.mxu0 0
        %4223 = vmatpush.bf16.msra.mxu0 0
        %4224 = vmatpush.bf16.msra.mxu0 0
        %4225 = vmatpush.bf16.msra.mxu0 0
        %4226 = vmatpush.bf16.msra.mxu0 0
        %4227 = vmatpush.bf16.msra.mxu0 0
        %4228 = vmatpush.bf16.msra.mxu0 %v4200
        %4229 = vmatpush.bf16.msra.mxu0 %v4199
        %4230 = vmatmul.bf16.gmra.mxu0 %v4217
        %v4231 = vpop.f32.mrf.mxu0
        %v4232 = vadd.f32 0.0, %v4231
        %v4233 = vpop.f32.mrf.mxu0
        %v4234 = vadd.f32 0.0, %v4233
        %4235 = vmatmul.bf16.gmra.mxu0 %v4220
        %v4236 = vpop.f32.mrf.mxu0
        %v4237 = vadd.f32 0.0, %v4236
        %v4238 = vpop.f32.mrf.mxu0
        %v4239 = vadd.f32 0.0, %v4238
        %4240 = vdwg.mxu0
        %v4241 = vadd.f32 %v4171, %v4232
        %v4242 = vadd.f32 %v4173, %v4234
        %v4243 = vadd.f32 %v4176, %v4237
        %v4244 = vadd.f32 %v4178, %v4239
        %s4245 = scalar_lea.vmem %s2, 640
        %v4246 = vld [vmem:[%s4245] sm:$0xff]
        %v4247 = vld [vmem:[%s4245 + $0x8] sm:$0xff]
        %v4248 = vld [vmem:[%s4245 + $0x10] sm:$0xff]
        %v4249 = vld [vmem:[%s4245 + $0x18] sm:$0xff]
        %4251 = vset.pattern.permute.xlu0 0
        %4252 = vperm.xlu0 %4251, %v4246
        %v4253 = vpop.permute.xlu0 %4252
        %4256 = vset.pattern.permute.xlu0 0
        %4257 = vperm.xlu0 %4256, %v4247
        %v4258 = vpop.permute.xlu0 %4257
        %4261 = vset.pattern.permute.xlu0 0
        %4262 = vperm.xlu0 %4261, %v4248
        %v4263 = vpop.permute.xlu0 %4262
        %4266 = vset.pattern.permute.xlu0 0
        %4267 = vperm.xlu0 %4266, %v4249
        %v4268 = vpop.permute.xlu0 %4267
        %v4270 = vadd.f32 %v4241, %v4253
        %v4271 = vadd.f32 %v4242, %v4258
        %v4272 = vadd.f32 %v4243, %v4263
        %v4273 = vadd.f32 %v4244, %v4268
        %v4274 = vmax.f32 %v4270, 0.0
        %v4275 = vmax.f32 %v4271, 0.0
        %v4276 = vmax.f32 %v4272, 0.0
        %v4277 = vmax.f32 %v4273, 0.0
        %v4278 = vpack.c.bf16 %v4275, %v4274
        %v4279 = vpack.c.bf16 %v4277, %v4276
        %v4281 = vsel %vm3496, %v4278, 0
        %v4284 = vsel %vm3496, %v4279, 0
        %4286 = vmatpush.bf16.msra.mxu0 0
        %4287 = vmatpush.bf16.msra.mxu0 0
        %4288 = vmatpush.bf16.msra.mxu0 0
        %4289 = vmatpush.bf16.msra.mxu0 0
        %4290 = vmatpush.bf16.msra.mxu0 0
        %4291 = vmatpush.bf16.msra.mxu0 0
        %4292 = vmatpush.bf16.msra.mxu0 0
        %4293 = vmatpush.bf16.msra.mxu0 %v3504
        %4294 = vmatmul.bf16.gmra.mxu0 %v4281
        %v4295 = vpop.f32.mrf.mxu0
        %v4296 = vadd.f32 0.0, %v4295
        %v4297 = vpop.f32.mrf.mxu0
        %v4298 = vadd.f32 0.0, %v4297
        %4299 = vmatmul.bf16.gmra.mxu0 %v4284
        %v4300 = vpop.f32.mrf.mxu0
        %v4301 = vadd.f32 0.0, %v4300
        %v4302 = vpop.f32.mrf.mxu0
        %v4303 = vadd.f32 0.0, %v4302
        %4304 = vdwg.mxu0
        %v4305 = vpack.c.bf16 %v4298, %v4296
        %v4306 = vpack.c.bf16 %v4303, %v4301
        %s4307 = scalar_lea.vmem [#allocation2], 1008
        %v4308 = vld [vmem:[%s4307] sm:$0xf]
        %v4309 = vld [vmem:[%s4307 + $0x4] sm:$0xf]
        %v4310 = vld [vmem:[%s4307 + $0x8] sm:$0xf]
        %v4311 = vld [vmem:[%s4307 + $0xc] sm:$0xf]
        %s4312 = scalar_lea.vmem [#allocation2], 1024
        %v4313 = vld [vmem:[%s4312] sm:$0xf]
        %v4314 = vld [vmem:[%s4312 + $0x4] sm:$0xf]
        %v4315 = vld [vmem:[%s4312 + $0x8] sm:$0xf]
        %v4316 = vld [vmem:[%s4312 + $0xc] sm:$0xf]
        %v4321 = vunpack.c.l.b16 %v4313
        %v4322 = vunpack.c.l.b16 %v4314
        %v4323 = vunpack.c.l.b16 %v4315
        %v4324 = vunpack.c.l.b16 %v4316
        %v4325 = vpack.c.b16 %v4322, %v4321
        %v4326 = vpack.c.b16 %v4324, %v4323
        %v4328 = vsel %vm1076, %v4325, 0
        %v4331 = vsel %vm1076, %v4326, 0
        %4333 = vmatpush.bf16.msra.mxu0 0
        %4334 = vmatpush.bf16.msra.mxu0 0
        %4335 = vmatpush.bf16.msra.mxu0 0
        %4336 = vmatpush.bf16.msra.mxu0 0
        %4337 = vmatpush.bf16.msra.mxu0 0
        %4338 = vmatpush.bf16.msra.mxu0 0
        %4339 = vmatpush.bf16.msra.mxu0 %v4279
        %4340 = vmatpush.bf16.msra.mxu0 %v4278
        %4341 = vmatmul.bf16.gmra.mxu0 %v4328
        %v4342 = vpop.f32.mrf.mxu0
        %v4343 = vadd.f32 0.0, %v4342
        %v4344 = vpop.f32.mrf.mxu0
        %v4345 = vadd.f32 0.0, %v4344
        %4346 = vmatmul.bf16.gmra.mxu0 %v4331
        %v4347 = vpop.f32.mrf.mxu0
        %v4348 = vadd.f32 0.0, %v4347
        %v4349 = vpop.f32.mrf.mxu0
        %v4350 = vadd.f32 0.0, %v4349
        %4351 = vdwg.mxu0
        %v4356 = vunpack.c.l.b16 %v4308
        %v4357 = vunpack.c.l.b16 %v4309
        %v4358 = vunpack.c.l.b16 %v4310
        %v4359 = vunpack.c.l.b16 %v4311
        %v4360 = vpack.c.b16 %v4357, %v4356
        %v4361 = vpack.c.b16 %v4359, %v4358
        %v4363 = vsel %vm1076, %v4360, 0
        %v4366 = vsel %vm1076, %v4361, 0
        %4368 = vmatpush.bf16.msra.mxu0 0
        %4369 = vmatpush.bf16.msra.mxu0 0
        %4370 = vmatpush.bf16.msra.mxu0 0
        %4371 = vmatpush.bf16.msra.mxu0 0
        %4372 = vmatpush.bf16.msra.mxu0 0
        %4373 = vmatpush.bf16.msra.mxu0 0
        %4374 = vmatpush.bf16.msra.mxu0 %v4306
        %4375 = vmatpush.bf16.msra.mxu0 %v4305
        %4376 = vmatmul.bf16.gmra.mxu0 %v4363
        %v4377 = vpop.f32.mrf.mxu0
        %v4378 = vadd.f32 %v4343, %v4377
        %v4379 = vpop.f32.mrf.mxu0
        %v4380 = vadd.f32 %v4345, %v4379
        %4381 = vmatmul.bf16.gmra.mxu0 %v4366
        %v4382 = vpop.f32.mrf.mxu0
        %v4383 = vadd.f32 %v4348, %v4382
        %v4384 = vpop.f32.mrf.mxu0
        %v4385 = vadd.f32 %v4350, %v4384
        %4386 = vdwg.mxu0
        %4387 = vmatpush.bf16.msra.mxu0 0
        %4388 = vmatpush.bf16.msra.mxu0 0
        %4389 = vmatpush.bf16.msra.mxu0 0
        %4390 = vmatpush.bf16.msra.mxu0 0
        %4391 = vmatpush.bf16.msra.mxu0 0
        %4392 = vmatpush.bf16.msra.mxu0 0
        %4393 = vmatpush.bf16.msra.mxu0 0
        %4394 = vmatpush.bf16.msra.mxu0 %v3607
        %4395 = vmatmul.bf16.gmra.mxu0 %v4281
        %v4396 = vpop.f32.mrf.mxu0
        %v4397 = vadd.f32 0.0, %v4396
        %v4398 = vpop.f32.mrf.mxu0
        %v4399 = vadd.f32 0.0, %v4398
        %4400 = vmatmul.bf16.gmra.mxu0 %v4284
        %v4401 = vpop.f32.mrf.mxu0
        %v4402 = vadd.f32 0.0, %v4401
        %v4403 = vpop.f32.mrf.mxu0
        %v4404 = vadd.f32 0.0, %v4403
        %4405 = vdwg.mxu0
        %v4406 = vpack.c.bf16 %v4399, %v4397
        %v4407 = vpack.c.bf16 %v4404, %v4402
        %s4408 = scalar_lea.vmem [#allocation2], 1040
        %v4409 = vld [vmem:[%s4408] sm:$0xf]
        %v4410 = vld [vmem:[%s4408 + $0x4] sm:$0xf]
        %v4411 = vld [vmem:[%s4408 + $0x8] sm:$0xf]
        %v4412 = vld [vmem:[%s4408 + $0xc] sm:$0xf]
        %v4417 = vunpack.c.l.b16 %v4409
        %v4418 = vunpack.c.l.b16 %v4410
        %v4419 = vunpack.c.l.b16 %v4411
        %v4420 = vunpack.c.l.b16 %v4412
        %v4421 = vpack.c.b16 %v4418, %v4417
        %v4422 = vpack.c.b16 %v4420, %v4419
        %v4424 = vsel %vm1076, %v4421, 0
        %v4427 = vsel %vm1076, %v4422, 0
        %4429 = vmatpush.bf16.msra.mxu0 0
        %4430 = vmatpush.bf16.msra.mxu0 0
        %4431 = vmatpush.bf16.msra.mxu0 0
        %4432 = vmatpush.bf16.msra.mxu0 0
        %4433 = vmatpush.bf16.msra.mxu0 0
        %4434 = vmatpush.bf16.msra.mxu0 0
        %4435 = vmatpush.bf16.msra.mxu0 %v4407
        %4436 = vmatpush.bf16.msra.mxu0 %v4406
        %4437 = vmatmul.bf16.gmra.mxu0 %v4424
        %v4438 = vpop.f32.mrf.mxu0
        %v4439 = vadd.f32 0.0, %v4438
        %v4440 = vpop.f32.mrf.mxu0
        %v4441 = vadd.f32 0.0, %v4440
        %4442 = vmatmul.bf16.gmra.mxu0 %v4427
        %v4443 = vpop.f32.mrf.mxu0
        %v4444 = vadd.f32 0.0, %v4443
        %v4445 = vpop.f32.mrf.mxu0
        %v4446 = vadd.f32 0.0, %v4445
        %4447 = vdwg.mxu0
        %v4448 = vadd.f32 %v4378, %v4439
        %v4449 = vadd.f32 %v4380, %v4441
        %v4450 = vadd.f32 %v4383, %v4444
        %v4451 = vadd.f32 %v4385, %v4446
        %s4452 = scalar_lea.vmem %s2, 672
        %v4453 = vld [vmem:[%s4452] sm:$0xff]
        %v4454 = vld [vmem:[%s4452 + $0x8] sm:$0xff]
        %v4455 = vld [vmem:[%s4452 + $0x10] sm:$0xff]
        %v4456 = vld [vmem:[%s4452 + $0x18] sm:$0xff]
        %4458 = vset.pattern.permute.xlu0 0
        %4459 = vperm.xlu0 %4458, %v4453
        %v4460 = vpop.permute.xlu0 %4459
        %4463 = vset.pattern.permute.xlu0 0
        %4464 = vperm.xlu0 %4463, %v4454
        %v4465 = vpop.permute.xlu0 %4464
        %4468 = vset.pattern.permute.xlu0 0
        %4469 = vperm.xlu0 %4468, %v4455
        %v4470 = vpop.permute.xlu0 %4469
        %4473 = vset.pattern.permute.xlu0 0
        %4474 = vperm.xlu0 %4473, %v4456
        %v4475 = vpop.permute.xlu0 %4474
        %v4477 = vadd.f32 %v4448, %v4460
        %v4478 = vadd.f32 %v4449, %v4465
        %v4479 = vadd.f32 %v4450, %v4470
        %v4480 = vadd.f32 %v4451, %v4475
        %v4481 = vmax.f32 %v4477, 0.0
        %v4482 = vmax.f32 %v4478, 0.0
        %v4483 = vmax.f32 %v4479, 0.0
        %v4484 = vmax.f32 %v4480, 0.0
        %v4485 = vpack.c.bf16 %v4482, %v4481
        %v4486 = vpack.c.bf16 %v4484, %v4483
        %v4488 = vsel %vm3496, %v4485, 0
        %v4491 = vsel %vm3496, %v4486, 0
        %4493 = vmatpush.bf16.msra.mxu0 0
        %4494 = vmatpush.bf16.msra.mxu0 0
        %4495 = vmatpush.bf16.msra.mxu0 0
        %4496 = vmatpush.bf16.msra.mxu0 0
        %4497 = vmatpush.bf16.msra.mxu0 0
        %4498 = vmatpush.bf16.msra.mxu0 0
        %4499 = vmatpush.bf16.msra.mxu0 0
        %4500 = vmatpush.bf16.msra.mxu0 %v3504
        %4501 = vmatmul.bf16.gmra.mxu0 %v4488
        %v4502 = vpop.f32.mrf.mxu0
        %v4503 = vadd.f32 0.0, %v4502
        %v4504 = vpop.f32.mrf.mxu0
        %v4505 = vadd.f32 0.0, %v4504
        %4506 = vmatmul.bf16.gmra.mxu0 %v4491
        %v4507 = vpop.f32.mrf.mxu0
        %v4508 = vadd.f32 0.0, %v4507
        %v4509 = vpop.f32.mrf.mxu0
        %v4510 = vadd.f32 0.0, %v4509
        %4511 = vdwg.mxu0
        %v4512 = vpack.c.bf16 %v4505, %v4503
        %v4513 = vpack.c.bf16 %v4510, %v4508
        %s4514 = scalar_lea.vmem [#allocation2], 1056
        %v4515 = vld [vmem:[%s4514] sm:$0xf]
        %v4516 = vld [vmem:[%s4514 + $0x4] sm:$0xf]
        %v4517 = vld [vmem:[%s4514 + $0x8] sm:$0xf]
        %v4518 = vld [vmem:[%s4514 + $0xc] sm:$0xf]
        %s4519 = scalar_lea.vmem [#allocation2], 1072
        %v4520 = vld [vmem:[%s4519] sm:$0xf]
        %v4521 = vld [vmem:[%s4519 + $0x4] sm:$0xf]
        %v4522 = vld [vmem:[%s4519 + $0x8] sm:$0xf]
        %v4523 = vld [vmem:[%s4519 + $0xc] sm:$0xf]
        %v4528 = vunpack.c.l.b16 %v4520
        %v4529 = vunpack.c.l.b16 %v4521
        %v4530 = vunpack.c.l.b16 %v4522
        %v4531 = vunpack.c.l.b16 %v4523
        %v4532 = vpack.c.b16 %v4529, %v4528
        %v4533 = vpack.c.b16 %v4531, %v4530
        %v4535 = vsel %vm1076, %v4532, 0
        %v4538 = vsel %vm1076, %v4533, 0
        %4540 = vmatpush.bf16.msra.mxu0 0
        %4541 = vmatpush.bf16.msra.mxu0 0
        %4542 = vmatpush.bf16.msra.mxu0 0
        %4543 = vmatpush.bf16.msra.mxu0 0
        %4544 = vmatpush.bf16.msra.mxu0 0
        %4545 = vmatpush.bf16.msra.mxu0 0
        %4546 = vmatpush.bf16.msra.mxu0 %v4486
        %4547 = vmatpush.bf16.msra.mxu0 %v4485
        %4548 = vmatmul.bf16.gmra.mxu0 %v4535
        %v4549 = vpop.f32.mrf.mxu0
        %v4550 = vadd.f32 0.0, %v4549
        %v4551 = vpop.f32.mrf.mxu0
        %v4552 = vadd.f32 0.0, %v4551
        %4553 = vmatmul.bf16.gmra.mxu0 %v4538
        %v4554 = vpop.f32.mrf.mxu0
        %v4555 = vadd.f32 0.0, %v4554
        %v4556 = vpop.f32.mrf.mxu0
        %v4557 = vadd.f32 0.0, %v4556
        %4558 = vdwg.mxu0
        %v4563 = vunpack.c.l.b16 %v4515
        %v4564 = vunpack.c.l.b16 %v4516
        %v4565 = vunpack.c.l.b16 %v4517
        %v4566 = vunpack.c.l.b16 %v4518
        %v4567 = vpack.c.b16 %v4564, %v4563
        %v4568 = vpack.c.b16 %v4566, %v4565
        %v4570 = vsel %vm1076, %v4567, 0
        %v4573 = vsel %vm1076, %v4568, 0
        %4575 = vmatpush.bf16.msra.mxu0 0
        %4576 = vmatpush.bf16.msra.mxu0 0
        %4577 = vmatpush.bf16.msra.mxu0 0
        %4578 = vmatpush.bf16.msra.mxu0 0
        %4579 = vmatpush.bf16.msra.mxu0 0
        %4580 = vmatpush.bf16.msra.mxu0 0
        %4581 = vmatpush.bf16.msra.mxu0 %v4513
        %4582 = vmatpush.bf16.msra.mxu0 %v4512
        %4583 = vmatmul.bf16.gmra.mxu0 %v4570
        %v4584 = vpop.f32.mrf.mxu0
        %v4585 = vadd.f32 %v4550, %v4584
        %v4586 = vpop.f32.mrf.mxu0
        %v4587 = vadd.f32 %v4552, %v4586
        %4588 = vmatmul.bf16.gmra.mxu0 %v4573
        %v4589 = vpop.f32.mrf.mxu0
        %v4590 = vadd.f32 %v4555, %v4589
        %v4591 = vpop.f32.mrf.mxu0
        %v4592 = vadd.f32 %v4557, %v4591
        %4593 = vdwg.mxu0
        %4594 = vmatpush.bf16.msra.mxu0 0
        %4595 = vmatpush.bf16.msra.mxu0 0
        %4596 = vmatpush.bf16.msra.mxu0 0
        %4597 = vmatpush.bf16.msra.mxu0 0
        %4598 = vmatpush.bf16.msra.mxu0 0
        %4599 = vmatpush.bf16.msra.mxu0 0
        %4600 = vmatpush.bf16.msra.mxu0 0
        %4601 = vmatpush.bf16.msra.mxu0 %v3607
        %4602 = vmatmul.bf16.gmra.mxu0 %v4488
        %v4603 = vpop.f32.mrf.mxu0
        %v4604 = vadd.f32 0.0, %v4603
        %v4605 = vpop.f32.mrf.mxu0
        %v4606 = vadd.f32 0.0, %v4605
        %4607 = vmatmul.bf16.gmra.mxu0 %v4491
        %v4608 = vpop.f32.mrf.mxu0
        %v4609 = vadd.f32 0.0, %v4608
        %v4610 = vpop.f32.mrf.mxu0
        %v4611 = vadd.f32 0.0, %v4610
        %4612 = vdwg.mxu0
        %v4613 = vpack.c.bf16 %v4606, %v4604
        %v4614 = vpack.c.bf16 %v4611, %v4609
        %s4615 = scalar_lea.vmem [#allocation2], 1088
        %v4616 = vld [vmem:[%s4615] sm:$0xf]
        %v4617 = vld [vmem:[%s4615 + $0x4] sm:$0xf]
        %v4618 = vld [vmem:[%s4615 + $0x8] sm:$0xf]
        %v4619 = vld [vmem:[%s4615 + $0xc] sm:$0xf]
        %v4624 = vunpack.c.l.b16 %v4616
        %v4625 = vunpack.c.l.b16 %v4617
        %v4626 = vunpack.c.l.b16 %v4618
        %v4627 = vunpack.c.l.b16 %v4619
        %v4628 = vpack.c.b16 %v4625, %v4624
        %v4629 = vpack.c.b16 %v4627, %v4626
        %v4631 = vsel %vm1076, %v4628, 0
        %v4634 = vsel %vm1076, %v4629, 0
        %4636 = vmatpush.bf16.msra.mxu0 0
        %4637 = vmatpush.bf16.msra.mxu0 0
        %4638 = vmatpush.bf16.msra.mxu0 0
        %4639 = vmatpush.bf16.msra.mxu0 0
        %4640 = vmatpush.bf16.msra.mxu0 0
        %4641 = vmatpush.bf16.msra.mxu0 0
        %4642 = vmatpush.bf16.msra.mxu0 %v4614
        %4643 = vmatpush.bf16.msra.mxu0 %v4613
        %4644 = vmatmul.bf16.gmra.mxu0 %v4631
        %v4645 = vpop.f32.mrf.mxu0
        %v4646 = vadd.f32 0.0, %v4645
        %v4647 = vpop.f32.mrf.mxu0
        %v4648 = vadd.f32 0.0, %v4647
        %4649 = vmatmul.bf16.gmra.mxu0 %v4634
        %v4650 = vpop.f32.mrf.mxu0
        %v4651 = vadd.f32 0.0, %v4650
        %v4652 = vpop.f32.mrf.mxu0
        %v4653 = vadd.f32 0.0, %v4652
        %4654 = vdwg.mxu0
        %v4655 = vadd.f32 %v4585, %v4646
        %v4656 = vadd.f32 %v4587, %v4648
        %v4657 = vadd.f32 %v4590, %v4651
        %v4658 = vadd.f32 %v4592, %v4653
        %s4659 = scalar_lea.vmem %s2, 704
        %v4660 = vld [vmem:[%s4659] sm:$0xff]
        %v4661 = vld [vmem:[%s4659 + $0x8] sm:$0xff]
        %v4662 = vld [vmem:[%s4659 + $0x10] sm:$0xff]
        %v4663 = vld [vmem:[%s4659 + $0x18] sm:$0xff]
        %4665 = vset.pattern.permute.xlu0 0
        %4666 = vperm.xlu0 %4665, %v4660
        %v4667 = vpop.permute.xlu0 %4666
        %4670 = vset.pattern.permute.xlu0 0
        %4671 = vperm.xlu0 %4670, %v4661
        %v4672 = vpop.permute.xlu0 %4671
        %4675 = vset.pattern.permute.xlu0 0
        %4676 = vperm.xlu0 %4675, %v4662
        %v4677 = vpop.permute.xlu0 %4676
        %4680 = vset.pattern.permute.xlu0 0
        %4681 = vperm.xlu0 %4680, %v4663
        %v4682 = vpop.permute.xlu0 %4681
        %v4684 = vadd.f32 %v4655, %v4667
        %v4685 = vadd.f32 %v4656, %v4672
        %v4686 = vadd.f32 %v4657, %v4677
        %v4687 = vadd.f32 %v4658, %v4682
        %v4688 = vmax.f32 %v4684, 0.0
        %v4689 = vmax.f32 %v4685, 0.0
        %v4690 = vmax.f32 %v4686, 0.0
        %v4691 = vmax.f32 %v4687, 0.0
        %v4692 = vadd.f32 %v4688, %v4067
        %v4693 = vadd.f32 %v4689, %v4068
        %v4694 = vadd.f32 %v4690, %v4069
        %v4695 = vadd.f32 %v4691, %v4070
        %4696 = vst.msk [vmem:[%s181] sm:$0xff] %vm3496, %v4692
        %4697 = vst.msk [vmem:[%s181 + $0x8] sm:$0xff] %vm3496, %v4693
        %4698 = vst.msk [vmem:[%s181 + $0x10] sm:$0xff] %vm3496, %v4694
        %4699 = vst.msk [vmem:[%s181 + $0x18] sm:$0xff] %vm3496, %v4695
        %p4700 = scmp.lt.s32.totalorder %s15, 1
        %s4701 = scalar_select %p4700, %s15, 1
        %s4702 = smul.addr %s4701, 4
        %s4703 = smul.addr %s4702, 8
        %s4704 = scalar_lea.vmem %s3, %s4703
        // Predicated region
        $region37: #{cnn_module_forward.1} parent=31 // pred_check
          %p4705 = pneg %p101
        $region38: #{cnn_module_forward.1} parent=31 // pred_check_branch
          %4707 = sbr.rel (%p4705) target = $region40
        $region39: #{cnn_module_forward.1} parent=31 // pred_region
          _
        $region40: #{cnn_module_forward.1} parent=31 // pred_fallthru
          _
      $region32: #{cnn_module_forward.1} parent=5 // pred_fallthru
        _
      %p4708 = scmp.le.s32.totalorder 2, %s10
      // Predicated region
      $region41: #{cnn_module_forward.1} parent=5 // pred_check
        %p4709 = pneg %p4708
      $region42: #{cnn_module_forward.1} parent=5 // pred_check_branch
        %4711 = sbr.rel (%p4709) target = $region44
      $region43: #{cnn_module_forward.1} parent=5 // pred_region
        %s4712 = ssub.s32 %s10, 2
        // Predicated region
        $region45: #{cnn_module_forward.1} parent=43 // pred_check
          %p4713 = pneg %p107
        $region46: #{cnn_module_forward.1} parent=43 // pred_check_branch
          %4715 = sbr.rel (%p4713) target = $region48
        $region47: #{cnn_module_forward.1} parent=43 // pred_region
          %p4716 = scmp.lt.s32.totalorder %s16, 1
          %s4717 = scalar_select %p4716, %s16, 1
          %s4718 = smul.addr %s4717, 4
          %s4719 = smul.addr %s4718, 8
          %s4720 = scalar_lea.vmem %s3, %s4719
        $region48: #{cnn_module_forward.1} parent=43 // pred_fallthru
          _
      $region44: #{cnn_module_forward.1} parent=5 // pred_fallthru
        _
    $region6: #{cnn_module_forward.1} parent=1 // loop_footer
      %s14 = sadd.s32 1, %s10
    $region7: #{cnn_module_forward.1} parent=1 // loop_footer_branch
      %9 = sbr.rel target = $region3
    $region8: #{cnn_module_forward.1} parent=1 // loop_exit
      _
    %4721 = vsyncpa [#allocation3], 1
    %s4722 = scalar_lea.sflag [#allocation3], 1
    %4723 = vsyncpa %s4722, 1

</llo_original>
